<compile_context>
chip_gen: v7x
topology: tpu7x:2x2x1
jax: 0.10.0
libtpu: 0.0.40
codegen_flags: <defaults>
</compile_context>

<pallas_src>
import math

import jax
import jax.numpy as jnp
from jax.experimental import pallas as pl
from jax.experimental.pallas import tpu as pltpu

# ---- small synthetic BERT config (scaled-down bert-base) ----
VOCAB = 64
TYPE_VOCAB = 2
MAX_POS = 32
HIDDEN = 256                     # stand-in for 768
N_LAYERS = 2
N_HEADS = 2
HEAD_DIM = HIDDEN // N_HEADS     # 128 -> lane-dense, tile-aligned head slices
INTERMEDIATE = 512
SEQ = 8
BATCH = 2
ROWS = BATCH * SEQ
LN_EPS = 1e-12


def _layer_norm(v, g, b):
    mu = jnp.mean(v, axis=-1, keepdims=True)
    var = jnp.mean(jnp.square(v - mu), axis=-1, keepdims=True)
    return (v - mu) * jax.lax.rsqrt(var + LN_EPS) * g + b


# ---------------------------------------------------------------------------
# Pallas kernel: one transformer layer per grid step; x persists in VMEM
# ---------------------------------------------------------------------------
def _bert_layer_kernel(
    x_ref,        # (B*S, H)   f32  embedding sum (word + pos + type)
    mask_ref,     # (B, 1, S)  f32  additive attention mask (0 / -10000)
    eg_ref,       # (1, H)     f32  embedding LayerNorm gamma
    eb_ref,       # (1, H)     f32  embedding LayerNorm beta
    wqkv_ref,     # (H, 3H)    bf16 fused Q|K|V weights   [layer-streamed]
    bqkv_ref,     # (1, 3H)    f32
    wo_ref,       # (H, H)     bf16 attention output projection
    bo_ref,       # (1, H)     f32
    ln1g_ref,     # (1, H)     f32
    ln1b_ref,     # (1, H)     f32
    w1_ref,       # (H, I)     bf16 FFN up
    b1_ref,       # (1, I)     f32
    w2_ref,       # (I, H)     bf16 FFN down
    b2_ref,       # (1, H)     f32
    ln2g_ref,     # (1, H)     f32
    ln2b_ref,     # (1, H)     f32
    linw_ref,     # (1, H)     f32  head Linear(H,1) weight (PyTorch (1,H))
    linb_ref,     # (1, 1)     f32  head Linear bias
    o_ref,        # (B, 1)     f32  output
    x_vmem,       # scratch (B*S, H) f32 -- persists across grid steps
):
    layer = pl.program_id(0)

    @pl.when(layer == 0)
    def _():
        # Embedding LayerNorm (dropout is identity in eval mode).
        x_vmem[...] = _layer_norm(x_ref[...], eg_ref[...], eb_ref[...])

    x = x_vmem[...]                                               # (B*S, H) f32

    # ---- fused Q|K|V projection: bf16 MXU, f32 accumulation ----
    qkv = jnp.dot(x.astype(jnp.bfloat16), wqkv_ref[...],
                  preferred_element_type=jnp.float32) + bqkv_ref[...]  # (B*S, 3H)

    # Hoisted casts + scale folded into q once per layer.
    scale = 1.0 / math.sqrt(HEAD_DIM)
    q = (qkv[:, 0:HIDDEN] * scale).astype(jnp.bfloat16).reshape(BATCH, SEQ, HIDDEN)
    k = qkv[:, HIDDEN:2 * HIDDEN].astype(jnp.bfloat16).reshape(BATCH, SEQ, HIDDEN)
    v = qkv[:, 2 * HIDDEN:3 * HIDDEN].astype(jnp.bfloat16).reshape(BATCH, SEQ, HIDDEN)

    add_mask = mask_ref[...]                                      # (B, 1, S), read once
    wo = wo_ref[...]                                              # (H, H) bf16

    # ---- multi-head self-attention: batched over B, per-head wo accumulation
    attn = None
    for h in range(N_HEADS):                                      # static unroll
        c0 = h * HEAD_DIM                                         # 128-aligned slice
        qh = q[:, :, c0:c0 + HEAD_DIM]                            # (B, S, dh)
        kh = k[:, :, c0:c0 + HEAD_DIM]
        vh = v[:, :, c0:c0 + HEAD_DIM]

        # scores: (B, S, S), batched over B
        s = jax.lax.dot_general(qh, kh, (((2,), (2,)), ((0,), (0,))),
                                preferred_element_type=jnp.float32)
        s = s + add_mask
        s_max = jnp.max(s, axis=-1, keepdims=True)
        p = jnp.exp(s - s_max)
        denom = jnp.sum(p, axis=-1, keepdims=True)
        p = p * pl.reciprocal(denom, approx=True)                 # EUP divide

        # context: (B, S, dh), batched over B
        ctx_h = jax.lax.dot_general(p.astype(jnp.bfloat16), vh,
                                    (((2,), (1,)), ((0,), (0,))),
                                    preferred_element_type=jnp.float32)

        # accumulate output projection per head (no concatenates)
        contrib = jnp.dot(
            ctx_h.reshape(ROWS, HEAD_DIM).astype(jnp.bfloat16),
            wo[c0:c0 + HEAD_DIM, :],
            preferred_element_type=jnp.float32)
        attn = contrib if attn is None else attn + contrib
    attn = attn + bo_ref[...]

    x = _layer_norm(x + attn, ln1g_ref[...], ln1b_ref[...])       # residual fused into LN

    # ---- feed-forward ----
    inter = jnp.dot(x.astype(jnp.bfloat16), w1_ref[...],
                    preferred_element_type=jnp.float32) + b1_ref[...]
    # TODO(synk): HF BERT uses exact erf-GELU; tanh approximation is used here
    # for robust Mosaic lowering.
    inter = jax.nn.gelu(inter, approximate=True)
    ffn = jnp.dot(inter.astype(jnp.bfloat16), w2_ref[...],
                  preferred_element_type=jnp.float32) + b2_ref[...]
    x = _layer_norm(x + ffn, ln2g_ref[...], ln2b_ref[...])

    x_vmem[...] = x                                               # carry to next layer

    # ---- head (last layer only): CLS rows -> Linear(H, 1), single store ----
    @pl.when(layer == pl.num_programs(0) - 1)
    def _():
        cls = x.reshape(BATCH, SEQ, HIDDEN)[:, 0, :]              # (B, H) CLS slab
        y = jnp.sum(cls * linw_ref[...], axis=1, keepdims=True) + linb_ref[...]
        o_ref[...] = y                                            # one (B, 1) store


# ---------------------------------------------------------------------------
# BlockSpec helpers
# ---------------------------------------------------------------------------
def _const_spec(a):
    # Block index constant across grid steps -> block stays VMEM-resident.
    return pl.BlockSpec(a.shape, lambda l, _n=a.ndim: (0,) * _n)


def _layer_spec(*tail):
    # Per-layer stacked param: leading layer dim squeezed, streamed per step.
    return pl.BlockSpec((None,) + tail, lambda l, _n=len(tail): (l,) + (0,) * _n)


# ---------------------------------------------------------------------------
# Parameter init (deterministic, synthetic — no checkpoint loading)
# ---------------------------------------------------------------------------
def init_params(key):
    keys = iter(jax.random.split(key, 32))

    def nrm(shape, dtype=jnp.float32):
        return (0.02 * jax.random.normal(next(keys), shape)).astype(dtype)

    L, H, H3, I = N_LAYERS, HIDDEN, 3 * HIDDEN, INTERMEDIATE
    return dict(
        word_emb=nrm((VOCAB, H)),
        pos_emb=nrm((MAX_POS, H)),
        type_emb=nrm((TYPE_VOCAB, H)),
        emb_ln_g=jnp.ones((1, H), jnp.float32),
        emb_ln_b=jnp.zeros((1, H), jnp.float32),
        # Per-layer weights stacked on a leading layer axis.  Matmul weights
        # are bf16 (MXU-native); biases / LayerNorm params stay f32.
        wqkv=nrm((L, H, H3), jnp.bfloat16),
        bqkv=jnp.zeros((L, 1, H3), jnp.float32),
        wo=nrm((L, H, H), jnp.bfloat16),
        bo=jnp.zeros((L, 1, H), jnp.float32),
        ln1_g=jnp.ones((L, 1, H), jnp.float32),
        ln1_b=jnp.zeros((L, 1, H), jnp.float32),
        w1=nrm((L, H, I), jnp.bfloat16),
        b1=jnp.zeros((L, 1, I), jnp.float32),
        w2=nrm((L, I, H), jnp.bfloat16),
        b2=jnp.zeros((L, 1, H), jnp.float32),
        ln2_g=jnp.ones((L, 1, H), jnp.float32),
        ln2_b=jnp.zeros((L, 1, H), jnp.float32),
        lin_w=nrm((1, H)),           # PyTorch Linear(H, 1) weight, shape (1, H)
        lin_b=nrm((1, 1)),
    )


# ---------------------------------------------------------------------------
# Forward pass: embedding gathers in XLA (glue), everything else in Pallas
# ---------------------------------------------------------------------------
def _forward_impl(params, source, mask):
    B, S = source.shape
    token_type = jnp.zeros_like(source)                           # HF default

    we = jnp.take(params["word_emb"], source, axis=0)             # (B, S, H)
    pe = params["pos_emb"][:S][None, :, :]
    te = jnp.take(params["type_emb"], token_type, axis=0)
    x_emb = (we + pe + te).reshape(B * S, HIDDEN).astype(jnp.float32)

    # additive attention mask, already shaped (B, 1, S) for in-kernel broadcast
    add_mask = ((1.0 - mask.astype(jnp.float32)) * -10000.0)[:, None, :]

    H, H3, I = HIDDEN, 3 * HIDDEN, INTERMEDIATE
    args = (
        x_emb, add_mask,
        params["emb_ln_g"], params["emb_ln_b"],
        params["wqkv"], params["bqkv"],
        params["wo"], params["bo"],
        params["ln1_g"], params["ln1_b"],
        params["w1"], params["b1"],
        params["w2"], params["b2"],
        params["ln2_g"], params["ln2_b"],
        params["lin_w"], params["lin_b"],
    )
    in_specs = [
        _const_spec(x_emb),                 # x_emb
        _const_spec(add_mask),              # mask
        _const_spec(params["emb_ln_g"]),
        _const_spec(params["emb_ln_b"]),
        _layer_spec(H, H3),                 # wqkv
        _layer_spec(1, H3),                 # bqkv
        _layer_spec(H, H),                  # wo
        _layer_spec(1, H),                  # bo
        _layer_spec(1, H),                  # ln1_g
        _layer_spec(1, H),                  # ln1_b
        _layer_spec(H, I),                  # w1
        _layer_spec(1, I),                  # b1
        _layer_spec(I, H),                  # w2
        _layer_spec(1, H),                  # b2
        _layer_spec(1, H),                  # ln2_g
        _layer_spec(1, H),                  # ln2_b
        _const_spec(params["lin_w"]),
        _const_spec(params["lin_b"]),
    ]
    return pl.pallas_call(
        _bert_layer_kernel,
        out_shape=jax.ShapeDtypeStruct((B, 1), jnp.float32),
        grid=(N_LAYERS,),
        in_specs=in_specs,
        out_specs=pl.BlockSpec((B, 1), lambda l: (0, 0)),
        scratch_shapes=[pltpu.VMEM((B * S, HIDDEN), jnp.float32)],
        compiler_params=pltpu.CompilerParams(
            dimension_semantics=("arbitrary",)),
    )(*args)


bert_forward = jax.jit(_forward_impl)


if __name__ == "__main__":
    root = jax.random.PRNGKey(0)
    pkey, dkey = jax.random.split(root)
    params = init_params(pkey)

    source = jax.random.randint(dkey, (BATCH, SEQ), 0, VOCAB, dtype=jnp.int32)
    mask = jnp.ones((BATCH, SEQ), dtype=jnp.int32).at[1, SEQ - 2:].set(0)

    out = bert_forward(params, source, mask)
    out = jax.block_until_ready(out)
    assert out.shape == (BATCH, 1)
    assert bool(jnp.all(jnp.isfinite(out)))
    print("KERNEL_OK")
</pallas_src>

<mosaic_0001>
module attributes {stable_mosaic.version = 11 : i64} {
  func.func @_bert_layer_kernel(%arg0: i32, %arg1: memref<16x256xf32, #tpu.memory_space<vmem>>, %arg2: memref<2x1x8xf32, #tpu.memory_space<vmem>>, %arg3: memref<1x256xf32, #tpu.memory_space<vmem>>, %arg4: memref<1x256xf32, #tpu.memory_space<vmem>>, %arg5: memref<1x256x768xbf16, #tpu.memory_space<vmem>>, %arg6: memref<1x1x768xf32, #tpu.memory_space<vmem>>, %arg7: memref<1x256x256xbf16, #tpu.memory_space<vmem>>, %arg8: memref<1x1x256xf32, #tpu.memory_space<vmem>>, %arg9: memref<1x1x256xf32, #tpu.memory_space<vmem>>, %arg10: memref<1x1x256xf32, #tpu.memory_space<vmem>>, %arg11: memref<1x256x512xbf16, #tpu.memory_space<vmem>>, %arg12: memref<1x1x512xf32, #tpu.memory_space<vmem>>, %arg13: memref<1x512x256xbf16, #tpu.memory_space<vmem>>, %arg14: memref<1x1x256xf32, #tpu.memory_space<vmem>>, %arg15: memref<1x1x256xf32, #tpu.memory_space<vmem>>, %arg16: memref<1x1x256xf32, #tpu.memory_space<vmem>>, %arg17: memref<1x256xf32, #tpu.memory_space<vmem>>, %arg18: memref<1x1xf32, #tpu.memory_space<vmem>>, %arg19: memref<2x1xf32, #tpu.memory_space<vmem>>, %arg20: memref<16x256xf32, #tpu.memory_space<vmem>>) attributes {dimension_semantics = [#tpu.dimension_semantics<arbitrary>], iteration_bounds = array<i64: 2>, scalar_prefetch = 0 : i64, scratch_operands = 1 : i64, tpu.core_type = #tpu.core_type<tc>, window_params = [{pipeline_mode = #tpu.pipeline_mode<synchronous>, transform_indices = @transform_0, window_bounds = array<i64: 16, 256>}, {pipeline_mode = #tpu.pipeline_mode<synchronous>, transform_indices = @transform_1, window_bounds = array<i64: 2, 1, 8>}, {pipeline_mode = #tpu.pipeline_mode<synchronous>, transform_indices = @transform_2, window_bounds = array<i64: 1, 256>}, {pipeline_mode = #tpu.pipeline_mode<synchronous>, transform_indices = @transform_3, window_bounds = array<i64: 1, 256>}, {transform_indices = @transform_4, window_bounds = array<i64: 1, 256, 768>}, {transform_indices = @transform_5, window_bounds = array<i64: 1, 1, 768>}, {transform_indices = @transform_6, window_bounds = array<i64: 1, 256, 256>}, {transform_indices = @transform_7, window_bounds = array<i64: 1, 1, 256>}, {transform_indices = @transform_8, window_bounds = array<i64: 1, 1, 256>}, {transform_indices = @transform_9, window_bounds = array<i64: 1, 1, 256>}, {transform_indices = @transform_10, window_bounds = array<i64: 1, 256, 512>}, {transform_indices = @transform_11, window_bounds = array<i64: 1, 1, 512>}, {transform_indices = @transform_12, window_bounds = array<i64: 1, 512, 256>}, {transform_indices = @transform_13, window_bounds = array<i64: 1, 1, 256>}, {transform_indices = @transform_14, window_bounds = array<i64: 1, 1, 256>}, {transform_indices = @transform_15, window_bounds = array<i64: 1, 1, 256>}, {pipeline_mode = #tpu.pipeline_mode<synchronous>, transform_indices = @transform_16, window_bounds = array<i64: 1, 256>}, {pipeline_mode = #tpu.pipeline_mode<synchronous>, transform_indices = @transform_17, window_bounds = array<i64: 1, 1>}, {pipeline_mode = #tpu.pipeline_mode<synchronous>, transform_indices = @transform_18, window_bounds = array<i64: 2, 1>}]} {
    %c0_i32 = arith.constant 0 : i32
    %0 = arith.cmpi eq, %arg0, %c0_i32 : i32
    %1 = arith.extui %0 : i1 to i32
    %c0_i32_0 = arith.constant 0 : i32
    %2 = arith.cmpi ne, %1, %c0_i32_0 : i32
    scf.if %2 {
      %c0_71 = arith.constant 0 : index
      %c0_72 = arith.constant 0 : index
      %162 = vector.load %arg1[%c0_71, %c0_72] : memref<16x256xf32, #tpu.memory_space<vmem>>, vector<16x256xf32>
      %c0_73 = arith.constant 0 : index
      %c0_74 = arith.constant 0 : index
      %163 = vector.load %arg3[%c0_73, %c0_74] : memref<1x256xf32, #tpu.memory_space<vmem>>, vector<1x256xf32>
      %c0_75 = arith.constant 0 : index
      %c0_76 = arith.constant 0 : index
      %164 = vector.load %arg4[%c0_75, %c0_76] : memref<1x256xf32, #tpu.memory_space<vmem>>, vector<1x256xf32>
      %cst_77 = arith.constant dense<0.000000e+00> : vector<16xf32>
      %165 = vector.multi_reduction <add>, %162, %cst_77 [1] : vector<16x256xf32> to vector<16xf32>
      %166 = vector.shape_cast %165 : vector<16xf32> to vector<16x1xf32>
      %cst_78 = arith.constant 2.560000e+02 : f32
      %167 = vector.broadcast %cst_78 : f32 to vector<16x1xf32>
      %168 = arith.divf %166, %167 : vector<16x1xf32>
      %169 = vector.broadcast %168 : vector<16x1xf32> to vector<16x256xf32>
      %170 = arith.subf %162, %169 : vector<16x256xf32>
      %171 = arith.mulf %170, %170 : vector<16x256xf32>
      %cst_79 = arith.constant dense<0.000000e+00> : vector<16xf32>
      %172 = vector.multi_reduction <add>, %171, %cst_79 [1] : vector<16x256xf32> to vector<16xf32>
      %173 = vector.shape_cast %172 : vector<16xf32> to vector<16x1xf32>
      %cst_80 = arith.constant 2.560000e+02 : f32
      %174 = vector.broadcast %cst_80 : f32 to vector<16x1xf32>
      %175 = arith.divf %173, %174 : vector<16x1xf32>
      %176 = vector.broadcast %168 : vector<16x1xf32> to vector<16x256xf32>
      %177 = arith.subf %162, %176 : vector<16x256xf32>
      %cst_81 = arith.constant 9.99999996E-13 : f32
      %178 = vector.broadcast %cst_81 : f32 to vector<16x1xf32>
      %179 = arith.addf %175, %178 : vector<16x1xf32>
      %180 = math.rsqrt %179 : vector<16x1xf32>
      %181 = vector.broadcast %180 : vector<16x1xf32> to vector<16x256xf32>
      %182 = arith.mulf %177, %181 : vector<16x256xf32>
      %183 = vector.broadcast %163 : vector<1x256xf32> to vector<16x256xf32>
      %184 = arith.mulf %182, %183 : vector<16x256xf32>
      %185 = vector.broadcast %164 : vector<1x256xf32> to vector<16x256xf32>
      %186 = arith.addf %184, %185 : vector<16x256xf32>
      %c0_82 = arith.constant 0 : index
      %c0_83 = arith.constant 0 : index
      %187 = vector.load %arg20[%c0_82, %c0_83] : memref<16x256xf32, #tpu.memory_space<vmem>>, vector<16x256xf32>
      tpu.vector_store %arg20[%c0_82, %c0_83], %186 {strides = array<i32>} : memref<16x256xf32, #tpu.memory_space<vmem>>, vector<16x256xf32>,
    } else {
    }
    %c0 = arith.constant 0 : index
    %c0_1 = arith.constant 0 : index
    %3 = vector.load %arg20[%c0, %c0_1] : memref<16x256xf32, #tpu.memory_space<vmem>>, vector<16x256xf32>
    %4 = arith.truncf %3 : vector<16x256xf32> to vector<16x256xbf16>
    %c0_2 = arith.constant 0 : index
    %c0_3 = arith.constant 0 : index
    %c0_4 = arith.constant 0 : index
    %5 = vector.load %arg5[%c0_2, %c0_3, %c0_4] : memref<1x256x768xbf16, #tpu.memory_space<vmem>>, vector<1x256x768xbf16>
    %6 = vector.shape_cast %5 : vector<1x256x768xbf16> to vector<256x768xbf16>
    %cst = arith.constant dense<0.000000e+00> : vector<16x768xf32>
    %7 = tpu.matmul %4, %6, %cst {dimension_numbers = #tpu.dot_dimension_numbers<[1], [0], [0], [1], [0, 0, 1, 1], [], []>} : vector<16x256xbf16>, vector<256x768xbf16>, vector<16x768xf32> -> vector<16x768xf32>
    %c0_5 = arith.constant 0 : index
    %c0_6 = arith.constant 0 : index
    %c0_7 = arith.constant 0 : index
    %8 = vector.load %arg6[%c0_5, %c0_6, %c0_7] : memref<1x1x768xf32, #tpu.memory_space<vmem>>, vector<1x1x768xf32>
    %9 = vector.shape_cast %8 : vector<1x1x768xf32> to vector<1x768xf32>
    %10 = vector.broadcast %9 : vector<1x768xf32> to vector<16x768xf32>
    %11 = arith.addf %7, %10 : vector<16x768xf32>
    %12 = vector.extract_strided_slice %11 {offsets = [0, 0], sizes = [16, 256], strides = [1, 1]} : vector<16x768xf32> to vector<16x256xf32>
    %cst_8 = arith.constant 0.0883883461 : f32
    %13 = vector.broadcast %cst_8 : f32 to vector<16x256xf32>
    %14 = arith.mulf %12, %13 : vector<16x256xf32>
    %15 = arith.truncf %14 : vector<16x256xf32> to vector<16x256xbf16>
    %16 = vector.shape_cast %15 : vector<16x256xbf16> to vector<2x8x256xbf16>
    %17 = vector.extract_strided_slice %11 {offsets = [0, 256], sizes = [16, 256], strides = [1, 1]} : vector<16x768xf32> to vector<16x256xf32>
    %18 = arith.truncf %17 : vector<16x256xf32> to vector<16x256xbf16>
    %19 = vector.shape_cast %18 : vector<16x256xbf16> to vector<2x8x256xbf16>
    %20 = vector.extract_strided_slice %11 {offsets = [0, 512], sizes = [16, 256], strides = [1, 1]} : vector<16x768xf32> to vector<16x256xf32>
    %21 = arith.truncf %20 : vector<16x256xf32> to vector<16x256xbf16>
    %22 = vector.shape_cast %21 : vector<16x256xbf16> to vector<2x8x256xbf16>
    %c0_9 = arith.constant 0 : index
    %c0_10 = arith.constant 0 : index
    %c0_11 = arith.constant 0 : index
    %23 = vector.load %arg2[%c0_9, %c0_10, %c0_11] : memref<2x1x8xf32, #tpu.memory_space<vmem>>, vector<2x1x8xf32>
    %c0_12 = arith.constant 0 : index
    %c0_13 = arith.constant 0 : index
    %c0_14 = arith.constant 0 : index
    %24 = vector.load %arg7[%c0_12, %c0_13, %c0_14] : memref<1x256x256xbf16, #tpu.memory_space<vmem>>, vector<1x256x256xbf16>
    %25 = vector.shape_cast %24 : vector<1x256x256xbf16> to vector<256x256xbf16>
    %26 = vector.extract_strided_slice %16 {offsets = [0, 0, 0], sizes = [2, 8, 128], strides = [1, 1, 1]} : vector<2x8x256xbf16> to vector<2x8x128xbf16>
    %27 = vector.extract_strided_slice %19 {offsets = [0, 0, 0], sizes = [2, 8, 128], strides = [1, 1, 1]} : vector<2x8x256xbf16> to vector<2x8x128xbf16>
    %28 = vector.extract_strided_slice %22 {offsets = [0, 0, 0], sizes = [2, 8, 128], strides = [1, 1, 1]} : vector<2x8x256xbf16> to vector<2x8x128xbf16>
    %cst_15 = arith.constant dense<0.000000e+00> : vector<2x8x8xf32>
    %29 = tpu.matmul %26, %27, %cst_15 {dimension_numbers = #tpu.dot_dimension_numbers<[2], [2], [1], [1], [0, 0, 0, 1, 1, 1], [0], [0]>} : vector<2x8x128xbf16>, vector<2x8x128xbf16>, vector<2x8x8xf32> -> vector<2x8x8xf32>
    %30 = vector.broadcast %23 : vector<2x1x8xf32> to vector<2x8x8xf32>
    %31 = arith.addf %29, %30 : vector<2x8x8xf32>
    %cst_16 = arith.constant dense<0xFF800000> : vector<2x8xf32>
    %32 = vector.multi_reduction <maximumf>, %31, %cst_16 [2] : vector<2x8x8xf32> to vector<2x8xf32>
    %33 = vector.shape_cast %32 : vector<2x8xf32> to vector<2x8x1xf32>
    %34 = vector.broadcast %33 : vector<2x8x1xf32> to vector<2x8x8xf32>
    %35 = arith.subf %31, %34 : vector<2x8x8xf32>
    %36 = math.exp %35 : vector<2x8x8xf32>
    %cst_17 = arith.constant dense<0.000000e+00> : vector<2x8xf32>
    %37 = vector.multi_reduction <add>, %36, %cst_17 [2] : vector<2x8x8xf32> to vector<2x8xf32>
    %38 = vector.shape_cast %37 : vector<2x8xf32> to vector<2x8x1xf32>
    %39 = tpu.reciprocal %38 {approx = true} : vector<2x8x1xf32> -> vector<2x8x1xf32>
    %40 = vector.broadcast %39 : vector<2x8x1xf32> to vector<2x8x8xf32>
    %41 = arith.mulf %36, %40 : vector<2x8x8xf32>
    %42 = arith.truncf %41 : vector<2x8x8xf32> to vector<2x8x8xbf16>
    %cst_18 = arith.constant dense<0.000000e+00> : vector<2x8x128xf32>
    %43 = tpu.matmul %42, %28, %cst_18 {dimension_numbers = #tpu.dot_dimension_numbers<[2], [1], [1], [2], [0, 0, 0, 1, 1, 2], [0], [0]>} : vector<2x8x8xbf16>, vector<2x8x128xbf16>, vector<2x8x128xf32> -> vector<2x8x128xf32>
    %44 = vector.shape_cast %43 : vector<2x8x128xf32> to vector<16x128xf32>
    %45 = arith.truncf %44 : vector<16x128xf32> to vector<16x128xbf16>
    %46 = vector.extract_strided_slice %25 {offsets = [0, 0], sizes = [128, 256], strides = [1, 1]} : vector<256x256xbf16> to vector<128x256xbf16>
    %cst_19 = arith.constant dense<0.000000e+00> : vector<16x256xf32>
    %47 = tpu.matmul %45, %46, %cst_19 {dimension_numbers = #tpu.dot_dimension_numbers<[1], [0], [0], [1], [0, 0, 1, 1], [], []>} : vector<16x128xbf16>, vector<128x256xbf16>, vector<16x256xf32> -> vector<16x256xf32>
    %48 = vector.extract_strided_slice %16 {offsets = [0, 0, 128], sizes = [2, 8, 128], strides = [1, 1, 1]} : vector<2x8x256xbf16> to vector<2x8x128xbf16>
    %49 = vector.extract_strided_slice %19 {offsets = [0, 0, 128], sizes = [2, 8, 128], strides = [1, 1, 1]} : vector<2x8x256xbf16> to vector<2x8x128xbf16>
    %50 = vector.extract_strided_slice %22 {offsets = [0, 0, 128], sizes = [2, 8, 128], strides = [1, 1, 1]} : vector<2x8x256xbf16> to vector<2x8x128xbf16>
    %cst_20 = arith.constant dense<0.000000e+00> : vector<2x8x8xf32>
    %51 = tpu.matmul %48, %49, %cst_20 {dimension_numbers = #tpu.dot_dimension_numbers<[2], [2], [1], [1], [0, 0, 0, 1, 1, 1], [0], [0]>} : vector<2x8x128xbf16>, vector<2x8x128xbf16>, vector<2x8x8xf32> -> vector<2x8x8xf32>
    %52 = vector.broadcast %23 : vector<2x1x8xf32> to vector<2x8x8xf32>
    %53 = arith.addf %51, %52 : vector<2x8x8xf32>
    %cst_21 = arith.constant dense<0xFF800000> : vector<2x8xf32>
    %54 = vector.multi_reduction <maximumf>, %53, %cst_21 [2] : vector<2x8x8xf32> to vector<2x8xf32>
    %55 = vector.shape_cast %54 : vector<2x8xf32> to vector<2x8x1xf32>
    %56 = vector.broadcast %55 : vector<2x8x1xf32> to vector<2x8x8xf32>
    %57 = arith.subf %53, %56 : vector<2x8x8xf32>
    %58 = math.exp %57 : vector<2x8x8xf32>
    %cst_22 = arith.constant dense<0.000000e+00> : vector<2x8xf32>
    %59 = vector.multi_reduction <add>, %58, %cst_22 [2] : vector<2x8x8xf32> to vector<2x8xf32>
    %60 = vector.shape_cast %59 : vector<2x8xf32> to vector<2x8x1xf32>
    %61 = tpu.reciprocal %60 {approx = true} : vector<2x8x1xf32> -> vector<2x8x1xf32>
    %62 = vector.broadcast %61 : vector<2x8x1xf32> to vector<2x8x8xf32>
    %63 = arith.mulf %58, %62 : vector<2x8x8xf32>
    %64 = arith.truncf %63 : vector<2x8x8xf32> to vector<2x8x8xbf16>
    %cst_23 = arith.constant dense<0.000000e+00> : vector<2x8x128xf32>
    %65 = tpu.matmul %64, %50, %cst_23 {dimension_numbers = #tpu.dot_dimension_numbers<[2], [1], [1], [2], [0, 0, 0, 1, 1, 2], [0], [0]>} : vector<2x8x8xbf16>, vector<2x8x128xbf16>, vector<2x8x128xf32> -> vector<2x8x128xf32>
    %66 = vector.shape_cast %65 : vector<2x8x128xf32> to vector<16x128xf32>
    %67 = arith.truncf %66 : vector<16x128xf32> to vector<16x128xbf16>
    %68 = vector.extract_strided_slice %25 {offsets = [128, 0], sizes = [128, 256], strides = [1, 1]} : vector<256x256xbf16> to vector<128x256xbf16>
    %cst_24 = arith.constant dense<0.000000e+00> : vector<16x256xf32>
    %69 = tpu.matmul %67, %68, %cst_24 {dimension_numbers = #tpu.dot_dimension_numbers<[1], [0], [0], [1], [0, 0, 1, 1], [], []>} : vector<16x128xbf16>, vector<128x256xbf16>, vector<16x256xf32> -> vector<16x256xf32>
    %70 = arith.addf %47, %69 : vector<16x256xf32>
    %c0_25 = arith.constant 0 : index
    %c0_26 = arith.constant 0 : index
    %c0_27 = arith.constant 0 : index
    %71 = vector.load %arg8[%c0_25, %c0_26, %c0_27] : memref<1x1x256xf32, #tpu.memory_space<vmem>>, vector<1x1x256xf32>
    %72 = vector.shape_cast %71 : vector<1x1x256xf32> to vector<1x256xf32>
    %73 = vector.broadcast %72 : vector<1x256xf32> to vector<16x256xf32>
    %74 = arith.addf %70, %73 : vector<16x256xf32>
    %75 = arith.addf %3, %74 : vector<16x256xf32>
    %c0_28 = arith.constant 0 : index
    %c0_29 = arith.constant 0 : index
    %c0_30 = arith.constant 0 : index
    %76 = vector.load %arg9[%c0_28, %c0_29, %c0_30] : memref<1x1x256xf32, #tpu.memory_space<vmem>>, vector<1x1x256xf32>
    %77 = vector.shape_cast %76 : vector<1x1x256xf32> to vector<1x256xf32>
    %c0_31 = arith.constant 0 : index
    %c0_32 = arith.constant 0 : index
    %c0_33 = arith.constant 0 : index
    %78 = vector.load %arg10[%c0_31, %c0_32, %c0_33] : memref<1x1x256xf32, #tpu.memory_space<vmem>>, vector<1x1x256xf32>
    %79 = vector.shape_cast %78 : vector<1x1x256xf32> to vector<1x256xf32>
    %cst_34 = arith.constant dense<0.000000e+00> : vector<16xf32>
    %80 = vector.multi_reduction <add>, %75, %cst_34 [1] : vector<16x256xf32> to vector<16xf32>
    %81 = vector.shape_cast %80 : vector<16xf32> to vector<16x1xf32>
    %cst_35 = arith.constant 2.560000e+02 : f32
    %82 = vector.broadcast %cst_35 : f32 to vector<16x1xf32>
    %83 = arith.divf %81, %82 : vector<16x1xf32>
    %84 = vector.broadcast %83 : vector<16x1xf32> to vector<16x256xf32>
    %85 = arith.subf %75, %84 : vector<16x256xf32>
    %86 = arith.mulf %85, %85 : vector<16x256xf32>
    %cst_36 = arith.constant dense<0.000000e+00> : vector<16xf32>
    %87 = vector.multi_reduction <add>, %86, %cst_36 [1] : vector<16x256xf32> to vector<16xf32>
    %88 = vector.shape_cast %87 : vector<16xf32> to vector<16x1xf32>
    %cst_37 = arith.constant 2.560000e+02 : f32
    %89 = vector.broadcast %cst_37 : f32 to vector<16x1xf32>
    %90 = arith.divf %88, %89 : vector<16x1xf32>
    %91 = vector.broadcast %83 : vector<16x1xf32> to vector<16x256xf32>
    %92 = arith.subf %75, %91 : vector<16x256xf32>
    %cst_38 = arith.constant 9.99999996E-13 : f32
    %93 = vector.broadcast %cst_38 : f32 to vector<16x1xf32>
    %94 = arith.addf %90, %93 : vector<16x1xf32>
    %95 = math.rsqrt %94 : vector<16x1xf32>
    %96 = vector.broadcast %95 : vector<16x1xf32> to vector<16x256xf32>
    %97 = arith.mulf %92, %96 : vector<16x256xf32>
    %98 = vector.broadcast %77 : vector<1x256xf32> to vector<16x256xf32>
    %99 = arith.mulf %97, %98 : vector<16x256xf32>
    %100 = vector.broadcast %79 : vector<1x256xf32> to vector<16x256xf32>
    %101 = arith.addf %99, %100 : vector<16x256xf32>
    %102 = arith.truncf %101 : vector<16x256xf32> to vector<16x256xbf16>
    %c0_39 = arith.constant 0 : index
    %c0_40 = arith.constant 0 : index
    %c0_41 = arith.constant 0 : index
    %103 = vector.load %arg11[%c0_39, %c0_40, %c0_41] : memref<1x256x512xbf16, #tpu.memory_space<vmem>>, vector<1x256x512xbf16>
    %104 = vector.shape_cast %103 : vector<1x256x512xbf16> to vector<256x512xbf16>
    %cst_42 = arith.constant dense<0.000000e+00> : vector<16x512xf32>
    %105 = tpu.matmul %102, %104, %cst_42 {dimension_numbers = #tpu.dot_dimension_numbers<[1], [0], [0], [1], [0, 0, 1, 1], [], []>} : vector<16x256xbf16>, vector<256x512xbf16>, vector<16x512xf32> -> vector<16x512xf32>
    %c0_43 = arith.constant 0 : index
    %c0_44 = arith.constant 0 : index
    %c0_45 = arith.constant 0 : index
    %106 = vector.load %arg12[%c0_43, %c0_44, %c0_45] : memref<1x1x512xf32, #tpu.memory_space<vmem>>, vector<1x1x512xf32>
    %107 = vector.shape_cast %106 : vector<1x1x512xf32> to vector<1x512xf32>
    %108 = vector.broadcast %107 : vector<1x512xf32> to vector<16x512xf32>
    %109 = arith.addf %105, %108 : vector<16x512xf32>
    %110 = arith.mulf %109, %109 : vector<16x512xf32>
    %111 = arith.mulf %109, %110 : vector<16x512xf32>
    %cst_46 = arith.constant 4.471500e-02 : f32
    %112 = vector.broadcast %cst_46 : f32 to vector<16x512xf32>
    %113 = arith.mulf %112, %111 : vector<16x512xf32>
    %114 = arith.addf %109, %113 : vector<16x512xf32>
    %cst_47 = arith.constant 0.797884583 : f32
    %115 = vector.broadcast %cst_47 : f32 to vector<16x512xf32>
    %116 = arith.mulf %115, %114 : vector<16x512xf32>
    %117 = math.tanh %116 : vector<16x512xf32>
    %cst_48 = arith.constant 1.000000e+00 : f32
    %118 = vector.broadcast %cst_48 : f32 to vector<16x512xf32>
    %119 = arith.addf %118, %117 : vector<16x512xf32>
    %cst_49 = arith.constant 5.000000e-01 : f32
    %120 = vector.broadcast %cst_49 : f32 to vector<16x512xf32>
    %121 = arith.mulf %120, %119 : vector<16x512xf32>
    %122 = arith.mulf %109, %121 : vector<16x512xf32>
    %123 = arith.truncf %122 : vector<16x512xf32> to vector<16x512xbf16>
    %c0_50 = arith.constant 0 : index
    %c0_51 = arith.constant 0 : index
    %c0_52 = arith.constant 0 : index
    %124 = vector.load %arg13[%c0_50, %c0_51, %c0_52] : memref<1x512x256xbf16, #tpu.memory_space<vmem>>, vector<1x512x256xbf16>
    %125 = vector.shape_cast %124 : vector<1x512x256xbf16> to vector<512x256xbf16>
    %cst_53 = arith.constant dense<0.000000e+00> : vector<16x256xf32>
    %126 = tpu.matmul %123, %125, %cst_53 {dimension_numbers = #tpu.dot_dimension_numbers<[1], [0], [0], [1], [0, 0, 1, 1], [], []>} : vector<16x512xbf16>, vector<512x256xbf16>, vector<16x256xf32> -> vector<16x256xf32>
    %c0_54 = arith.constant 0 : index
    %c0_55 = arith.constant 0 : index
    %c0_56 = arith.constant 0 : index
    %127 = vector.load %arg14[%c0_54, %c0_55, %c0_56] : memref<1x1x256xf32, #tpu.memory_space<vmem>>, vector<1x1x256xf32>
    %128 = vector.shape_cast %127 : vector<1x1x256xf32> to vector<1x256xf32>
    %129 = vector.broadcast %128 : vector<1x256xf32> to vector<16x256xf32>
    %130 = arith.addf %126, %129 : vector<16x256xf32>
    %131 = arith.addf %101, %130 : vector<16x256xf32>
    %c0_57 = arith.constant 0 : index
    %c0_58 = arith.constant 0 : index
    %c0_59 = arith.constant 0 : index
    %132 = vector.load %arg15[%c0_57, %c0_58, %c0_59] : memref<1x1x256xf32, #tpu.memory_space<vmem>>, vector<1x1x256xf32>
    %133 = vector.shape_cast %132 : vector<1x1x256xf32> to vector<1x256xf32>
    %c0_60 = arith.constant 0 : index
    %c0_61 = arith.constant 0 : index
    %c0_62 = arith.constant 0 : index
    %134 = vector.load %arg16[%c0_60, %c0_61, %c0_62] : memref<1x1x256xf32, #tpu.memory_space<vmem>>, vector<1x1x256xf32>
    %135 = vector.shape_cast %134 : vector<1x1x256xf32> to vector<1x256xf32>
    %cst_63 = arith.constant dense<0.000000e+00> : vector<16xf32>
    %136 = vector.multi_reduction <add>, %131, %cst_63 [1] : vector<16x256xf32> to vector<16xf32>
    %137 = vector.shape_cast %136 : vector<16xf32> to vector<16x1xf32>
    %cst_64 = arith.constant 2.560000e+02 : f32
    %138 = vector.broadcast %cst_64 : f32 to vector<16x1xf32>
    %139 = arith.divf %137, %138 : vector<16x1xf32>
    %140 = vector.broadcast %139 : vector<16x1xf32> to vector<16x256xf32>
    %141 = arith.subf %131, %140 : vector<16x256xf32>
    %142 = arith.mulf %141, %141 : vector<16x256xf32>
    %cst_65 = arith.constant dense<0.000000e+00> : vector<16xf32>
    %143 = vector.multi_reduction <add>, %142, %cst_65 [1] : vector<16x256xf32> to vector<16xf32>
    %144 = vector.shape_cast %143 : vector<16xf32> to vector<16x1xf32>
    %cst_66 = arith.constant 2.560000e+02 : f32
    %145 = vector.broadcast %cst_66 : f32 to vector<16x1xf32>
    %146 = arith.divf %144, %145 : vector<16x1xf32>
    %147 = vector.broadcast %139 : vector<16x1xf32> to vector<16x256xf32>
    %148 = arith.subf %131, %147 : vector<16x256xf32>
    %cst_67 = arith.constant 9.99999996E-13 : f32
    %149 = vector.broadcast %cst_67 : f32 to vector<16x1xf32>
    %150 = arith.addf %146, %149 : vector<16x1xf32>
    %151 = math.rsqrt %150 : vector<16x1xf32>
    %152 = vector.broadcast %151 : vector<16x1xf32> to vector<16x256xf32>
    %153 = arith.mulf %148, %152 : vector<16x256xf32>
    %154 = vector.broadcast %133 : vector<1x256xf32> to vector<16x256xf32>
    %155 = arith.mulf %153, %154 : vector<16x256xf32>
    %156 = vector.broadcast %135 : vector<1x256xf32> to vector<16x256xf32>
    %157 = arith.addf %155, %156 : vector<16x256xf32>
    %c0_68 = arith.constant 0 : index
    %c0_69 = arith.constant 0 : index
    %158 = vector.load %arg20[%c0_68, %c0_69] : memref<16x256xf32, #tpu.memory_space<vmem>>, vector<16x256xf32>
    tpu.vector_store %arg20[%c0_68, %c0_69], %157 {strides = array<i32>} : memref<16x256xf32, #tpu.memory_space<vmem>>, vector<16x256xf32>,
    %c1_i32 = arith.constant 1 : i32
    %159 = arith.cmpi eq, %arg0, %c1_i32 : i32
    %160 = arith.extui %159 : i1 to i32
    %c0_i32_70 = arith.constant 0 : i32
    %161 = arith.cmpi ne, %160, %c0_i32_70 : i32
    scf.if %161 {
      %162 = vector.shape_cast %157 : vector<16x256xf32> to vector<2x8x256xf32>
      %163 = vector.extract_strided_slice %162 {offsets = [0, 0, 0], sizes = [2, 1, 256], strides = [1, 1, 1]} : vector<2x8x256xf32> to vector<2x1x256xf32>
      %164 = vector.shape_cast %163 : vector<2x1x256xf32> to vector<2x256xf32>
      %c0_71 = arith.constant 0 : index
      %c0_72 = arith.constant 0 : index
      %165 = vector.load %arg17[%c0_71, %c0_72] : memref<1x256xf32, #tpu.memory_space<vmem>>, vector<1x256xf32>
      %166 = vector.broadcast %165 : vector<1x256xf32> to vector<2x256xf32>
      %167 = arith.mulf %164, %166 : vector<2x256xf32>
      %cst_73 = arith.constant dense<0.000000e+00> : vector<2xf32>
      %168 = vector.multi_reduction <add>, %167, %cst_73 [1] : vector<2x256xf32> to vector<2xf32>
      %169 = vector.shape_cast %168 : vector<2xf32> to vector<2x1xf32>
      %c0_74 = arith.constant 0 : index
      %c0_75 = arith.constant 0 : index
      %170 = vector.load %arg18[%c0_74, %c0_75] : memref<1x1xf32, #tpu.memory_space<vmem>>, vector<1x1xf32>
      %171 = vector.broadcast %170 : vector<1x1xf32> to vector<2x1xf32>
      %172 = arith.addf %169, %171 : vector<2x1xf32>
      %c0_76 = arith.constant 0 : index
      %c0_77 = arith.constant 0 : index
      %173 = vector.load %arg19[%c0_76, %c0_77] : memref<2x1xf32, #tpu.memory_space<vmem>>, vector<2x1xf32>
      tpu.vector_store %arg19[%c0_76, %c0_77], %172 {strides = array<i32>} : memref<2x1xf32, #tpu.memory_space<vmem>>, vector<2x1xf32>,
    } else {
    }
    return
  }
  func.func @transform_0(%arg0: i32) -> (i32, i32) {
    %c0_i32 = arith.constant 0 : i32
    %c0_i32_0 = arith.constant 0 : i32
    %c0_i32_1 = arith.constant 0 : i32
    return %c0_i32, %c0_i32_0 : i32, i32
  }
  func.func @transform_1(%arg0: i32) -> (i32, i32, i32) {
    %c0_i32 = arith.constant 0 : i32
    %c0_i32_0 = arith.constant 0 : i32
    %c0_i32_1 = arith.constant 0 : i32
    %c0_i32_2 = arith.constant 0 : i32
    return %c0_i32, %c0_i32_0, %c0_i32_1 : i32, i32, i32
  }
  func.func @transform_2(%arg0: i32) -> (i32, i32) {
    %c0_i32 = arith.constant 0 : i32
    %c0_i32_0 = arith.constant 0 : i32
    %c0_i32_1 = arith.constant 0 : i32
    return %c0_i32, %c0_i32_0 : i32, i32
  }
  func.func @transform_3(%arg0: i32) -> (i32, i32) {
    %c0_i32 = arith.constant 0 : i32
    %c0_i32_0 = arith.constant 0 : i32
    %c0_i32_1 = arith.constant 0 : i32
    return %c0_i32, %c0_i32_0 : i32, i32
  }
  func.func @transform_4(%arg0: i32) -> (i32, i32, i32) {
    %c0_i32 = arith.constant 0 : i32
    %c0_i32_0 = arith.constant 0 : i32
    %c0_i32_1 = arith.constant 0 : i32
    return %arg0, %c0_i32, %c0_i32_0 : i32, i32, i32
  }
  func.func @transform_5(%arg0: i32) -> (i32, i32, i32) {
    %c0_i32 = arith.constant 0 : i32
    %c0_i32_0 = arith.constant 0 : i32
    %c0_i32_1 = arith.constant 0 : i32
    return %arg0, %c0_i32, %c0_i32_0 : i32, i32, i32
  }
  func.func @transform_6(%arg0: i32) -> (i32, i32, i32) {
    %c0_i32 = arith.constant 0 : i32
    %c0_i32_0 = arith.constant 0 : i32
    %c0_i32_1 = arith.constant 0 : i32
    return %arg0, %c0_i32, %c0_i32_0 : i32, i32, i32
  }
  func.func @transform_7(%arg0: i32) -> (i32, i32, i32) {
    %c0_i32 = arith.constant 0 : i32
    %c0_i32_0 = arith.constant 0 : i32
    %c0_i32_1 = arith.constant 0 : i32
    return %arg0, %c0_i32, %c0_i32_0 : i32, i32, i32
  }
  func.func @transform_8(%arg0: i32) -> (i32, i32, i32) {
    %c0_i32 = arith.constant 0 : i32
    %c0_i32_0 = arith.constant 0 : i32
    %c0_i32_1 = arith.constant 0 : i32
    return %arg0, %c0_i32, %c0_i32_0 : i32, i32, i32
  }
  func.func @transform_9(%arg0: i32) -> (i32, i32, i32) {
    %c0_i32 = arith.constant 0 : i32
    %c0_i32_0 = arith.constant 0 : i32
    %c0_i32_1 = arith.constant 0 : i32
    return %arg0, %c0_i32, %c0_i32_0 : i32, i32, i32
  }
  func.func @transform_10(%arg0: i32) -> (i32, i32, i32) {
    %c0_i32 = arith.constant 0 : i32
    %c0_i32_0 = arith.constant 0 : i32
    %c0_i32_1 = arith.constant 0 : i32
    return %arg0, %c0_i32, %c0_i32_0 : i32, i32, i32
  }
  func.func @transform_11(%arg0: i32) -> (i32, i32, i32) {
    %c0_i32 = arith.constant 0 : i32
    %c0_i32_0 = arith.constant 0 : i32
    %c0_i32_1 = arith.constant 0 : i32
    return %arg0, %c0_i32, %c0_i32_0 : i32, i32, i32
  }
  func.func @transform_12(%arg0: i32) -> (i32, i32, i32) {
    %c0_i32 = arith.constant 0 : i32
    %c0_i32_0 = arith.constant 0 : i32
    %c0_i32_1 = arith.constant 0 : i32
    return %arg0, %c0_i32, %c0_i32_0 : i32, i32, i32
  }
  func.func @transform_13(%arg0: i32) -> (i32, i32, i32) {
    %c0_i32 = arith.constant 0 : i32
    %c0_i32_0 = arith.constant 0 : i32
    %c0_i32_1 = arith.constant 0 : i32
    return %arg0, %c0_i32, %c0_i32_0 : i32, i32, i32
  }
  func.func @transform_14(%arg0: i32) -> (i32, i32, i32) {
    %c0_i32 = arith.constant 0 : i32
    %c0_i32_0 = arith.constant 0 : i32
    %c0_i32_1 = arith.constant 0 : i32
    return %arg0, %c0_i32, %c0_i32_0 : i32, i32, i32
  }
  func.func @transform_15(%arg0: i32) -> (i32, i32, i32) {
    %c0_i32 = arith.constant 0 : i32
    %c0_i32_0 = arith.constant 0 : i32
    %c0_i32_1 = arith.constant 0 : i32
    return %arg0, %c0_i32, %c0_i32_0 : i32, i32, i32
  }
  func.func @transform_16(%arg0: i32) -> (i32, i32) {
    %c0_i32 = arith.constant 0 : i32
    %c0_i32_0 = arith.constant 0 : i32
    %c0_i32_1 = arith.constant 0 : i32
    return %c0_i32, %c0_i32_0 : i32, i32
  }
  func.func @transform_17(%arg0: i32) -> (i32, i32) {
    %c0_i32 = arith.constant 0 : i32
    %c0_i32_0 = arith.constant 0 : i32
    %c0_i32_1 = arith.constant 0 : i32
    return %c0_i32, %c0_i32_0 : i32, i32
  }
  func.func @transform_18(%arg0: i32) -> (i32, i32) {
    %c0_i32 = arith.constant 0 : i32
    %c0_i32_0 = arith.constant 0 : i32
    %c0_i32_1 = arith.constant 0 : i32
    return %c0_i32, %c0_i32_0 : i32, i32
  }
}

</mosaic_0001>

<llo_original>
// kernel: _forward_impl.1
$region0: #{_forward_impl.1}
  #allocation0 [shape = 'u32[]', space=smem, size = 0x4, offset = 0x4, fixed_abs, tag = 'smem constant byte address 0x4 - core index']
  #allocation1 [shape = 'u32[144,128]{1,0:T(1,128)}', space=vmem, size = 0x12000, scoped, tag = 'internal scratch']
  #allocation2 [shape = 'f32[16,256]{1,0:T(8,128)}', space=vmem, size = 0x4000, scoped, tag = 'scratch operand']
  #allocation3 [shape = 'f32[1,1]{1,0:T(1,128)S(1)}', space=vmem, size = 0x200, scoped, tag = 'scoped memory for _forward_impl.1']
  %s0 = inlined_call_operand.vmem [shape: f32[16,256], index: 0, kind: input, shape index: {}]
  %s1 = inlined_call_operand.vmem [shape: f32[2,1,8], index: 1, kind: input, shape index: {}]
  %s2 = inlined_call_operand.vmem [shape: f32[1,256], index: 2, kind: input, shape index: {}]
  %s3 = inlined_call_operand.vmem [shape: f32[1,256], index: 3, kind: input, shape index: {}]
  %s4 = inlined_call_operand.hbm [shape: bf16[2,256,768], index: 4, kind: input, shape index: {}]
  %s5 = inlined_call_operand.vmem [shape: f32[2,1,768], index: 5, kind: input, shape index: {}]
  %s6 = inlined_call_operand.hbm [shape: bf16[2,256,256], index: 6, kind: input, shape index: {}]
  %s7 = inlined_call_operand.vmem [shape: f32[2,1,256], index: 7, kind: input, shape index: {}]
  %s8 = inlined_call_operand.vmem [shape: f32[2,1,256], index: 8, kind: input, shape index: {}]
  %s9 = inlined_call_operand.vmem [shape: f32[2,1,256], index: 9, kind: input, shape index: {}]
  %s10 = inlined_call_operand.hbm [shape: bf16[2,256,512], index: 10, kind: input, shape index: {}]
  %s11 = inlined_call_operand.vmem [shape: f32[2,1,512], index: 11, kind: input, shape index: {}]
  %s12 = inlined_call_operand.hbm [shape: bf16[2,512,256], index: 12, kind: input, shape index: {}]
  %s13 = inlined_call_operand.vmem [shape: f32[2,1,256], index: 13, kind: input, shape index: {}]
  %s14 = inlined_call_operand.vmem [shape: f32[2,1,256], index: 14, kind: input, shape index: {}]
  %s15 = inlined_call_operand.vmem [shape: f32[2,1,256], index: 15, kind: input, shape index: {}]
  %s16 = inlined_call_operand.vmem [shape: f32[1,256], index: 16, kind: input, shape index: {}]
  %s17 = inlined_call_operand.<no memory space> [shape: f32[1,1], index: 17, kind: input, shape index: {}]
  %s18 = inlined_call_operand.vmem [shape: f32[2,1], index: 18, kind: output, shape index: {}]
  %s19 = sld [smem:[#allocation0]]
  $region129: #{_forward_impl.1} parent=0
    _
  %s21 = ssub.s32 1, %s19
  %s22 = scalar_select 0, %s21, %s19
  %v23 = vstv %s17
  %24 = vst [vmem:[#allocation3] sm:$0x1] %v23
  $region1: #{_forward_impl.1} parent=0
    #allocation4 [shape = 'u8[786432]{0}', space=vmem, size = 0xc0000, scoped, tag = 'input window, operand 4']
    #allocation5 [shape = 's32[2]{0}', space=sflag, size = 0x8, scoped, tag = 'scoped memory for _forward_impl.1']
    #allocation6 [shape = 'u8[262144]{0}', space=vmem, size = 0x40000, scoped, tag = 'input window, operand 6']
    #allocation7 [shape = 's32[2]{0}', space=sflag, size = 0x8, scoped, tag = 'scoped memory for _forward_impl.1']
    #allocation8 [shape = 'u8[524288]{0}', space=vmem, size = 0x80000, scoped, tag = 'input window, operand 10']
    #allocation9 [shape = 'u8[524288]{0}', space=vmem, size = 0x80000, scoped, tag = 'input window, operand 12']
    #allocation10 [shape = 's32[2]{0}', space=sflag, size = 0x8, scoped, tag = 'scoped memory for _forward_impl.1']
    %25 = vsyncpa [#allocation5], 0
    %s26 = scalar_lea.sflag [#allocation5], 1
    %27 = vsyncpa %s26, 0
    %28 = vsyncpa [#allocation7], 0
    %s29 = scalar_lea.sflag [#allocation7], 1
    %30 = vsyncpa %s29, 0
    %31 = vsyncpa [#allocation10], 0
    %s32 = scalar_lea.sflag [#allocation10], 1
    %33 = vsyncpa %s32, 0
    loop: start=0, step=1, limit=4
    $region2: #{_forward_impl.1} parent=1 // loop_pre_header
      _
    $region3: #{_forward_impl.1} parent=1 // loop_header
      %s35 = sphi 0, %s39
      %p36 = scmp.ge.s32.totalorder %s35, 4
      %s43 = sphi 0, %s43
      %s45 = sphi 0, %s43
      %s46 = sphi 0, %s45
      %s60 = sphi 0, %s46
      %s64 = sphi 0, %s64
      %s66 = sphi 0, %s64
      %s67 = sphi 0, %s66
      %s81 = sphi 0, %s67
      %s85 = sphi 0, %s85
      %s87 = sphi 0, %s85
      %s88 = sphi 0, %s87
      %s102 = sphi 0, %s88
      %s106 = sphi 0, %s106
      %s108 = sphi 0, %s106
      %s109 = sphi 0, %s108
      %s123 = sphi 0, %s109
      %s129 = sphi 0, %s131
      %s132 = sphi 0, %s129
      %s133 = sphi 0, %s132
      %s149 = sphi 0, %s133
      %s155 = sphi 0, %s157
      %s158 = sphi 0, %s155
      %s159 = sphi 0, %s158
      %s175 = sphi 0, %s159
      %s181 = sphi 0, %s183
      %s184 = sphi 0, %s181
      %s185 = sphi 0, %s184
      %s201 = sphi 0, %s185
      %s207 = sphi 0, %s209
      %s210 = sphi 0, %s207
      %s211 = sphi 0, %s210
      %s227 = sphi 0, %s211
      %s233 = sphi 0, %s235
      %s236 = sphi 0, %s233
      %s237 = sphi 0, %s236
      %s253 = sphi 0, %s237
      %s259 = sphi 0, %s261
      %s262 = sphi 0, %s259
      %s263 = sphi 0, %s262
      %s279 = sphi 0, %s263
      %s285 = sphi 0, %s287
      %s288 = sphi 0, %s285
      %s289 = sphi 0, %s288
      %s305 = sphi 0, %s289
      %s311 = sphi 0, %s313
      %s314 = sphi 0, %s311
      %s315 = sphi 0, %s314
      %s331 = sphi 0, %s315
      %s337 = sphi 0, %s339
      %s340 = sphi 0, %s337
      %s341 = sphi 0, %s340
      %s357 = sphi 0, %s341
      %s363 = sphi 0, %s365
      %s366 = sphi 0, %s363
      %s367 = sphi 0, %s366
      %s383 = sphi 0, %s367
      %s389 = sphi 0, %s391
      %s392 = sphi 0, %s389
      %s393 = sphi 0, %s392
      %s409 = sphi 0, %s393
      %s415 = sphi 0, %s417
      %s418 = sphi 0, %s415
      %s419 = sphi 0, %s418
      %s435 = sphi 0, %s419
      %s439 = sphi 0, %s439
      %s441 = sphi 0, %s439
      %s442 = sphi 0, %s441
      %s456 = sphi 0, %s442
      %s460 = sphi 0, %s460
      %s462 = sphi 0, %s460
      %s463 = sphi 0, %s462
      %s477 = sphi 0, %s463
      %s481 = sphi 0, %s481
      %s483 = sphi 0, %s481
      %s484 = sphi 0, %s483
      %s498 = sphi 0, %s484
    $region4: #{_forward_impl.1} parent=1 // loop_header_branch
      %38 = sbr.rel (%p36) target = $region8
    $region5: #{_forward_impl.1} parent=1 // loop_body
      %s40 = ssub.s32 %s35, 1
      %s41 = ssub.s32 %s35, 2
      %s42 = sadd.s32 %s35, 1
      %s44 = sadd.s32 %s43, 1
      %p47 = scmp.eq.s32.totalorder %s35, 1
      %p48 = scmp.ne.s32.totalorder %s43, %s45
      %p49 = scmp.eq.s32.totalorder %s35, 0
      %p50 = por %p48, %p49
      %p51 = scmp.ne.s32.totalorder %s43, %s45
      %p52 = scmp.eq.s32.totalorder %s40, 1
      %p53 = por %p51, %p52
      %p54 = scmp.ne.s32.totalorder %s45, %s46
      %p55 = scmp.eq.s32.totalorder %s40, 0
      %p56 = por %p54, %p55
      %p57 = scmp.ne.s32.totalorder %s45, %s46
      %p58 = scmp.eq.s32.totalorder %s41, 1
      %p59 = por %p57, %p58
      %p61 = scmp.ne.s32.totalorder %s46, %s60
      %p62 = scmp.eq.s32.totalorder %s41, 0
      %p63 = por %p61, %p62
      %s65 = sadd.s32 %s64, 1
      %p68 = scmp.eq.s32.totalorder %s35, 1
      %p69 = scmp.ne.s32.totalorder %s64, %s66
      %p70 = scmp.eq.s32.totalorder %s35, 0
      %p71 = por %p69, %p70
      %p72 = scmp.ne.s32.totalorder %s64, %s66
      %p73 = scmp.eq.s32.totalorder %s40, 1
      %p74 = por %p72, %p73
      %p75 = scmp.ne.s32.totalorder %s66, %s67
      %p76 = scmp.eq.s32.totalorder %s40, 0
      %p77 = por %p75, %p76
      %p78 = scmp.ne.s32.totalorder %s66, %s67
      %p79 = scmp.eq.s32.totalorder %s41, 1
      %p80 = por %p78, %p79
      %p82 = scmp.ne.s32.totalorder %s67, %s81
      %p83 = scmp.eq.s32.totalorder %s41, 0
      %p84 = por %p82, %p83
      %s86 = sadd.s32 %s85, 1
      %p89 = scmp.eq.s32.totalorder %s35, 1
      %p90 = scmp.ne.s32.totalorder %s85, %s87
      %p91 = scmp.eq.s32.totalorder %s35, 0
      %p92 = por %p90, %p91
      %p93 = scmp.ne.s32.totalorder %s85, %s87
      %p94 = scmp.eq.s32.totalorder %s40, 1
      %p95 = por %p93, %p94
      %p96 = scmp.ne.s32.totalorder %s87, %s88
      %p97 = scmp.eq.s32.totalorder %s40, 0
      %p98 = por %p96, %p97
      %p99 = scmp.ne.s32.totalorder %s87, %s88
      %p100 = scmp.eq.s32.totalorder %s41, 1
      %p101 = por %p99, %p100
      %p103 = scmp.ne.s32.totalorder %s88, %s102
      %p104 = scmp.eq.s32.totalorder %s41, 0
      %p105 = por %p103, %p104
      %s107 = sadd.s32 %s106, 1
      %p110 = scmp.eq.s32.totalorder %s35, 1
      %p111 = scmp.ne.s32.totalorder %s106, %s108
      %p112 = scmp.eq.s32.totalorder %s35, 0
      %p113 = por %p111, %p112
      %p114 = scmp.ne.s32.totalorder %s106, %s108
      %p115 = scmp.eq.s32.totalorder %s40, 1
      %p116 = por %p114, %p115
      %p117 = scmp.ne.s32.totalorder %s108, %s109
      %p118 = scmp.eq.s32.totalorder %s40, 0
      %p119 = por %p117, %p118
      %p120 = scmp.ne.s32.totalorder %s108, %s109
      %p121 = scmp.eq.s32.totalorder %s41, 1
      %p122 = por %p120, %p121
      %p124 = scmp.ne.s32.totalorder %s109, %s123
      %p125 = scmp.eq.s32.totalorder %s41, 0
      %p126 = por %p124, %p125
      %s127 = ssub.s32 %s35, %s42
      %p128 = scmp.eq.s32.totalorder %s127, 0
      %s130 = sadd.s32 %s129, 1
      %s131 = scalar_select %p128, %s129, %s130
      %p134 = pneg %p128
      %p135 = scmp.eq.s32.totalorder %s35, 1
      %p136 = por %p134, %p135
      %p137 = scmp.ne.s32.totalorder %s129, %s132
      %p138 = scmp.eq.s32.totalorder %s35, 0
      %p139 = por %p137, %p138
      %p140 = scmp.ne.s32.totalorder %s129, %s132
      %p141 = scmp.eq.s32.totalorder %s40, 1
      %p142 = por %p140, %p141
      %p143 = scmp.ne.s32.totalorder %s132, %s133
      %p144 = scmp.eq.s32.totalorder %s40, 0
      %p145 = por %p143, %p144
      %p146 = scmp.ne.s32.totalorder %s132, %s133
      %p147 = scmp.eq.s32.totalorder %s41, 1
      %p148 = por %p146, %p147
      %p150 = scmp.ne.s32.totalorder %s133, %s149
      %p151 = scmp.eq.s32.totalorder %s41, 0
      %p152 = por %p150, %p151
      %s153 = ssub.s32 %s35, %s42
      %p154 = scmp.eq.s32.totalorder %s153, 0
      %s156 = sadd.s32 %s155, 1
      %s157 = scalar_select %p154, %s155, %s156
      %p160 = pneg %p154
      %p161 = scmp.eq.s32.totalorder %s35, 1
      %p162 = por %p160, %p161
      %p163 = scmp.ne.s32.totalorder %s155, %s158
      %p164 = scmp.eq.s32.totalorder %s35, 0
      %p165 = por %p163, %p164
      %p166 = scmp.ne.s32.totalorder %s155, %s158
      %p167 = scmp.eq.s32.totalorder %s40, 1
      %p168 = por %p166, %p167
      %p169 = scmp.ne.s32.totalorder %s158, %s159
      %p170 = scmp.eq.s32.totalorder %s40, 0
      %p171 = por %p169, %p170
      %p172 = scmp.ne.s32.totalorder %s158, %s159
      %p173 = scmp.eq.s32.totalorder %s41, 1
      %p174 = por %p172, %p173
      %p176 = scmp.ne.s32.totalorder %s159, %s175
      %p177 = scmp.eq.s32.totalorder %s41, 0
      %p178 = por %p176, %p177
      %s179 = ssub.s32 %s35, %s42
      %p180 = scmp.eq.s32.totalorder %s179, 0
      %s182 = sadd.s32 %s181, 1
      %s183 = scalar_select %p180, %s181, %s182
      %p186 = pneg %p180
      %p187 = scmp.eq.s32.totalorder %s35, 1
      %p188 = por %p186, %p187
      %p189 = scmp.ne.s32.totalorder %s181, %s184
      %p190 = scmp.eq.s32.totalorder %s35, 0
      %p191 = por %p189, %p190
      %p192 = scmp.ne.s32.totalorder %s181, %s184
      %p193 = scmp.eq.s32.totalorder %s40, 1
      %p194 = por %p192, %p193
      %p195 = scmp.ne.s32.totalorder %s184, %s185
      %p196 = scmp.eq.s32.totalorder %s40, 0
      %p197 = por %p195, %p196
      %p198 = scmp.ne.s32.totalorder %s184, %s185
      %p199 = scmp.eq.s32.totalorder %s41, 1
      %p200 = por %p198, %p199
      %p202 = scmp.ne.s32.totalorder %s185, %s201
      %p203 = scmp.eq.s32.totalorder %s41, 0
      %p204 = por %p202, %p203
      %s205 = ssub.s32 %s35, %s42
      %p206 = scmp.eq.s32.totalorder %s205, 0
      %s208 = sadd.s32 %s207, 1
      %s209 = scalar_select %p206, %s207, %s208
      %p212 = pneg %p206
      %p213 = scmp.eq.s32.totalorder %s35, 1
      %p214 = por %p212, %p213
      %p215 = scmp.ne.s32.totalorder %s207, %s210
      %p216 = scmp.eq.s32.totalorder %s35, 0
      %p217 = por %p215, %p216
      %p218 = scmp.ne.s32.totalorder %s207, %s210
      %p219 = scmp.eq.s32.totalorder %s40, 1
      %p220 = por %p218, %p219
      %p221 = scmp.ne.s32.totalorder %s210, %s211
      %p222 = scmp.eq.s32.totalorder %s40, 0
      %p223 = por %p221, %p222
      %p224 = scmp.ne.s32.totalorder %s210, %s211
      %p225 = scmp.eq.s32.totalorder %s41, 1
      %p226 = por %p224, %p225
      %p228 = scmp.ne.s32.totalorder %s211, %s227
      %p229 = scmp.eq.s32.totalorder %s41, 0
      %p230 = por %p228, %p229
      %s231 = ssub.s32 %s35, %s42
      %p232 = scmp.eq.s32.totalorder %s231, 0
      %s234 = sadd.s32 %s233, 1
      %s235 = scalar_select %p232, %s233, %s234
      %p238 = pneg %p232
      %p239 = scmp.eq.s32.totalorder %s35, 1
      %p240 = por %p238, %p239
      %p241 = scmp.ne.s32.totalorder %s233, %s236
      %p242 = scmp.eq.s32.totalorder %s35, 0
      %p243 = por %p241, %p242
      %p244 = scmp.ne.s32.totalorder %s233, %s236
      %p245 = scmp.eq.s32.totalorder %s40, 1
      %p246 = por %p244, %p245
      %p247 = scmp.ne.s32.totalorder %s236, %s237
      %p248 = scmp.eq.s32.totalorder %s40, 0
      %p249 = por %p247, %p248
      %p250 = scmp.ne.s32.totalorder %s236, %s237
      %p251 = scmp.eq.s32.totalorder %s41, 1
      %p252 = por %p250, %p251
      %p254 = scmp.ne.s32.totalorder %s237, %s253
      %p255 = scmp.eq.s32.totalorder %s41, 0
      %p256 = por %p254, %p255
      %s257 = ssub.s32 %s35, %s42
      %p258 = scmp.eq.s32.totalorder %s257, 0
      %s260 = sadd.s32 %s259, 1
      %s261 = scalar_select %p258, %s259, %s260
      %p264 = pneg %p258
      %p265 = scmp.eq.s32.totalorder %s35, 1
      %p266 = por %p264, %p265
      %p267 = scmp.ne.s32.totalorder %s259, %s262
      %p268 = scmp.eq.s32.totalorder %s35, 0
      %p269 = por %p267, %p268
      %p270 = scmp.ne.s32.totalorder %s259, %s262
      %p271 = scmp.eq.s32.totalorder %s40, 1
      %p272 = por %p270, %p271
      %p273 = scmp.ne.s32.totalorder %s262, %s263
      %p274 = scmp.eq.s32.totalorder %s40, 0
      %p275 = por %p273, %p274
      %p276 = scmp.ne.s32.totalorder %s262, %s263
      %p277 = scmp.eq.s32.totalorder %s41, 1
      %p278 = por %p276, %p277
      %p280 = scmp.ne.s32.totalorder %s263, %s279
      %p281 = scmp.eq.s32.totalorder %s41, 0
      %p282 = por %p280, %p281
      %s283 = ssub.s32 %s35, %s42
      %p284 = scmp.eq.s32.totalorder %s283, 0
      %s286 = sadd.s32 %s285, 1
      %s287 = scalar_select %p284, %s285, %s286
      %p290 = pneg %p284
      %p291 = scmp.eq.s32.totalorder %s35, 1
      %p292 = por %p290, %p291
      %p293 = scmp.ne.s32.totalorder %s285, %s288
      %p294 = scmp.eq.s32.totalorder %s35, 0
      %p295 = por %p293, %p294
      %p296 = scmp.ne.s32.totalorder %s285, %s288
      %p297 = scmp.eq.s32.totalorder %s40, 1
      %p298 = por %p296, %p297
      %p299 = scmp.ne.s32.totalorder %s288, %s289
      %p300 = scmp.eq.s32.totalorder %s40, 0
      %p301 = por %p299, %p300
      %p302 = scmp.ne.s32.totalorder %s288, %s289
      %p303 = scmp.eq.s32.totalorder %s41, 1
      %p304 = por %p302, %p303
      %p306 = scmp.ne.s32.totalorder %s289, %s305
      %p307 = scmp.eq.s32.totalorder %s41, 0
      %p308 = por %p306, %p307
      %s309 = ssub.s32 %s35, %s42
      %p310 = scmp.eq.s32.totalorder %s309, 0
      %s312 = sadd.s32 %s311, 1
      %s313 = scalar_select %p310, %s311, %s312
      %p316 = pneg %p310
      %p317 = scmp.eq.s32.totalorder %s35, 1
      %p318 = por %p316, %p317
      %p319 = scmp.ne.s32.totalorder %s311, %s314
      %p320 = scmp.eq.s32.totalorder %s35, 0
      %p321 = por %p319, %p320
      %p322 = scmp.ne.s32.totalorder %s311, %s314
      %p323 = scmp.eq.s32.totalorder %s40, 1
      %p324 = por %p322, %p323
      %p325 = scmp.ne.s32.totalorder %s314, %s315
      %p326 = scmp.eq.s32.totalorder %s40, 0
      %p327 = por %p325, %p326
      %p328 = scmp.ne.s32.totalorder %s314, %s315
      %p329 = scmp.eq.s32.totalorder %s41, 1
      %p330 = por %p328, %p329
      %p332 = scmp.ne.s32.totalorder %s315, %s331
      %p333 = scmp.eq.s32.totalorder %s41, 0
      %p334 = por %p332, %p333
      %s335 = ssub.s32 %s35, %s42
      %p336 = scmp.eq.s32.totalorder %s335, 0
      %s338 = sadd.s32 %s337, 1
      %s339 = scalar_select %p336, %s337, %s338
      %p342 = pneg %p336
      %p343 = scmp.eq.s32.totalorder %s35, 1
      %p344 = por %p342, %p343
      %p345 = scmp.ne.s32.totalorder %s337, %s340
      %p346 = scmp.eq.s32.totalorder %s35, 0
      %p347 = por %p345, %p346
      %p348 = scmp.ne.s32.totalorder %s337, %s340
      %p349 = scmp.eq.s32.totalorder %s40, 1
      %p350 = por %p348, %p349
      %p351 = scmp.ne.s32.totalorder %s340, %s341
      %p352 = scmp.eq.s32.totalorder %s40, 0
      %p353 = por %p351, %p352
      %p354 = scmp.ne.s32.totalorder %s340, %s341
      %p355 = scmp.eq.s32.totalorder %s41, 1
      %p356 = por %p354, %p355
      %p358 = scmp.ne.s32.totalorder %s341, %s357
      %p359 = scmp.eq.s32.totalorder %s41, 0
      %p360 = por %p358, %p359
      %s361 = ssub.s32 %s35, %s42
      %p362 = scmp.eq.s32.totalorder %s361, 0
      %s364 = sadd.s32 %s363, 1
      %s365 = scalar_select %p362, %s363, %s364
      %p368 = pneg %p362
      %p369 = scmp.eq.s32.totalorder %s35, 1
      %p370 = por %p368, %p369
      %p371 = scmp.ne.s32.totalorder %s363, %s366
      %p372 = scmp.eq.s32.totalorder %s35, 0
      %p373 = por %p371, %p372
      %p374 = scmp.ne.s32.totalorder %s363, %s366
      %p375 = scmp.eq.s32.totalorder %s40, 1
      %p376 = por %p374, %p375
      %p377 = scmp.ne.s32.totalorder %s366, %s367
      %p378 = scmp.eq.s32.totalorder %s40, 0
      %p379 = por %p377, %p378
      %p380 = scmp.ne.s32.totalorder %s366, %s367
      %p381 = scmp.eq.s32.totalorder %s41, 1
      %p382 = por %p380, %p381
      %p384 = scmp.ne.s32.totalorder %s367, %s383
      %p385 = scmp.eq.s32.totalorder %s41, 0
      %p386 = por %p384, %p385
      %s387 = ssub.s32 %s35, %s42
      %p388 = scmp.eq.s32.totalorder %s387, 0
      %s390 = sadd.s32 %s389, 1
      %s391 = scalar_select %p388, %s389, %s390
      %p394 = pneg %p388
      %p395 = scmp.eq.s32.totalorder %s35, 1
      %p396 = por %p394, %p395
      %p397 = scmp.ne.s32.totalorder %s389, %s392
      %p398 = scmp.eq.s32.totalorder %s35, 0
      %p399 = por %p397, %p398
      %p400 = scmp.ne.s32.totalorder %s389, %s392
      %p401 = scmp.eq.s32.totalorder %s40, 1
      %p402 = por %p400, %p401
      %p403 = scmp.ne.s32.totalorder %s392, %s393
      %p404 = scmp.eq.s32.totalorder %s40, 0
      %p405 = por %p403, %p404
      %p406 = scmp.ne.s32.totalorder %s392, %s393
      %p407 = scmp.eq.s32.totalorder %s41, 1
      %p408 = por %p406, %p407
      %p410 = scmp.ne.s32.totalorder %s393, %s409
      %p411 = scmp.eq.s32.totalorder %s41, 0
      %p412 = por %p410, %p411
      %s413 = ssub.s32 %s35, %s42
      %p414 = scmp.eq.s32.totalorder %s413, 0
      %s416 = sadd.s32 %s415, 1
      %s417 = scalar_select %p414, %s415, %s416
      %p420 = pneg %p414
      %p421 = scmp.eq.s32.totalorder %s35, 1
      %p422 = por %p420, %p421
      %p423 = scmp.ne.s32.totalorder %s415, %s418
      %p424 = scmp.eq.s32.totalorder %s35, 0
      %p425 = por %p423, %p424
      %p426 = scmp.ne.s32.totalorder %s415, %s418
      %p427 = scmp.eq.s32.totalorder %s40, 1
      %p428 = por %p426, %p427
      %p429 = scmp.ne.s32.totalorder %s418, %s419
      %p430 = scmp.eq.s32.totalorder %s40, 0
      %p431 = por %p429, %p430
      %p432 = scmp.ne.s32.totalorder %s418, %s419
      %p433 = scmp.eq.s32.totalorder %s41, 1
      %p434 = por %p432, %p433
      %p436 = scmp.ne.s32.totalorder %s419, %s435
      %p437 = scmp.eq.s32.totalorder %s41, 0
      %p438 = por %p436, %p437
      %s440 = sadd.s32 %s439, 1
      %p443 = scmp.eq.s32.totalorder %s35, 1
      %p444 = scmp.ne.s32.totalorder %s439, %s441
      %p445 = scmp.eq.s32.totalorder %s35, 0
      %p446 = por %p444, %p445
      %p447 = scmp.ne.s32.totalorder %s439, %s441
      %p448 = scmp.eq.s32.totalorder %s40, 1
      %p449 = por %p447, %p448
      %p450 = scmp.ne.s32.totalorder %s441, %s442
      %p451 = scmp.eq.s32.totalorder %s40, 0
      %p452 = por %p450, %p451
      %p453 = scmp.ne.s32.totalorder %s441, %s442
      %p454 = scmp.eq.s32.totalorder %s41, 1
      %p455 = por %p453, %p454
      %p457 = scmp.ne.s32.totalorder %s442, %s456
      %p458 = scmp.eq.s32.totalorder %s41, 0
      %p459 = por %p457, %p458
      %s461 = sadd.s32 %s460, 1
      %p464 = scmp.eq.s32.totalorder %s35, 1
      %p465 = scmp.ne.s32.totalorder %s460, %s462
      %p466 = scmp.eq.s32.totalorder %s35, 0
      %p467 = por %p465, %p466
      %p468 = scmp.ne.s32.totalorder %s460, %s462
      %p469 = scmp.eq.s32.totalorder %s40, 1
      %p470 = por %p468, %p469
      %p471 = scmp.ne.s32.totalorder %s462, %s463
      %p472 = scmp.eq.s32.totalorder %s40, 0
      %p473 = por %p471, %p472
      %p474 = scmp.ne.s32.totalorder %s462, %s463
      %p475 = scmp.eq.s32.totalorder %s41, 1
      %p476 = por %p474, %p475
      %p478 = scmp.ne.s32.totalorder %s463, %s477
      %p479 = scmp.eq.s32.totalorder %s41, 0
      %p480 = por %p478, %p479
      %s482 = sadd.s32 %s481, 1
      %p485 = scmp.eq.s32.totalorder %s35, 1
      %p486 = scmp.ne.s32.totalorder %s481, %s483
      %p487 = scmp.eq.s32.totalorder %s35, 0
      %p488 = por %p486, %p487
      %p489 = scmp.ne.s32.totalorder %s481, %s483
      %p490 = scmp.eq.s32.totalorder %s40, 1
      %p491 = por %p489, %p490
      %p492 = scmp.ne.s32.totalorder %s483, %s484
      %p493 = scmp.eq.s32.totalorder %s40, 0
      %p494 = por %p492, %p493
      %p495 = scmp.ne.s32.totalorder %s483, %s484
      %p496 = scmp.eq.s32.totalorder %s41, 1
      %p497 = por %p495, %p496
      %p499 = scmp.ne.s32.totalorder %s484, %s498
      %p500 = scmp.eq.s32.totalorder %s41, 0
      %p501 = por %p499, %p500
      %p502 = scmp.le.s32.totalorder 1, %s35
      %p503 = scmp.lt.s32.totalorder %s35, 3
      %p504 = pnand %p502, %p503
      %p505 = pneg %p504
      // Predicated region
      $region9: #{_forward_impl.1} parent=5 // pred_check
        _
      $region10: #{_forward_impl.1} parent=5 // pred_check_branch
        %507 = sbr.rel (%p504) target = $region12
      $region11: #{_forward_impl.1} parent=5 // pred_region
        %s508 = ssub.s32 %s35, 1
        // Predicated region
        $region13: #{_forward_impl.1} parent=11 // pred_check
          %p509 = pneg %p56
        $region14: #{_forward_impl.1} parent=11 // pred_check_branch
          %511 = sbr.rel (%p509) target = $region16
        $region15: #{_forward_impl.1} parent=11 // pred_region
          _
        $region16: #{_forward_impl.1} parent=11 // pred_fallthru
          _
        // Predicated region
        $region17: #{_forward_impl.1} parent=11 // pred_check
          %p512 = pneg %p77
        $region18: #{_forward_impl.1} parent=11 // pred_check_branch
          %514 = sbr.rel (%p512) target = $region20
        $region19: #{_forward_impl.1} parent=11 // pred_region
          _
        $region20: #{_forward_impl.1} parent=11 // pred_fallthru
          _
        // Predicated region
        $region21: #{_forward_impl.1} parent=11 // pred_check
          %p515 = pneg %p98
        $region22: #{_forward_impl.1} parent=11 // pred_check_branch
          %517 = sbr.rel (%p515) target = $region24
        $region23: #{_forward_impl.1} parent=11 // pred_region
          _
        $region24: #{_forward_impl.1} parent=11 // pred_fallthru
          _
        // Predicated region
        $region25: #{_forward_impl.1} parent=11 // pred_check
          %p518 = pneg %p119
        $region26: #{_forward_impl.1} parent=11 // pred_check_branch
          %520 = sbr.rel (%p518) target = $region28
        $region27: #{_forward_impl.1} parent=11 // pred_region
          _
        $region28: #{_forward_impl.1} parent=11 // pred_fallthru
          _
        // Predicated region
        $region29: #{_forward_impl.1} parent=11 // pred_check
          %p521 = pneg %p452
        $region30: #{_forward_impl.1} parent=11 // pred_check_branch
          %523 = sbr.rel (%p521) target = $region32
        $region31: #{_forward_impl.1} parent=11 // pred_region
          _
        $region32: #{_forward_impl.1} parent=11 // pred_fallthru
          _
        // Predicated region
        $region33: #{_forward_impl.1} parent=11 // pred_check
          %p524 = pneg %p473
        $region34: #{_forward_impl.1} parent=11 // pred_check_branch
          %526 = sbr.rel (%p524) target = $region36
        $region35: #{_forward_impl.1} parent=11 // pred_region
          _
        $region36: #{_forward_impl.1} parent=11 // pred_fallthru
          _
      $region12: #{_forward_impl.1} parent=5 // pred_fallthru
        _
      %p527 = scmp.lt.s32.totalorder %s35, 2
      // Predicated region
      $region37: #{_forward_impl.1} parent=5 // pred_check
        %p528 = pneg %p527
      $region38: #{_forward_impl.1} parent=5 // pred_check_branch
        %530 = sbr.rel (%p528) target = $region40
      $region39: #{_forward_impl.1} parent=5 // pred_region
        // Predicated region
        $region41: #{_forward_impl.1} parent=39 // pred_check
          %p531 = pneg %p139
        $region42: #{_forward_impl.1} parent=39 // pred_check_branch
          %533 = sbr.rel (%p531) target = $region44
        $region43: #{_forward_impl.1} parent=39 // pred_region
          %s534 = sand.u32 %s129, 1
          %s535 = scalar_lea.sflag [#allocation5], %s534
          %s536 = sand.u32 %s129, 1
          %s537 = smul.addr %s536, 768
          %s538 = scalar_lea.vmem [#allocation4], %s537
          %s540 = ssub.s32 12288, 12288
          %541 = vsyncadd %s535, %s540
          %s542 = smul.addr %s35, 192
          %s543 = smul.addr %s542, 64
          %s544 = scalar_lea.hbm %s4, %s543
          %s545 = sshll.u32 %s538, 4
          %s546 = int_to_ptr.vmem [resolvable:$true] %s545
          %551 = dma.hbm_to_vmem [thread:$0]  %s544, 12288, %s546, %s535, 384, 384, 24
        $region44: #{_forward_impl.1} parent=39 // pred_fallthru
          _
        // Predicated region
        $region45: #{_forward_impl.1} parent=39 // pred_check
          %p552 = pneg %p165
        $region46: #{_forward_impl.1} parent=39 // pred_check_branch
          %554 = sbr.rel (%p552) target = $region48
        $region47: #{_forward_impl.1} parent=39 // pred_region
          %p555 = scmp.lt.s32.totalorder %s35, 1
          %s556 = scalar_select %p555, %s35, 1
          %s557 = smul.addr %s556, 6
          %s558 = scalar_lea.vmem %s5, %s557
        $region48: #{_forward_impl.1} parent=39 // pred_fallthru
          _
        // Predicated region
        $region49: #{_forward_impl.1} parent=39 // pred_check
          %p559 = pneg %p191
        $region50: #{_forward_impl.1} parent=39 // pred_check_branch
          %561 = sbr.rel (%p559) target = $region52
        $region51: #{_forward_impl.1} parent=39 // pred_region
          %s562 = sand.u32 %s35, 1
          %s563 = scalar_lea.sflag [#allocation7], %s562
          %s564 = sand.u32 %s181, 1
          %s565 = smul.addr %s564, 256
          %s566 = scalar_lea.vmem [#allocation6], %s565
          %s568 = ssub.s32 4096, 4096
          %569 = vsyncadd %s563, %s568
          %s570 = smul.addr %s35, 64
          %s571 = smul.addr %s570, 64
          %s572 = scalar_lea.hbm %s6, %s571
          %s573 = sshll.u32 %s566, 4
          %s574 = int_to_ptr.vmem [resolvable:$true] %s573
          %579 = dma.hbm_to_vmem [thread:$0]  %s572, 4096, %s574, %s563, 128, 128, 8
        $region52: #{_forward_impl.1} parent=39 // pred_fallthru
          _
        // Predicated region
        $region53: #{_forward_impl.1} parent=39 // pred_check
          %p580 = pneg %p217
        $region54: #{_forward_impl.1} parent=39 // pred_check_branch
          %582 = sbr.rel (%p580) target = $region56
        $region55: #{_forward_impl.1} parent=39 // pred_region
          %p583 = scmp.lt.s32.totalorder %s35, 1
          %s584 = scalar_select %p583, %s35, 1
          %s585 = smul.addr %s584, 2
          %s586 = scalar_lea.vmem %s7, %s585
        $region56: #{_forward_impl.1} parent=39 // pred_fallthru
          _
        // Predicated region
        $region57: #{_forward_impl.1} parent=39 // pred_check
          %p587 = pneg %p243
        $region58: #{_forward_impl.1} parent=39 // pred_check_branch
          %589 = sbr.rel (%p587) target = $region60
        $region59: #{_forward_impl.1} parent=39 // pred_region
          %p590 = scmp.lt.s32.totalorder %s35, 1
          %s591 = scalar_select %p590, %s35, 1
          %s592 = smul.addr %s591, 2
          %s593 = scalar_lea.vmem %s8, %s592
        $region60: #{_forward_impl.1} parent=39 // pred_fallthru
          _
        // Predicated region
        $region61: #{_forward_impl.1} parent=39 // pred_check
          %p594 = pneg %p269
        $region62: #{_forward_impl.1} parent=39 // pred_check_branch
          %596 = sbr.rel (%p594) target = $region64
        $region63: #{_forward_impl.1} parent=39 // pred_region
          %p597 = scmp.lt.s32.totalorder %s35, 1
          %s598 = scalar_select %p597, %s35, 1
          %s599 = smul.addr %s598, 2
          %s600 = scalar_lea.vmem %s9, %s599
        $region64: #{_forward_impl.1} parent=39 // pred_fallthru
          _
        // Predicated region
        $region65: #{_forward_impl.1} parent=39 // pred_check
          %p601 = pneg %p295
        $region66: #{_forward_impl.1} parent=39 // pred_check_branch
          %603 = sbr.rel (%p601) target = $region68
        $region67: #{_forward_impl.1} parent=39 // pred_region
          %s604 = sand.u32 %s35, 1
          %s605 = scalar_lea.sflag [#allocation7], %s604
          %s606 = sand.u32 %s285, 1
          %s607 = smul.addr %s606, 512
          %s608 = scalar_lea.vmem [#allocation8], %s607
          %s610 = ssub.s32 8192, 8192
          %611 = vsyncadd %s605, %s610
          %s612 = smul.addr %s35, 128
          %s613 = smul.addr %s612, 64
          %s614 = scalar_lea.hbm %s10, %s613
          %s615 = sshll.u32 %s608, 4
          %s616 = int_to_ptr.vmem [resolvable:$true] %s615
          %621 = dma.hbm_to_vmem [thread:$0]  %s614, 8192, %s616, %s605, 256, 256, 16
        $region68: #{_forward_impl.1} parent=39 // pred_fallthru
          _
        // Predicated region
        $region69: #{_forward_impl.1} parent=39 // pred_check
          %p622 = pneg %p321
        $region70: #{_forward_impl.1} parent=39 // pred_check_branch
          %624 = sbr.rel (%p622) target = $region72
        $region71: #{_forward_impl.1} parent=39 // pred_region
          %p625 = scmp.lt.s32.totalorder %s35, 1
          %s626 = scalar_select %p625, %s35, 1
          %s627 = smul.addr %s626, 4
          %s628 = scalar_lea.vmem %s11, %s627
        $region72: #{_forward_impl.1} parent=39 // pred_fallthru
          _
        // Predicated region
        $region73: #{_forward_impl.1} parent=39 // pred_check
          %p629 = pneg %p347
        $region74: #{_forward_impl.1} parent=39 // pred_check_branch
          %631 = sbr.rel (%p629) target = $region76
        $region75: #{_forward_impl.1} parent=39 // pred_region
          %s632 = sand.u32 %s337, 1
          %s633 = scalar_lea.sflag [#allocation10], %s632
          %s634 = sand.u32 %s337, 1
          %s635 = smul.addr %s634, 512
          %s636 = scalar_lea.vmem [#allocation9], %s635
          %s638 = ssub.s32 8192, 8192
          %639 = vsyncadd %s633, %s638
          %s640 = smul.addr %s35, 128
          %s641 = smul.addr %s640, 64
          %s642 = scalar_lea.hbm %s12, %s641
          %s643 = sshll.u32 %s636, 4
          %s644 = int_to_ptr.vmem [resolvable:$true] %s643
          %649 = dma.hbm_to_vmem [thread:$0]  %s642, 8192, %s644, %s633, 128, 128, 8
        $region76: #{_forward_impl.1} parent=39 // pred_fallthru
          _
        // Predicated region
        $region77: #{_forward_impl.1} parent=39 // pred_check
          %p650 = pneg %p373
        $region78: #{_forward_impl.1} parent=39 // pred_check_branch
          %652 = sbr.rel (%p650) target = $region80
        $region79: #{_forward_impl.1} parent=39 // pred_region
          %p653 = scmp.lt.s32.totalorder %s35, 1
          %s654 = scalar_select %p653, %s35, 1
          %s655 = smul.addr %s654, 2
          %s656 = scalar_lea.vmem %s13, %s655
        $region80: #{_forward_impl.1} parent=39 // pred_fallthru
          _
        // Predicated region
        $region81: #{_forward_impl.1} parent=39 // pred_check
          %p657 = pneg %p399
        $region82: #{_forward_impl.1} parent=39 // pred_check_branch
          %659 = sbr.rel (%p657) target = $region84
        $region83: #{_forward_impl.1} parent=39 // pred_region
          %p660 = scmp.lt.s32.totalorder %s35, 1
          %s661 = scalar_select %p660, %s35, 1
          %s662 = smul.addr %s661, 2
          %s663 = scalar_lea.vmem %s14, %s662
        $region84: #{_forward_impl.1} parent=39 // pred_fallthru
          _
        // Predicated region
        $region85: #{_forward_impl.1} parent=39 // pred_check
          %p664 = pneg %p425
        $region86: #{_forward_impl.1} parent=39 // pred_check_branch
          %666 = sbr.rel (%p664) target = $region88
        $region87: #{_forward_impl.1} parent=39 // pred_region
          %p667 = scmp.lt.s32.totalorder %s35, 1
          %s668 = scalar_select %p667, %s35, 1
          %s669 = smul.addr %s668, 2
          %s670 = scalar_lea.vmem %s15, %s669
        $region88: #{_forward_impl.1} parent=39 // pred_fallthru
          _
      $region40: #{_forward_impl.1} parent=5 // pred_fallthru
        _
      %p671 = scmp.le.s32.totalorder 1, %s35
      %p672 = scmp.lt.s32.totalorder %s35, 3
      %p673 = pnand %p671, %p672
      %p674 = pneg %p673
      // Predicated region
      $region89: #{_forward_impl.1} parent=5 // pred_check
        _
      $region90: #{_forward_impl.1} parent=5 // pred_check_branch
        %676 = sbr.rel (%p673) target = $region92
      $region91: #{_forward_impl.1} parent=5 // pred_region
        %s677 = ssub.s32 %s35, 1
        %s678 = sand.u32 %s132, 1
        %s679 = scalar_lea.sflag [#allocation5], %s678
        %s680 = sand.u32 %s132, 1
        %s681 = smul.addr %s680, 768
        %s682 = scalar_lea.vmem [#allocation4], %s681
        // Predicated region
        $region93: #{_forward_impl.1} parent=91 // pred_check
          %p683 = pneg %p145
        $region94: #{_forward_impl.1} parent=91 // pred_check_branch
          %685 = sbr.rel (%p683) target = $region96
        $region95: #{_forward_impl.1} parent=91 // pred_region
          %686 = dma.done %s679, 12288
        $region96: #{_forward_impl.1} parent=91 // pred_fallthru
          _
        %s687 = sand.u32 %s40, 1
        %s688 = scalar_lea.sflag [#allocation7], %s687
        %s689 = sand.u32 %s184, 1
        %s690 = smul.addr %s689, 256
        %s691 = scalar_lea.vmem [#allocation6], %s690
        // Predicated region
        $region97: #{_forward_impl.1} parent=91 // pred_check
          %p692 = pneg %p197
        $region98: #{_forward_impl.1} parent=91 // pred_check_branch
          %694 = sbr.rel (%p692) target = $region100
        $region99: #{_forward_impl.1} parent=91 // pred_region
          %695 = dma.done %s688, 4096
        $region100: #{_forward_impl.1} parent=91 // pred_fallthru
          _
        %s696 = sand.u32 %s40, 1
        %s697 = scalar_lea.sflag [#allocation7], %s696
        %s698 = sand.u32 %s288, 1
        %s699 = smul.addr %s698, 512
        %s700 = scalar_lea.vmem [#allocation8], %s699
        // Predicated region
        $region101: #{_forward_impl.1} parent=91 // pred_check
          %p701 = pneg %p301
        $region102: #{_forward_impl.1} parent=91 // pred_check_branch
          %703 = sbr.rel (%p701) target = $region104
        $region103: #{_forward_impl.1} parent=91 // pred_region
          %704 = dma.done %s697, 8192
        $region104: #{_forward_impl.1} parent=91 // pred_fallthru
          _
        %s705 = sand.u32 %s340, 1
        %s706 = scalar_lea.sflag [#allocation10], %s705
        %s707 = sand.u32 %s340, 1
        %s708 = smul.addr %s707, 512
        %s709 = scalar_lea.vmem [#allocation9], %s708
        // Predicated region
        $region105: #{_forward_impl.1} parent=91 // pred_check
          %p710 = pneg %p353
        $region106: #{_forward_impl.1} parent=91 // pred_check_branch
          %712 = sbr.rel (%p710) target = $region108
        $region107: #{_forward_impl.1} parent=91 // pred_region
          %713 = dma.done %s706, 8192
        $region108: #{_forward_impl.1} parent=91 // pred_fallthru
          _
        %p714 = pneg %p56
        %p715 = pneg %p53
        %p716 = pneg %p77
        %p717 = pneg %p74
        %p718 = pneg %p98
        %p719 = pneg %p95
        %p720 = pneg %p119
        %p721 = pneg %p116
        %s722 = sand.u32 %s132, 1
        %s723 = scalar_lea.sflag [#allocation5], %s722
        %s724 = sand.u32 %s132, 1
        %s725 = smul.addr %s724, 768
        %s726 = scalar_lea.vmem [#allocation4], %s725
        %p727 = pneg %p145
        %p728 = pneg %p142
        %p729 = scmp.lt.s32.totalorder %s40, 1
        %s730 = scalar_select %p729, %s40, 1
        %s731 = smul.addr %s730, 6
        %s732 = scalar_lea.vmem %s5, %s731
        %p733 = pneg %p171
        %p734 = pneg %p168
        %s735 = sand.u32 %s40, 1
        %s736 = scalar_lea.sflag [#allocation7], %s735
        %s737 = sand.u32 %s184, 1
        %s738 = smul.addr %s737, 256
        %s739 = scalar_lea.vmem [#allocation6], %s738
        %p740 = pneg %p197
        %p741 = pneg %p194
        %p742 = scmp.lt.s32.totalorder %s40, 1
        %s743 = scalar_select %p742, %s40, 1
        %s744 = smul.addr %s743, 2
        %s745 = scalar_lea.vmem %s7, %s744
        %p746 = pneg %p223
        %p747 = pneg %p220
        %p748 = scmp.lt.s32.totalorder %s40, 1
        %s749 = scalar_select %p748, %s40, 1
        %s750 = smul.addr %s749, 2
        %s751 = scalar_lea.vmem %s8, %s750
        %p752 = pneg %p249
        %p753 = pneg %p246
        %p754 = scmp.lt.s32.totalorder %s40, 1
        %s755 = scalar_select %p754, %s40, 1
        %s756 = smul.addr %s755, 2
        %s757 = scalar_lea.vmem %s9, %s756
        %p758 = pneg %p275
        %p759 = pneg %p272
        %s760 = sand.u32 %s40, 1
        %s761 = scalar_lea.sflag [#allocation7], %s760
        %s762 = sand.u32 %s288, 1
        %s763 = smul.addr %s762, 512
        %s764 = scalar_lea.vmem [#allocation8], %s763
        %p765 = pneg %p301
        %p766 = pneg %p298
        %p767 = scmp.lt.s32.totalorder %s40, 1
        %s768 = scalar_select %p767, %s40, 1
        %s769 = smul.addr %s768, 4
        %s770 = scalar_lea.vmem %s11, %s769
        %p771 = pneg %p327
        %p772 = pneg %p324
        %s773 = sand.u32 %s340, 1
        %s774 = scalar_lea.sflag [#allocation10], %s773
        %s775 = sand.u32 %s340, 1
        %s776 = smul.addr %s775, 512
        %s777 = scalar_lea.vmem [#allocation9], %s776
        %p778 = pneg %p353
        %p779 = pneg %p350
        %p780 = scmp.lt.s32.totalorder %s40, 1
        %s781 = scalar_select %p780, %s40, 1
        %s782 = smul.addr %s781, 2
        %s783 = scalar_lea.vmem %s13, %s782
        %p784 = pneg %p379
        %p785 = pneg %p376
        %p786 = scmp.lt.s32.totalorder %s40, 1
        %s787 = scalar_select %p786, %s40, 1
        %s788 = smul.addr %s787, 2
        %s789 = scalar_lea.vmem %s14, %s788
        %p790 = pneg %p405
        %p791 = pneg %p402
        %p792 = scmp.lt.s32.totalorder %s40, 1
        %s793 = scalar_select %p792, %s40, 1
        %s794 = smul.addr %s793, 2
        %s795 = scalar_lea.vmem %s15, %s794
        %p796 = pneg %p431
        %p797 = pneg %p428
        %p798 = pneg %p452
        %p799 = pneg %p449
        %p800 = pneg %p473
        %p801 = pneg %p470
        %p802 = pneg %p494
        %p803 = pneg %p491
        %p804 = scmp.lt.s32.totalorder %s40, 1
        %s805 = scalar_select %p804, %s40, 1
        %s806 = smul.addr %s805, 6
        %s807 = scalar_lea.vmem %s5, %s806
        %p808 = scmp.lt.s32.totalorder %s40, 1
        %s809 = scalar_select %p808, %s40, 1
        %s810 = smul.addr %s809, 2
        %s811 = scalar_lea.vmem %s7, %s810
        %p812 = scmp.lt.s32.totalorder %s40, 1
        %s813 = scalar_select %p812, %s40, 1
        %s814 = smul.addr %s813, 2
        %s815 = scalar_lea.vmem %s8, %s814
        %p816 = scmp.lt.s32.totalorder %s40, 1
        %s817 = scalar_select %p816, %s40, 1
        %s818 = smul.addr %s817, 2
        %s819 = scalar_lea.vmem %s9, %s818
        %p820 = scmp.lt.s32.totalorder %s40, 1
        %s821 = scalar_select %p820, %s40, 1
        %s822 = smul.addr %s821, 4
        %s823 = scalar_lea.vmem %s11, %s822
        %p824 = scmp.lt.s32.totalorder %s40, 1
        %s825 = scalar_select %p824, %s40, 1
        %s826 = smul.addr %s825, 2
        %s827 = scalar_lea.vmem %s13, %s826
        %p828 = scmp.lt.s32.totalorder %s40, 1
        %s829 = scalar_select %p828, %s40, 1
        %s830 = smul.addr %s829, 2
        %s831 = scalar_lea.vmem %s14, %s830
        %p832 = scmp.lt.s32.totalorder %s40, 1
        %s833 = scalar_select %p832, %s40, 1
        %s834 = smul.addr %s833, 2
        %s835 = scalar_lea.vmem %s15, %s834
        %p837 = scmp.eq.s32.totalorder %s40, 0
        // Predicated region
        $region109: #{_forward_impl.1} parent=91 // pred_check
          %p838 = pneg %p837
        $region110: #{_forward_impl.1} parent=91 // pred_check_branch
          %840 = sbr.rel (%p838) target = $region112
        $region111: #{_forward_impl.1} parent=91 // pred_region
          %v841 = vld [vmem:[%s0] sm:$0xff]
          %v842 = vld [vmem:[%s0 + $0x8] sm:$0xff]
          %v843 = vld [vmem:[%s0 + $0x10] sm:$0xff]
          %v844 = vld [vmem:[%s0 + $0x18] sm:$0xff]
          %v845 = vld [vmem:[%s2] sm:$0x3]
          %v846 = vld [vmem:[%s3] sm:$0x3]
          %v847 = vadd.f32 %v841, %v842
          %848 = vadd.xlane.f32.xlu0 %v847
          %v849 = vpop.xlane.xlu0 %848
          %v850 = vadd.f32 %v843, %v844
          %851 = vadd.xlane.f32.xlu0 %v850
          %v852 = vpop.xlane.xlu0 %851
          %v853 = vrcp.pop 256.0
          %v854 = vmul.f32 %v849, %v853
          %v855 = vmul.f32 %v852, %v853
          %v856 = vsub.f32 %v841, %v854
          %v857 = vsub.f32 %v842, %v854
          %v858 = vsub.f32 %v843, %v855
          %v859 = vsub.f32 %v844, %v855
          %v860 = vmul.f32 %v856, %v856
          %v861 = vmul.f32 %v857, %v857
          %v862 = vmul.f32 %v858, %v858
          %v863 = vmul.f32 %v859, %v859
          %v864 = vadd.f32 %v860, %v861
          %865 = vadd.xlane.f32.xlu0 %v864
          %v866 = vpop.xlane.xlu0 %865
          %v867 = vadd.f32 %v862, %v863
          %868 = vadd.xlane.f32.xlu0 %v867
          %v869 = vpop.xlane.xlu0 %868
          %v870 = vmul.f32 %v866, %v853
          %v871 = vmul.f32 %v869, %v853
          %v872 = vadd.f32 %v870, 1e-12
          %v873 = vadd.f32 %v871, 1e-12
          %v874 = vrsqrt.pop %v872
          %v875 = vrsqrt.pop %v873
          %v876 = vmul.f32 %v856, %v874
          %v877 = vmul.f32 %v857, %v874
          %v878 = vmul.f32 %v858, %v875
          %v879 = vmul.f32 %v859, %v875
          %v881 = vlaneseq
          %v882 = vshrl.u32 %v881, 7
          %v883 = vsub.s32 0, %v882
          %v884 = vrot.slane %v845, %v883
          %v885 = vlaneseq
          %v886 = vshrl.u32 %v885, 7
          %v887 = vsub.s32 1, %v886
          %v888 = vrot.slane %v845, %v887
          %v891 = vmul.f32 %v876, %v884
          %v892 = vmul.f32 %v877, %v888
          %v893 = vmul.f32 %v878, %v884
          %v894 = vmul.f32 %v879, %v888
          %v896 = vlaneseq
          %v897 = vshrl.u32 %v896, 7
          %v898 = vsub.s32 0, %v897
          %v899 = vrot.slane %v846, %v898
          %v900 = vlaneseq
          %v901 = vshrl.u32 %v900, 7
          %v902 = vsub.s32 1, %v901
          %v903 = vrot.slane %v846, %v902
          %v906 = vadd.f32 %v891, %v899
          %v907 = vadd.f32 %v892, %v903
          %v908 = vadd.f32 %v893, %v899
          %v909 = vadd.f32 %v894, %v903
          %910 = vst [vmem:[#allocation2] sm:$0xff] %v906
          %911 = vst [vmem:[#allocation2 + $0x8] sm:$0xff] %v907
          %912 = vst [vmem:[#allocation2 + $0x10] sm:$0xff] %v908
          %913 = vst [vmem:[#allocation2 + $0x18] sm:$0xff] %v909
        $region112: #{_forward_impl.1} parent=91 // pred_fallthru
          _
        %v914 = vld [vmem:[#allocation2] sm:$0xff]
        %v915 = vld [vmem:[#allocation2 + $0x8] sm:$0xff]
        %v916 = vld [vmem:[#allocation2 + $0x10] sm:$0xff]
        %v917 = vld [vmem:[#allocation2 + $0x18] sm:$0xff]
        %v918 = vpack.c.bf16 %v916, %v914
        %v919 = vpack.c.bf16 %v917, %v915
        %v920 = vld [vmem:[%s682] sm:$0xff]
        %v921 = vld [vmem:[%s682 + $0x8] sm:$0xff]
        %v922 = vld [vmem:[%s682 + $0x10] sm:$0xff]
        %v923 = vld [vmem:[%s682 + $0x18] sm:$0xff]
        %v924 = vld [vmem:[%s682 + $0x20] sm:$0xff]
        %v925 = vld [vmem:[%s682 + $0x28] sm:$0xff]
        %v926 = vld [vmem:[%s682 + $0x30] sm:$0xff]
        %v927 = vld [vmem:[%s682 + $0x38] sm:$0xff]
        %v928 = vld [vmem:[%s682 + $0x40] sm:$0xff]
        %v929 = vld [vmem:[%s682 + $0x48] sm:$0xff]
        %v930 = vld [vmem:[%s682 + $0x50] sm:$0xff]
        %v931 = vld [vmem:[%s682 + $0x58] sm:$0xff]
        %v932 = vld [vmem:[%s682 + $0x60] sm:$0xff]
        %v933 = vld [vmem:[%s682 + $0x68] sm:$0xff]
        %v934 = vld [vmem:[%s682 + $0x70] sm:$0xff]
        %v935 = vld [vmem:[%s682 + $0x78] sm:$0xff]
        %v936 = vld [vmem:[%s682 + $0x80] sm:$0xff]
        %v937 = vld [vmem:[%s682 + $0x88] sm:$0xff]
        %v938 = vld [vmem:[%s682 + $0x90] sm:$0xff]
        %v939 = vld [vmem:[%s682 + $0x98] sm:$0xff]
        %v940 = vld [vmem:[%s682 + $0xa0] sm:$0xff]
        %v941 = vld [vmem:[%s682 + $0xa8] sm:$0xff]
        %v942 = vld [vmem:[%s682 + $0xb0] sm:$0xff]
        %v943 = vld [vmem:[%s682 + $0xb8] sm:$0xff]
        %v944 = vld [vmem:[%s682 + $0xc0] sm:$0xff]
        %v945 = vld [vmem:[%s682 + $0xc8] sm:$0xff]
        %v946 = vld [vmem:[%s682 + $0xd0] sm:$0xff]
        %v947 = vld [vmem:[%s682 + $0xd8] sm:$0xff]
        %v948 = vld [vmem:[%s682 + $0xe0] sm:$0xff]
        %v949 = vld [vmem:[%s682 + $0xe8] sm:$0xff]
        %v950 = vld [vmem:[%s682 + $0xf0] sm:$0xff]
        %v951 = vld [vmem:[%s682 + $0xf8] sm:$0xff]
        %v952 = vld [vmem:[%s682 + $0x100] sm:$0xff]
        %v953 = vld [vmem:[%s682 + $0x108] sm:$0xff]
        %v954 = vld [vmem:[%s682 + $0x110] sm:$0xff]
        %v955 = vld [vmem:[%s682 + $0x118] sm:$0xff]
        %v956 = vld [vmem:[%s682 + $0x120] sm:$0xff]
        %v957 = vld [vmem:[%s682 + $0x128] sm:$0xff]
        %v958 = vld [vmem:[%s682 + $0x130] sm:$0xff]
        %v959 = vld [vmem:[%s682 + $0x138] sm:$0xff]
        %v960 = vld [vmem:[%s682 + $0x140] sm:$0xff]
        %v961 = vld [vmem:[%s682 + $0x148] sm:$0xff]
        %v962 = vld [vmem:[%s682 + $0x150] sm:$0xff]
        %v963 = vld [vmem:[%s682 + $0x158] sm:$0xff]
        %v964 = vld [vmem:[%s682 + $0x160] sm:$0xff]
        %v965 = vld [vmem:[%s682 + $0x168] sm:$0xff]
        %v966 = vld [vmem:[%s682 + $0x170] sm:$0xff]
        %v967 = vld [vmem:[%s682 + $0x178] sm:$0xff]
        %v968 = vld [vmem:[%s682 + $0x180] sm:$0xff]
        %v969 = vld [vmem:[%s682 + $0x188] sm:$0xff]
        %v970 = vld [vmem:[%s682 + $0x190] sm:$0xff]
        %v971 = vld [vmem:[%s682 + $0x198] sm:$0xff]
        %v972 = vld [vmem:[%s682 + $0x1a0] sm:$0xff]
        %v973 = vld [vmem:[%s682 + $0x1a8] sm:$0xff]
        %v974 = vld [vmem:[%s682 + $0x1b0] sm:$0xff]
        %v975 = vld [vmem:[%s682 + $0x1b8] sm:$0xff]
        %v976 = vld [vmem:[%s682 + $0x1c0] sm:$0xff]
        %v977 = vld [vmem:[%s682 + $0x1c8] sm:$0xff]
        %v978 = vld [vmem:[%s682 + $0x1d0] sm:$0xff]
        %v979 = vld [vmem:[%s682 + $0x1d8] sm:$0xff]
        %v980 = vld [vmem:[%s682 + $0x1e0] sm:$0xff]
        %v981 = vld [vmem:[%s682 + $0x1e8] sm:$0xff]
        %v982 = vld [vmem:[%s682 + $0x1f0] sm:$0xff]
        %v983 = vld [vmem:[%s682 + $0x1f8] sm:$0xff]
        %v984 = vld [vmem:[%s682 + $0x200] sm:$0xff]
        %v985 = vld [vmem:[%s682 + $0x208] sm:$0xff]
        %v986 = vld [vmem:[%s682 + $0x210] sm:$0xff]
        %v987 = vld [vmem:[%s682 + $0x218] sm:$0xff]
        %v988 = vld [vmem:[%s682 + $0x220] sm:$0xff]
        %v989 = vld [vmem:[%s682 + $0x228] sm:$0xff]
        %v990 = vld [vmem:[%s682 + $0x230] sm:$0xff]
        %v991 = vld [vmem:[%s682 + $0x238] sm:$0xff]
        %v992 = vld [vmem:[%s682 + $0x240] sm:$0xff]
        %v993 = vld [vmem:[%s682 + $0x248] sm:$0xff]
        %v994 = vld [vmem:[%s682 + $0x250] sm:$0xff]
        %v995 = vld [vmem:[%s682 + $0x258] sm:$0xff]
        %v996 = vld [vmem:[%s682 + $0x260] sm:$0xff]
        %v997 = vld [vmem:[%s682 + $0x268] sm:$0xff]
        %v998 = vld [vmem:[%s682 + $0x270] sm:$0xff]
        %v999 = vld [vmem:[%s682 + $0x278] sm:$0xff]
        %v1000 = vld [vmem:[%s682 + $0x280] sm:$0xff]
        %v1001 = vld [vmem:[%s682 + $0x288] sm:$0xff]
        %v1002 = vld [vmem:[%s682 + $0x290] sm:$0xff]
        %v1003 = vld [vmem:[%s682 + $0x298] sm:$0xff]
        %v1004 = vld [vmem:[%s682 + $0x2a0] sm:$0xff]
        %v1005 = vld [vmem:[%s682 + $0x2a8] sm:$0xff]
        %v1006 = vld [vmem:[%s682 + $0x2b0] sm:$0xff]
        %v1007 = vld [vmem:[%s682 + $0x2b8] sm:$0xff]
        %v1008 = vld [vmem:[%s682 + $0x2c0] sm:$0xff]
        %v1009 = vld [vmem:[%s682 + $0x2c8] sm:$0xff]
        %v1010 = vld [vmem:[%s682 + $0x2d0] sm:$0xff]
        %v1011 = vld [vmem:[%s682 + $0x2d8] sm:$0xff]
        %v1012 = vld [vmem:[%s682 + $0x2e0] sm:$0xff]
        %v1013 = vld [vmem:[%s682 + $0x2e8] sm:$0xff]
        %v1014 = vld [vmem:[%s682 + $0x2f0] sm:$0xff]
        %v1015 = vld [vmem:[%s682 + $0x2f8] sm:$0xff]
        %v1016 = vld [vmem:[%s807] sm:$0x3f]
        %v1018 = vlaneseq
        %v1019 = vshrl.u32 %v1018, 7
        %v1020 = vsub.s32 0, %v1019
        %v1021 = vrot.slane %v1016, %v1020
        %v1022 = vlaneseq
        %v1023 = vshrl.u32 %v1022, 7
        %v1024 = vsub.s32 1, %v1023
        %v1025 = vrot.slane %v1016, %v1024
        %v1026 = vlaneseq
        %v1027 = vshrl.u32 %v1026, 7
        %v1028 = vsub.s32 2, %v1027
        %v1029 = vrot.slane %v1016, %v1028
        %v1030 = vlaneseq
        %v1031 = vshrl.u32 %v1030, 7
        %v1032 = vsub.s32 3, %v1031
        %v1033 = vrot.slane %v1016, %v1032
        %v1034 = vlaneseq
        %v1035 = vshrl.u32 %v1034, 7
        %v1036 = vsub.s32 4, %v1035
        %v1037 = vrot.slane %v1016, %v1036
        %v1038 = vlaneseq
        %v1039 = vshrl.u32 %v1038, 7
        %v1040 = vsub.s32 5, %v1039
        %v1041 = vrot.slane %v1016, %v1040
        %v1144 = vunpack.c.l.b16 %v920
        %v1145 = vunpack.c.h.b16 %v920
        %v1146 = vunpack.c.l.b16 %v921
        %v1147 = vunpack.c.h.b16 %v921
        %v1148 = vunpack.c.l.b16 %v922
        %v1149 = vunpack.c.h.b16 %v922
        %v1150 = vunpack.c.l.b16 %v923
        %v1151 = vunpack.c.h.b16 %v923
        %v1152 = vunpack.c.l.b16 %v924
        %v1153 = vunpack.c.h.b16 %v924
        %v1154 = vunpack.c.l.b16 %v925
        %v1155 = vunpack.c.h.b16 %v925
        %v1156 = vunpack.c.l.b16 %v926
        %v1157 = vunpack.c.h.b16 %v926
        %v1158 = vunpack.c.l.b16 %v927
        %v1159 = vunpack.c.h.b16 %v927
        %v1160 = vunpack.c.l.b16 %v928
        %v1161 = vunpack.c.h.b16 %v928
        %v1162 = vunpack.c.l.b16 %v929
        %v1163 = vunpack.c.h.b16 %v929
        %v1164 = vunpack.c.l.b16 %v930
        %v1165 = vunpack.c.h.b16 %v930
        %v1166 = vunpack.c.l.b16 %v931
        %v1167 = vunpack.c.h.b16 %v931
        %v1168 = vunpack.c.l.b16 %v932
        %v1169 = vunpack.c.h.b16 %v932
        %v1170 = vunpack.c.l.b16 %v933
        %v1171 = vunpack.c.h.b16 %v933
        %v1172 = vunpack.c.l.b16 %v934
        %v1173 = vunpack.c.h.b16 %v934
        %v1174 = vunpack.c.l.b16 %v935
        %v1175 = vunpack.c.h.b16 %v935
        %v1176 = vunpack.c.l.b16 %v936
        %v1177 = vunpack.c.h.b16 %v936
        %v1178 = vunpack.c.l.b16 %v937
        %v1179 = vunpack.c.h.b16 %v937
        %v1180 = vunpack.c.l.b16 %v938
        %v1181 = vunpack.c.h.b16 %v938
        %v1182 = vunpack.c.l.b16 %v939
        %v1183 = vunpack.c.h.b16 %v939
        %v1184 = vunpack.c.l.b16 %v940
        %v1185 = vunpack.c.h.b16 %v940
        %v1186 = vunpack.c.l.b16 %v941
        %v1187 = vunpack.c.h.b16 %v941
        %v1188 = vunpack.c.l.b16 %v942
        %v1189 = vunpack.c.h.b16 %v942
        %v1190 = vunpack.c.l.b16 %v943
        %v1191 = vunpack.c.h.b16 %v943
        %v1192 = vunpack.c.l.b16 %v944
        %v1193 = vunpack.c.h.b16 %v944
        %v1194 = vunpack.c.l.b16 %v945
        %v1195 = vunpack.c.h.b16 %v945
        %v1196 = vunpack.c.l.b16 %v946
        %v1197 = vunpack.c.h.b16 %v946
        %v1198 = vunpack.c.l.b16 %v947
        %v1199 = vunpack.c.h.b16 %v947
        %v1200 = vunpack.c.l.b16 %v948
        %v1201 = vunpack.c.h.b16 %v948
        %v1202 = vunpack.c.l.b16 %v949
        %v1203 = vunpack.c.h.b16 %v949
        %v1204 = vunpack.c.l.b16 %v950
        %v1205 = vunpack.c.h.b16 %v950
        %v1206 = vunpack.c.l.b16 %v951
        %v1207 = vunpack.c.h.b16 %v951
        %v1208 = vunpack.c.l.b16 %v952
        %v1209 = vunpack.c.h.b16 %v952
        %v1210 = vunpack.c.l.b16 %v953
        %v1211 = vunpack.c.h.b16 %v953
        %v1212 = vunpack.c.l.b16 %v954
        %v1213 = vunpack.c.h.b16 %v954
        %v1214 = vunpack.c.l.b16 %v955
        %v1215 = vunpack.c.h.b16 %v955
        %v1216 = vunpack.c.l.b16 %v956
        %v1217 = vunpack.c.h.b16 %v956
        %v1218 = vunpack.c.l.b16 %v957
        %v1219 = vunpack.c.h.b16 %v957
        %v1220 = vunpack.c.l.b16 %v958
        %v1221 = vunpack.c.h.b16 %v958
        %v1222 = vunpack.c.l.b16 %v959
        %v1223 = vunpack.c.h.b16 %v959
        %v1224 = vunpack.c.l.b16 %v960
        %v1225 = vunpack.c.h.b16 %v960
        %v1226 = vunpack.c.l.b16 %v961
        %v1227 = vunpack.c.h.b16 %v961
        %v1228 = vunpack.c.l.b16 %v962
        %v1229 = vunpack.c.h.b16 %v962
        %v1230 = vunpack.c.l.b16 %v963
        %v1231 = vunpack.c.h.b16 %v963
        %v1232 = vunpack.c.l.b16 %v964
        %v1233 = vunpack.c.h.b16 %v964
        %v1234 = vunpack.c.l.b16 %v965
        %v1235 = vunpack.c.h.b16 %v965
        %v1236 = vunpack.c.l.b16 %v966
        %v1237 = vunpack.c.h.b16 %v966
        %v1238 = vunpack.c.l.b16 %v967
        %v1239 = vunpack.c.h.b16 %v967
        %v1240 = vunpack.c.l.b16 %v968
        %v1241 = vunpack.c.h.b16 %v968
        %v1242 = vunpack.c.l.b16 %v969
        %v1243 = vunpack.c.h.b16 %v969
        %v1244 = vunpack.c.l.b16 %v970
        %v1245 = vunpack.c.h.b16 %v970
        %v1246 = vunpack.c.l.b16 %v971
        %v1247 = vunpack.c.h.b16 %v971
        %v1248 = vunpack.c.l.b16 %v972
        %v1249 = vunpack.c.h.b16 %v972
        %v1250 = vunpack.c.l.b16 %v973
        %v1251 = vunpack.c.h.b16 %v973
        %v1252 = vunpack.c.l.b16 %v974
        %v1253 = vunpack.c.h.b16 %v974
        %v1254 = vunpack.c.l.b16 %v975
        %v1255 = vunpack.c.h.b16 %v975
        %v1256 = vunpack.c.l.b16 %v976
        %v1257 = vunpack.c.h.b16 %v976
        %v1258 = vunpack.c.l.b16 %v977
        %v1259 = vunpack.c.h.b16 %v977
        %v1260 = vunpack.c.l.b16 %v978
        %v1261 = vunpack.c.h.b16 %v978
        %v1262 = vunpack.c.l.b16 %v979
        %v1263 = vunpack.c.h.b16 %v979
        %v1264 = vunpack.c.l.b16 %v980
        %v1265 = vunpack.c.h.b16 %v980
        %v1266 = vunpack.c.l.b16 %v981
        %v1267 = vunpack.c.h.b16 %v981
        %v1268 = vunpack.c.l.b16 %v982
        %v1269 = vunpack.c.h.b16 %v982
        %v1270 = vunpack.c.l.b16 %v983
        %v1271 = vunpack.c.h.b16 %v983
        %v1272 = vunpack.c.l.b16 %v984
        %v1273 = vunpack.c.h.b16 %v984
        %v1274 = vunpack.c.l.b16 %v985
        %v1275 = vunpack.c.h.b16 %v985
        %v1276 = vunpack.c.l.b16 %v986
        %v1277 = vunpack.c.h.b16 %v986
        %v1278 = vunpack.c.l.b16 %v987
        %v1279 = vunpack.c.h.b16 %v987
        %v1280 = vunpack.c.l.b16 %v988
        %v1281 = vunpack.c.h.b16 %v988
        %v1282 = vunpack.c.l.b16 %v989
        %v1283 = vunpack.c.h.b16 %v989
        %v1284 = vunpack.c.l.b16 %v990
        %v1285 = vunpack.c.h.b16 %v990
        %v1286 = vunpack.c.l.b16 %v991
        %v1287 = vunpack.c.h.b16 %v991
        %v1288 = vunpack.c.l.b16 %v992
        %v1289 = vunpack.c.h.b16 %v992
        %v1290 = vunpack.c.l.b16 %v993
        %v1291 = vunpack.c.h.b16 %v993
        %v1292 = vunpack.c.l.b16 %v994
        %v1293 = vunpack.c.h.b16 %v994
        %v1294 = vunpack.c.l.b16 %v995
        %v1295 = vunpack.c.h.b16 %v995
        %v1296 = vunpack.c.l.b16 %v996
        %v1297 = vunpack.c.h.b16 %v996
        %v1298 = vunpack.c.l.b16 %v997
        %v1299 = vunpack.c.h.b16 %v997
        %v1300 = vunpack.c.l.b16 %v998
        %v1301 = vunpack.c.h.b16 %v998
        %v1302 = vunpack.c.l.b16 %v999
        %v1303 = vunpack.c.h.b16 %v999
        %v1304 = vunpack.c.l.b16 %v1000
        %v1305 = vunpack.c.h.b16 %v1000
        %v1306 = vunpack.c.l.b16 %v1001
        %v1307 = vunpack.c.h.b16 %v1001
        %v1308 = vunpack.c.l.b16 %v1002
        %v1309 = vunpack.c.h.b16 %v1002
        %v1310 = vunpack.c.l.b16 %v1003
        %v1311 = vunpack.c.h.b16 %v1003
        %v1312 = vunpack.c.l.b16 %v1004
        %v1313 = vunpack.c.h.b16 %v1004
        %v1314 = vunpack.c.l.b16 %v1005
        %v1315 = vunpack.c.h.b16 %v1005
        %v1316 = vunpack.c.l.b16 %v1006
        %v1317 = vunpack.c.h.b16 %v1006
        %v1318 = vunpack.c.l.b16 %v1007
        %v1319 = vunpack.c.h.b16 %v1007
        %v1320 = vunpack.c.l.b16 %v1008
        %v1321 = vunpack.c.h.b16 %v1008
        %v1322 = vunpack.c.l.b16 %v1009
        %v1323 = vunpack.c.h.b16 %v1009
        %v1324 = vunpack.c.l.b16 %v1010
        %v1325 = vunpack.c.h.b16 %v1010
        %v1326 = vunpack.c.l.b16 %v1011
        %v1327 = vunpack.c.h.b16 %v1011
        %v1328 = vunpack.c.l.b16 %v1012
        %v1329 = vunpack.c.h.b16 %v1012
        %v1330 = vunpack.c.l.b16 %v1013
        %v1331 = vunpack.c.h.b16 %v1013
        %v1332 = vunpack.c.l.b16 %v1014
        %v1333 = vunpack.c.h.b16 %v1014
        %v1334 = vunpack.c.l.b16 %v1015
        %v1335 = vunpack.c.h.b16 %v1015
        %v1336 = vpack.c.b16 %v1150, %v1144
        %v1337 = vpack.c.b16 %v1151, %v1145
        %v1338 = vpack.c.b16 %v1152, %v1146
        %v1339 = vpack.c.b16 %v1153, %v1147
        %v1340 = vpack.c.b16 %v1154, %v1148
        %v1341 = vpack.c.b16 %v1155, %v1149
        %v1342 = vpack.c.b16 %v1162, %v1156
        %v1343 = vpack.c.b16 %v1163, %v1157
        %v1344 = vpack.c.b16 %v1164, %v1158
        %v1345 = vpack.c.b16 %v1165, %v1159
        %v1346 = vpack.c.b16 %v1166, %v1160
        %v1347 = vpack.c.b16 %v1167, %v1161
        %v1348 = vpack.c.b16 %v1174, %v1168
        %v1349 = vpack.c.b16 %v1175, %v1169
        %v1350 = vpack.c.b16 %v1176, %v1170
        %v1351 = vpack.c.b16 %v1177, %v1171
        %v1352 = vpack.c.b16 %v1178, %v1172
        %v1353 = vpack.c.b16 %v1179, %v1173
        %v1354 = vpack.c.b16 %v1186, %v1180
        %v1355 = vpack.c.b16 %v1187, %v1181
        %v1356 = vpack.c.b16 %v1188, %v1182
        %v1357 = vpack.c.b16 %v1189, %v1183
        %v1358 = vpack.c.b16 %v1190, %v1184
        %v1359 = vpack.c.b16 %v1191, %v1185
        %v1360 = vpack.c.b16 %v1198, %v1192
        %v1361 = vpack.c.b16 %v1199, %v1193
        %v1362 = vpack.c.b16 %v1200, %v1194
        %v1363 = vpack.c.b16 %v1201, %v1195
        %v1364 = vpack.c.b16 %v1202, %v1196
        %v1365 = vpack.c.b16 %v1203, %v1197
        %v1366 = vpack.c.b16 %v1210, %v1204
        %v1367 = vpack.c.b16 %v1211, %v1205
        %v1368 = vpack.c.b16 %v1212, %v1206
        %v1369 = vpack.c.b16 %v1213, %v1207
        %v1370 = vpack.c.b16 %v1214, %v1208
        %v1371 = vpack.c.b16 %v1215, %v1209
        %v1372 = vpack.c.b16 %v1222, %v1216
        %v1373 = vpack.c.b16 %v1223, %v1217
        %v1374 = vpack.c.b16 %v1224, %v1218
        %v1375 = vpack.c.b16 %v1225, %v1219
        %v1376 = vpack.c.b16 %v1226, %v1220
        %v1377 = vpack.c.b16 %v1227, %v1221
        %v1378 = vpack.c.b16 %v1234, %v1228
        %v1379 = vpack.c.b16 %v1235, %v1229
        %v1380 = vpack.c.b16 %v1236, %v1230
        %v1381 = vpack.c.b16 %v1237, %v1231
        %v1382 = vpack.c.b16 %v1238, %v1232
        %v1383 = vpack.c.b16 %v1239, %v1233
        %v1384 = vpack.c.b16 %v1246, %v1240
        %v1385 = vpack.c.b16 %v1247, %v1241
        %v1386 = vpack.c.b16 %v1248, %v1242
        %v1387 = vpack.c.b16 %v1249, %v1243
        %v1388 = vpack.c.b16 %v1250, %v1244
        %v1389 = vpack.c.b16 %v1251, %v1245
        %v1390 = vpack.c.b16 %v1258, %v1252
        %v1391 = vpack.c.b16 %v1259, %v1253
        %v1392 = vpack.c.b16 %v1260, %v1254
        %v1393 = vpack.c.b16 %v1261, %v1255
        %v1394 = vpack.c.b16 %v1262, %v1256
        %v1395 = vpack.c.b16 %v1263, %v1257
        %v1396 = vpack.c.b16 %v1270, %v1264
        %v1397 = vpack.c.b16 %v1271, %v1265
        %v1398 = vpack.c.b16 %v1272, %v1266
        %v1399 = vpack.c.b16 %v1273, %v1267
        %v1400 = vpack.c.b16 %v1274, %v1268
        %v1401 = vpack.c.b16 %v1275, %v1269
        %v1402 = vpack.c.b16 %v1282, %v1276
        %v1403 = vpack.c.b16 %v1283, %v1277
        %v1404 = vpack.c.b16 %v1284, %v1278
        %v1405 = vpack.c.b16 %v1285, %v1279
        %v1406 = vpack.c.b16 %v1286, %v1280
        %v1407 = vpack.c.b16 %v1287, %v1281
        %v1408 = vpack.c.b16 %v1294, %v1288
        %v1409 = vpack.c.b16 %v1295, %v1289
        %v1410 = vpack.c.b16 %v1296, %v1290
        %v1411 = vpack.c.b16 %v1297, %v1291
        %v1412 = vpack.c.b16 %v1298, %v1292
        %v1413 = vpack.c.b16 %v1299, %v1293
        %v1414 = vpack.c.b16 %v1306, %v1300
        %v1415 = vpack.c.b16 %v1307, %v1301
        %v1416 = vpack.c.b16 %v1308, %v1302
        %v1417 = vpack.c.b16 %v1309, %v1303
        %v1418 = vpack.c.b16 %v1310, %v1304
        %v1419 = vpack.c.b16 %v1311, %v1305
        %v1420 = vpack.c.b16 %v1318, %v1312
        %v1421 = vpack.c.b16 %v1319, %v1313
        %v1422 = vpack.c.b16 %v1320, %v1314
        %v1423 = vpack.c.b16 %v1321, %v1315
        %v1424 = vpack.c.b16 %v1322, %v1316
        %v1425 = vpack.c.b16 %v1323, %v1317
        %v1426 = vpack.c.b16 %v1330, %v1324
        %v1427 = vpack.c.b16 %v1331, %v1325
        %v1428 = vpack.c.b16 %v1332, %v1326
        %v1429 = vpack.c.b16 %v1333, %v1327
        %v1430 = vpack.c.b16 %v1334, %v1328
        %v1431 = vpack.c.b16 %v1335, %v1329
        %1528 = vmatprep.subr.bf16.mxu0 %v1337
        %1529 = vmatpush1.bf16.msra.mxu0 %v1336
        %1530 = vmatprep.subr.bf16.mxu0 %v1343
        %1531 = vmatpush1.bf16.msra.mxu0 %v1342
        %1532 = vmatprep.subr.bf16.mxu0 %v1349
        %1533 = vmatpush1.bf16.msra.mxu0 %v1348
        %1534 = vmatprep.subr.bf16.mxu0 %v1355
        %1535 = vmatpush1.bf16.msra.mxu0 %v1354
        %1536 = vmatprep.subr.bf16.mxu0 %v1361
        %1537 = vmatpush1.bf16.msra.mxu0 %v1360
        %1538 = vmatprep.subr.bf16.mxu0 %v1367
        %1539 = vmatpush1.bf16.msra.mxu0 %v1366
        %1540 = vmatprep.subr.bf16.mxu0 %v1373
        %1541 = vmatpush1.bf16.msra.mxu0 %v1372
        %1542 = vmatprep.subr.bf16.mxu0 %v1379
        %1543 = vmatpush1.bf16.msra.mxu0 %v1378
        %1544 = vmatprep.subr.bf16.mxu0 %v1385
        %1545 = vmatpush1.bf16.msra.mxu0 %v1384
        %1546 = vmatprep.subr.bf16.mxu0 %v1391
        %1547 = vmatpush1.bf16.msra.mxu0 %v1390
        %1548 = vmatprep.subr.bf16.mxu0 %v1397
        %1549 = vmatpush1.bf16.msra.mxu0 %v1396
        %1550 = vmatprep.subr.bf16.mxu0 %v1403
        %1551 = vmatpush1.bf16.msra.mxu0 %v1402
        %1552 = vmatprep.subr.bf16.mxu0 %v1409
        %1553 = vmatpush1.bf16.msra.mxu0 %v1408
        %1554 = vmatprep.subr.bf16.mxu0 %v1415
        %1555 = vmatpush1.bf16.msra.mxu0 %v1414
        %1556 = vmatprep.subr.bf16.mxu0 %v1421
        %1557 = vmatpush1.bf16.msra.mxu0 %v1420
        %1558 = vmatprep.subr.bf16.mxu0 %v1427
        %1559 = vmatpush1.bf16.msra.mxu0 %v1426
        %1560 = vmatprep.mubr.bf16.mxu0 %v919
        %1561 = vmatmul.mubr.bf16.gmra.mrb[0].mxu0 %v918
        %v1562 = vpop.f32.mrb[0].mxu0
        %v1563 = vadd.f32 %v1021, %v1562
        %v1564 = vpop.f32.mrb[0].mxu0
        %v1565 = vadd.f32 %v1025, %v1564
        %v1566 = vpop.f32.mrb[0].mxu0
        %v1567 = vadd.f32 %v1021, %v1566
        %v1568 = vpop.f32.mrb[0].mxu0
        %v1569 = vadd.f32 %v1025, %v1568
        %1570 = vdwg.mxu0
        %1571 = vmatprep.subr.bf16.mxu0 %v1339
        %1572 = vmatpush1.bf16.msra.mxu0 %v1338
        %1573 = vmatprep.subr.bf16.mxu0 %v1345
        %1574 = vmatpush1.bf16.msra.mxu0 %v1344
        %1575 = vmatprep.subr.bf16.mxu0 %v1351
        %1576 = vmatpush1.bf16.msra.mxu0 %v1350
        %1577 = vmatprep.subr.bf16.mxu0 %v1357
        %1578 = vmatpush1.bf16.msra.mxu0 %v1356
        %1579 = vmatprep.subr.bf16.mxu0 %v1363
        %1580 = vmatpush1.bf16.msra.mxu0 %v1362
        %1581 = vmatprep.subr.bf16.mxu0 %v1369
        %1582 = vmatpush1.bf16.msra.mxu0 %v1368
        %1583 = vmatprep.subr.bf16.mxu0 %v1375
        %1584 = vmatpush1.bf16.msra.mxu0 %v1374
        %1585 = vmatprep.subr.bf16.mxu0 %v1381
        %1586 = vmatpush1.bf16.msra.mxu0 %v1380
        %1587 = vmatprep.subr.bf16.mxu0 %v1387
        %1588 = vmatpush1.bf16.msra.mxu0 %v1386
        %1589 = vmatprep.subr.bf16.mxu0 %v1393
        %1590 = vmatpush1.bf16.msra.mxu0 %v1392
        %1591 = vmatprep.subr.bf16.mxu0 %v1399
        %1592 = vmatpush1.bf16.msra.mxu0 %v1398
        %1593 = vmatprep.subr.bf16.mxu0 %v1405
        %1594 = vmatpush1.bf16.msra.mxu0 %v1404
        %1595 = vmatprep.subr.bf16.mxu0 %v1411
        %1596 = vmatpush1.bf16.msra.mxu0 %v1410
        %1597 = vmatprep.subr.bf16.mxu0 %v1417
        %1598 = vmatpush1.bf16.msra.mxu0 %v1416
        %1599 = vmatprep.subr.bf16.mxu0 %v1423
        %1600 = vmatpush1.bf16.msra.mxu0 %v1422
        %1601 = vmatprep.subr.bf16.mxu0 %v1429
        %1602 = vmatpush1.bf16.msra.mxu0 %v1428
        %1603 = vmatprep.mubr.bf16.mxu0 %v919
        %1604 = vmatmul.mubr.bf16.gmra.mrb[0].mxu0 %v918
        %v1605 = vpop.f32.mrb[0].mxu0
        %v1606 = vadd.f32 %v1029, %v1605
        %v1607 = vpop.f32.mrb[0].mxu0
        %v1608 = vadd.f32 %v1033, %v1607
        %v1609 = vpop.f32.mrb[0].mxu0
        %v1610 = vadd.f32 %v1029, %v1609
        %v1611 = vpop.f32.mrb[0].mxu0
        %v1612 = vadd.f32 %v1033, %v1611
        %1613 = vdwg.mxu0
        %1614 = vmatprep.subr.bf16.mxu0 %v1341
        %1615 = vmatpush1.bf16.msra.mxu0 %v1340
        %1616 = vmatprep.subr.bf16.mxu0 %v1347
        %1617 = vmatpush1.bf16.msra.mxu0 %v1346
        %1618 = vmatprep.subr.bf16.mxu0 %v1353
        %1619 = vmatpush1.bf16.msra.mxu0 %v1352
        %1620 = vmatprep.subr.bf16.mxu0 %v1359
        %1621 = vmatpush1.bf16.msra.mxu0 %v1358
        %1622 = vmatprep.subr.bf16.mxu0 %v1365
        %1623 = vmatpush1.bf16.msra.mxu0 %v1364
        %1624 = vmatprep.subr.bf16.mxu0 %v1371
        %1625 = vmatpush1.bf16.msra.mxu0 %v1370
        %1626 = vmatprep.subr.bf16.mxu0 %v1377
        %1627 = vmatpush1.bf16.msra.mxu0 %v1376
        %1628 = vmatprep.subr.bf16.mxu0 %v1383
        %1629 = vmatpush1.bf16.msra.mxu0 %v1382
        %1630 = vmatprep.subr.bf16.mxu0 %v1389
        %1631 = vmatpush1.bf16.msra.mxu0 %v1388
        %1632 = vmatprep.subr.bf16.mxu0 %v1395
        %1633 = vmatpush1.bf16.msra.mxu0 %v1394
        %1634 = vmatprep.subr.bf16.mxu0 %v1401
        %1635 = vmatpush1.bf16.msra.mxu0 %v1400
        %1636 = vmatprep.subr.bf16.mxu0 %v1407
        %1637 = vmatpush1.bf16.msra.mxu0 %v1406
        %1638 = vmatprep.subr.bf16.mxu0 %v1413
        %1639 = vmatpush1.bf16.msra.mxu0 %v1412
        %1640 = vmatprep.subr.bf16.mxu0 %v1419
        %1641 = vmatpush1.bf16.msra.mxu0 %v1418
        %1642 = vmatprep.subr.bf16.mxu0 %v1425
        %1643 = vmatpush1.bf16.msra.mxu0 %v1424
        %1644 = vmatprep.subr.bf16.mxu0 %v1431
        %1645 = vmatpush1.bf16.msra.mxu0 %v1430
        %1646 = vmatprep.mubr.bf16.mxu0 %v919
        %1647 = vmatmul.mubr.bf16.gmra.mrb[0].mxu0 %v918
        %v1648 = vpop.f32.mrb[0].mxu0
        %v1649 = vadd.f32 %v1037, %v1648
        %v1650 = vpop.f32.mrb[0].mxu0
        %v1651 = vadd.f32 %v1041, %v1650
        %v1652 = vpop.f32.mrb[0].mxu0
        %v1653 = vadd.f32 %v1037, %v1652
        %v1654 = vpop.f32.mrb[0].mxu0
        %v1655 = vadd.f32 %v1041, %v1654
        %1656 = vdwg.mxu0
        %v1657 = vmul.f32 %v1563, 0.088388346
        %v1658 = vmul.f32 %v1565, 0.088388346
        %v1659 = vmul.f32 %v1567, 0.088388346
        %v1660 = vmul.f32 %v1569, 0.088388346
        %v1661 = vpack.c.bf16 %v1659, %v1657
        %v1662 = vpack.c.bf16 %v1660, %v1658
        %v1665 = vunpack.c.l.b16 %v1661
        %v1666 = vunpack.c.l.b16 %v1662
        %v1667 = vunpack.c.h.b16 %v1661
        %v1668 = vunpack.c.h.b16 %v1662
        %v1669 = vpack.c.b16 %v1666, %v1665
        %v1670 = vpack.c.b16 %v1668, %v1667
        %v1673 = vpack.c.bf16 %v1610, %v1606
        %v1674 = vpack.c.bf16 %v1612, %v1608
        %v1677 = vunpack.c.l.b16 %v1673
        %v1678 = vunpack.c.l.b16 %v1674
        %v1679 = vunpack.c.h.b16 %v1673
        %v1680 = vunpack.c.h.b16 %v1674
        %v1681 = vpack.c.b16 %v1678, %v1677
        %v1682 = vpack.c.b16 %v1680, %v1679
        %v1685 = vpack.c.bf16 %v1653, %v1649
        %v1686 = vpack.c.bf16 %v1655, %v1651
        %v1689 = vunpack.c.l.b16 %v1685
        %v1690 = vunpack.c.l.b16 %v1686
        %v1691 = vunpack.c.h.b16 %v1685
        %v1692 = vunpack.c.h.b16 %v1686
        %v1693 = vpack.c.b16 %v1690, %v1689
        %v1694 = vpack.c.b16 %v1692, %v1691
        %v1695 = vld [vmem:[%s1] sm:$0x1]
        %v1696 = vld [vmem:[%s1 + $0x1] sm:$0x1]
        %v1697 = vld [vmem:[%s691] sm:$0xff]
        %v1698 = vld [vmem:[%s691 + $0x8] sm:$0xff]
        %v1699 = vld [vmem:[%s691 + $0x10] sm:$0xff]
        %v1700 = vld [vmem:[%s691 + $0x18] sm:$0xff]
        %v1701 = vld [vmem:[%s691 + $0x20] sm:$0xff]
        %v1702 = vld [vmem:[%s691 + $0x28] sm:$0xff]
        %v1703 = vld [vmem:[%s691 + $0x30] sm:$0xff]
        %v1704 = vld [vmem:[%s691 + $0x38] sm:$0xff]
        %v1705 = vld [vmem:[%s691 + $0x40] sm:$0xff]
        %v1706 = vld [vmem:[%s691 + $0x48] sm:$0xff]
        %v1707 = vld [vmem:[%s691 + $0x50] sm:$0xff]
        %v1708 = vld [vmem:[%s691 + $0x58] sm:$0xff]
        %v1709 = vld [vmem:[%s691 + $0x60] sm:$0xff]
        %v1710 = vld [vmem:[%s691 + $0x68] sm:$0xff]
        %v1711 = vld [vmem:[%s691 + $0x70] sm:$0xff]
        %v1712 = vld [vmem:[%s691 + $0x78] sm:$0xff]
        %v1713 = vld [vmem:[%s691 + $0x80] sm:$0xff]
        %v1714 = vld [vmem:[%s691 + $0x88] sm:$0xff]
        %v1715 = vld [vmem:[%s691 + $0x90] sm:$0xff]
        %v1716 = vld [vmem:[%s691 + $0x98] sm:$0xff]
        %v1717 = vld [vmem:[%s691 + $0xa0] sm:$0xff]
        %v1718 = vld [vmem:[%s691 + $0xa8] sm:$0xff]
        %v1719 = vld [vmem:[%s691 + $0xb0] sm:$0xff]
        %v1720 = vld [vmem:[%s691 + $0xb8] sm:$0xff]
        %v1721 = vld [vmem:[%s691 + $0xc0] sm:$0xff]
        %v1722 = vld [vmem:[%s691 + $0xc8] sm:$0xff]
        %v1723 = vld [vmem:[%s691 + $0xd0] sm:$0xff]
        %v1724 = vld [vmem:[%s691 + $0xd8] sm:$0xff]
        %v1725 = vld [vmem:[%s691 + $0xe0] sm:$0xff]
        %v1726 = vld [vmem:[%s691 + $0xe8] sm:$0xff]
        %v1727 = vld [vmem:[%s691 + $0xf0] sm:$0xff]
        %v1728 = vld [vmem:[%s691 + $0xf8] sm:$0xff]
        %v1731 = vlaneseq
        %v1732 = vshrl.u32 %v1731, 7
        %v1733 = vsub.s32 0, %v1732
        %v1734 = vrot.slane %v1695, %v1733
        %v1735 = vlaneseq
        %v1736 = vshrl.u32 %v1735, 7
        %v1737 = vsub.s32 0, %v1736
        %v1738 = vrot.slane %v1696, %v1737
        %1741 = vmatprep.subr.bf16.mxu0 0
        %1742 = vmatpush1.bf16.xpose.msra.mxu0 %v1681
        %1743 = vmatprep.subr.bf16.mxu0 0
        %1744 = vmatpush1.bf16.xpose.msra.mxu0 0
        %1745 = vmatprep.subr.bf16.mxu0 0
        %1746 = vmatpush1.bf16.xpose.msra.mxu0 0
        %1747 = vmatprep.subr.bf16.mxu0 0
        %1748 = vmatpush1.bf16.xpose.msra.mxu0 0
        %1749 = vmatprep.subr.bf16.mxu0 0
        %1750 = vmatpush1.bf16.xpose.msra.mxu0 0
        %1751 = vmatprep.subr.bf16.mxu0 0
        %1752 = vmatpush1.bf16.xpose.msra.mxu0 0
        %1753 = vmatprep.subr.bf16.mxu0 0
        %1754 = vmatpush1.bf16.xpose.msra.mxu0 0
        %1755 = vmatprep.subr.bf16.mxu0 0
        %1756 = vmatpush1.bf16.xpose.msra.mxu0 0
        %1757 = vmatprep.subr.bf16.mxu0 0
        %1758 = vmatpush1.bf16.xpose.msra.mxu0 0
        %1759 = vmatprep.subr.bf16.mxu0 0
        %1760 = vmatpush1.bf16.xpose.msra.mxu0 0
        %1761 = vmatprep.subr.bf16.mxu0 0
        %1762 = vmatpush1.bf16.xpose.msra.mxu0 0
        %1763 = vmatprep.subr.bf16.mxu0 0
        %1764 = vmatpush1.bf16.xpose.msra.mxu0 0
        %1765 = vmatprep.subr.bf16.mxu0 0
        %1766 = vmatpush1.bf16.xpose.msra.mxu0 0
        %1767 = vmatprep.subr.bf16.mxu0 0
        %1768 = vmatpush1.bf16.xpose.msra.mxu0 0
        %1769 = vmatprep.subr.bf16.mxu0 0
        %1770 = vmatpush1.bf16.xpose.msra.mxu0 0
        %1771 = vmatprep.subr.bf16.mxu0 0
        %1772 = vmatpush1.bf16.xpose.msra.mxu0 0
        %1773 = vmatprep.mubr.bf16.mxu0 0
        %1774 = vmatmul.mubr.bf16.gmra.mrb[0].mxu0 %v1669
        %v1775 = vpop.f32.mrb[0].mxu0
        %v1776 = vadd.f32 %v1734, %v1775
        %v1777 = vpop.f32.mrb[0].mxu0
        %v1778 = vpop.f32.mrb[0].mxu0
        %v1779 = vpop.f32.mrb[0].mxu0
        %1780 = vdwg.mxu0
        %1781 = vmatprep.subr.bf16.mxu0 0
        %1782 = vmatpush1.bf16.xpose.msra.mxu0 %v1682
        %1783 = vmatprep.subr.bf16.mxu0 0
        %1784 = vmatpush1.bf16.xpose.msra.mxu0 0
        %1785 = vmatprep.subr.bf16.mxu0 0
        %1786 = vmatpush1.bf16.xpose.msra.mxu0 0
        %1787 = vmatprep.subr.bf16.mxu0 0
        %1788 = vmatpush1.bf16.xpose.msra.mxu0 0
        %1789 = vmatprep.subr.bf16.mxu0 0
        %1790 = vmatpush1.bf16.xpose.msra.mxu0 0
        %1791 = vmatprep.subr.bf16.mxu0 0
        %1792 = vmatpush1.bf16.xpose.msra.mxu0 0
        %1793 = vmatprep.subr.bf16.mxu0 0
        %1794 = vmatpush1.bf16.xpose.msra.mxu0 0
        %1795 = vmatprep.subr.bf16.mxu0 0
        %1796 = vmatpush1.bf16.xpose.msra.mxu0 0
        %1797 = vmatprep.subr.bf16.mxu0 0
        %1798 = vmatpush1.bf16.xpose.msra.mxu0 0
        %1799 = vmatprep.subr.bf16.mxu0 0
        %1800 = vmatpush1.bf16.xpose.msra.mxu0 0
        %1801 = vmatprep.subr.bf16.mxu0 0
        %1802 = vmatpush1.bf16.xpose.msra.mxu0 0
        %1803 = vmatprep.subr.bf16.mxu0 0
        %1804 = vmatpush1.bf16.xpose.msra.mxu0 0
        %1805 = vmatprep.subr.bf16.mxu0 0
        %1806 = vmatpush1.bf16.xpose.msra.mxu0 0
        %1807 = vmatprep.subr.bf16.mxu0 0
        %1808 = vmatpush1.bf16.xpose.msra.mxu0 0
        %1809 = vmatprep.subr.bf16.mxu0 0
        %1810 = vmatpush1.bf16.xpose.msra.mxu0 0
        %1811 = vmatprep.subr.bf16.mxu0 0
        %1812 = vmatpush1.bf16.xpose.msra.mxu0 0
        %1813 = vmatprep.mubr.bf16.mxu0 0
        %1814 = vmatmul.mubr.bf16.gmra.mrb[0].mxu0 %v1670
        %v1815 = vpop.f32.mrb[0].mxu0
        %v1816 = vadd.f32 %v1738, %v1815
        %v1817 = vpop.f32.mrb[0].mxu0
        %v1818 = vpop.f32.mrb[0].mxu0
        %v1819 = vpop.f32.mrb[0].mxu0
        %1820 = vdwg.mxu0
        %vm1821 = vcmask 64512
        %v1822 = vsel %vm1821, %v1776, -inf
        %1823 = vmax.xlane.f32.xlu0 %v1822
        %v1824 = vpop.xlane.xlu0 %1823
        %v1825 = vsel %vm1821, %v1816, -inf
        %1826 = vmax.xlane.f32.xlu0 %v1825
        %v1827 = vpop.xlane.xlu0 %1826
        %v1828 = vsub.f32 %v1776, %v1824
        %v1829 = vsub.f32 %v1816, %v1827
        %v1830 = vmul.f32 %v1828, 1.442695
        %v1831 = vpow.pop %v1830
        %v1832 = vmul.f32 %v1829, 1.442695
        %v1833 = vpow.pop %v1832
        %v1834 = vsel %vm1821, %v1831, 0.0
        %1835 = vadd.xlane.f32.xlu0 %v1834
        %v1836 = vpop.xlane.xlu0 %1835
        %v1837 = vsel %vm1821, %v1833, 0.0
        %1838 = vadd.xlane.f32.xlu0 %v1837
        %v1839 = vpop.xlane.xlu0 %1838
        %v1840 = vrcp.pop %v1836
        %v1841 = vrcp.pop %v1839
        %v1842 = vmul.f32 %v1831, %v1840
        %v1843 = vmul.f32 %v1833, %v1841
        %v1844 = vpack.c.bf16 %v1842, %v1842
        %v1845 = vpack.c.bf16 %v1843, %v1843
        %v1847 = vsel %vm1821, %v1844, 0
        %vm1849 = vcmask 1043456
        %v1851 = vsel %vm1849, %v1693, 0
        %1853 = vmatprep.subr.bf16.mxu0 0
        %1854 = vmatpush1.bf16.msra.mxu0 %v1851
        %1855 = vmatprep.subr.bf16.mxu0 0
        %1856 = vmatpush1.bf16.msra.mxu0 0
        %1857 = vmatprep.subr.bf16.mxu0 0
        %1858 = vmatpush1.bf16.msra.mxu0 0
        %1859 = vmatprep.subr.bf16.mxu0 0
        %1860 = vmatpush1.bf16.msra.mxu0 0
        %1861 = vmatprep.subr.bf16.mxu0 0
        %1862 = vmatpush1.bf16.msra.mxu0 0
        %1863 = vmatprep.subr.bf16.mxu0 0
        %1864 = vmatpush1.bf16.msra.mxu0 0
        %1865 = vmatprep.subr.bf16.mxu0 0
        %1866 = vmatpush1.bf16.msra.mxu0 0
        %1867 = vmatprep.subr.bf16.mxu0 0
        %1868 = vmatpush1.bf16.msra.mxu0 0
        %1869 = vmatprep.subr.bf16.mxu0 0
        %1870 = vmatpush1.bf16.msra.mxu0 0
        %1871 = vmatprep.subr.bf16.mxu0 0
        %1872 = vmatpush1.bf16.msra.mxu0 0
        %1873 = vmatprep.subr.bf16.mxu0 0
        %1874 = vmatpush1.bf16.msra.mxu0 0
        %1875 = vmatprep.subr.bf16.mxu0 0
        %1876 = vmatpush1.bf16.msra.mxu0 0
        %1877 = vmatprep.subr.bf16.mxu0 0
        %1878 = vmatpush1.bf16.msra.mxu0 0
        %1879 = vmatprep.subr.bf16.mxu0 0
        %1880 = vmatpush1.bf16.msra.mxu0 0
        %1881 = vmatprep.subr.bf16.mxu0 0
        %1882 = vmatpush1.bf16.msra.mxu0 0
        %1883 = vmatprep.subr.bf16.mxu0 0
        %1884 = vmatpush1.bf16.msra.mxu0 0
        %1885 = vmatprep.mubr.bf16.mxu0 0
        %1886 = vmatmul.mubr.bf16.gmra.mrb[0].mxu0 %v1847
        %v1887 = vpop.f32.mrb[0].mxu0
        %v1888 = vadd.f32 0.0, %v1887
        %v1889 = vpop.f32.mrb[0].mxu0
        %v1890 = vpop.f32.mrb[0].mxu0
        %v1891 = vpop.f32.mrb[0].mxu0
        %1892 = vdwg.mxu0
        %v1894 = vsel %vm1821, %v1845, 0
        %v1897 = vsel %vm1849, %v1694, 0
        %1899 = vmatprep.subr.bf16.mxu0 0
        %1900 = vmatpush1.bf16.msra.mxu0 %v1897
        %1901 = vmatprep.subr.bf16.mxu0 0
        %1902 = vmatpush1.bf16.msra.mxu0 0
        %1903 = vmatprep.subr.bf16.mxu0 0
        %1904 = vmatpush1.bf16.msra.mxu0 0
        %1905 = vmatprep.subr.bf16.mxu0 0
        %1906 = vmatpush1.bf16.msra.mxu0 0
        %1907 = vmatprep.subr.bf16.mxu0 0
        %1908 = vmatpush1.bf16.msra.mxu0 0
        %1909 = vmatprep.subr.bf16.mxu0 0
        %1910 = vmatpush1.bf16.msra.mxu0 0
        %1911 = vmatprep.subr.bf16.mxu0 0
        %1912 = vmatpush1.bf16.msra.mxu0 0
        %1913 = vmatprep.subr.bf16.mxu0 0
        %1914 = vmatpush1.bf16.msra.mxu0 0
        %1915 = vmatprep.subr.bf16.mxu0 0
        %1916 = vmatpush1.bf16.msra.mxu0 0
        %1917 = vmatprep.subr.bf16.mxu0 0
        %1918 = vmatpush1.bf16.msra.mxu0 0
        %1919 = vmatprep.subr.bf16.mxu0 0
        %1920 = vmatpush1.bf16.msra.mxu0 0
        %1921 = vmatprep.subr.bf16.mxu0 0
        %1922 = vmatpush1.bf16.msra.mxu0 0
        %1923 = vmatprep.subr.bf16.mxu0 0
        %1924 = vmatpush1.bf16.msra.mxu0 0
        %1925 = vmatprep.subr.bf16.mxu0 0
        %1926 = vmatpush1.bf16.msra.mxu0 0
        %1927 = vmatprep.subr.bf16.mxu0 0
        %1928 = vmatpush1.bf16.msra.mxu0 0
        %1929 = vmatprep.subr.bf16.mxu0 0
        %1930 = vmatpush1.bf16.msra.mxu0 0
        %1931 = vmatprep.mubr.bf16.mxu0 0
        %1932 = vmatmul.mubr.bf16.gmra.mrb[0].mxu0 %v1894
        %v1933 = vpop.f32.mrb[0].mxu0
        %v1934 = vadd.f32 0.0, %v1933
        %v1935 = vpop.f32.mrb[0].mxu0
        %v1936 = vpop.f32.mrb[0].mxu0
        %v1937 = vpop.f32.mrb[0].mxu0
        %1938 = vdwg.mxu0
        %v1939 = vpack.c.bf16 %v1934, %v1888
        %v1940 = vrot.slane %v1669, 4
        %v1942 = vrot.slane %v1681, 4
        %1944 = vmatprep.subr.bf16.mxu0 0
        %1945 = vmatpush1.bf16.xpose.msra.mxu0 %v1942
        %1946 = vmatprep.subr.bf16.mxu0 0
        %1947 = vmatpush1.bf16.xpose.msra.mxu0 0
        %1948 = vmatprep.subr.bf16.mxu0 0
        %1949 = vmatpush1.bf16.xpose.msra.mxu0 0
        %1950 = vmatprep.subr.bf16.mxu0 0
        %1951 = vmatpush1.bf16.xpose.msra.mxu0 0
        %1952 = vmatprep.subr.bf16.mxu0 0
        %1953 = vmatpush1.bf16.xpose.msra.mxu0 0
        %1954 = vmatprep.subr.bf16.mxu0 0
        %1955 = vmatpush1.bf16.xpose.msra.mxu0 0
        %1956 = vmatprep.subr.bf16.mxu0 0
        %1957 = vmatpush1.bf16.xpose.msra.mxu0 0
        %1958 = vmatprep.subr.bf16.mxu0 0
        %1959 = vmatpush1.bf16.xpose.msra.mxu0 0
        %1960 = vmatprep.subr.bf16.mxu0 0
        %1961 = vmatpush1.bf16.xpose.msra.mxu0 0
        %1962 = vmatprep.subr.bf16.mxu0 0
        %1963 = vmatpush1.bf16.xpose.msra.mxu0 0
        %1964 = vmatprep.subr.bf16.mxu0 0
        %1965 = vmatpush1.bf16.xpose.msra.mxu0 0
        %1966 = vmatprep.subr.bf16.mxu0 0
        %1967 = vmatpush1.bf16.xpose.msra.mxu0 0
        %1968 = vmatprep.subr.bf16.mxu0 0
        %1969 = vmatpush1.bf16.xpose.msra.mxu0 0
        %1970 = vmatprep.subr.bf16.mxu0 0
        %1971 = vmatpush1.bf16.xpose.msra.mxu0 0
        %1972 = vmatprep.subr.bf16.mxu0 0
        %1973 = vmatpush1.bf16.xpose.msra.mxu0 0
        %1974 = vmatprep.subr.bf16.mxu0 0
        %1975 = vmatpush1.bf16.xpose.msra.mxu0 0
        %1976 = vmatprep.mubr.bf16.mxu0 0
        %1977 = vmatmul.mubr.bf16.gmra.mrb[0].mxu0 %v1940
        %v1978 = vpop.f32.mrb[0].mxu0
        %v1979 = vadd.f32 %v1734, %v1978
        %v1980 = vpop.f32.mrb[0].mxu0
        %v1981 = vpop.f32.mrb[0].mxu0
        %v1982 = vpop.f32.mrb[0].mxu0
        %1983 = vdwg.mxu0
        %v1984 = vrot.slane %v1670, 4
        %v1986 = vrot.slane %v1682, 4
        %1988 = vmatprep.subr.bf16.mxu0 0
        %1989 = vmatpush1.bf16.xpose.msra.mxu0 %v1986
        %1990 = vmatprep.subr.bf16.mxu0 0
        %1991 = vmatpush1.bf16.xpose.msra.mxu0 0
        %1992 = vmatprep.subr.bf16.mxu0 0
        %1993 = vmatpush1.bf16.xpose.msra.mxu0 0
        %1994 = vmatprep.subr.bf16.mxu0 0
        %1995 = vmatpush1.bf16.xpose.msra.mxu0 0
        %1996 = vmatprep.subr.bf16.mxu0 0
        %1997 = vmatpush1.bf16.xpose.msra.mxu0 0
        %1998 = vmatprep.subr.bf16.mxu0 0
        %1999 = vmatpush1.bf16.xpose.msra.mxu0 0
        %2000 = vmatprep.subr.bf16.mxu0 0
        %2001 = vmatpush1.bf16.xpose.msra.mxu0 0
        %2002 = vmatprep.subr.bf16.mxu0 0
        %2003 = vmatpush1.bf16.xpose.msra.mxu0 0
        %2004 = vmatprep.subr.bf16.mxu0 0
        %2005 = vmatpush1.bf16.xpose.msra.mxu0 0
        %2006 = vmatprep.subr.bf16.mxu0 0
        %2007 = vmatpush1.bf16.xpose.msra.mxu0 0
        %2008 = vmatprep.subr.bf16.mxu0 0
        %2009 = vmatpush1.bf16.xpose.msra.mxu0 0
        %2010 = vmatprep.subr.bf16.mxu0 0
        %2011 = vmatpush1.bf16.xpose.msra.mxu0 0
        %2012 = vmatprep.subr.bf16.mxu0 0
        %2013 = vmatpush1.bf16.xpose.msra.mxu0 0
        %2014 = vmatprep.subr.bf16.mxu0 0
        %2015 = vmatpush1.bf16.xpose.msra.mxu0 0
        %2016 = vmatprep.subr.bf16.mxu0 0
        %2017 = vmatpush1.bf16.xpose.msra.mxu0 0
        %2018 = vmatprep.subr.bf16.mxu0 0
        %2019 = vmatpush1.bf16.xpose.msra.mxu0 0
        %2020 = vmatprep.mubr.bf16.mxu0 0
        %2021 = vmatmul.mubr.bf16.gmra.mrb[0].mxu0 %v1984
        %v2022 = vpop.f32.mrb[0].mxu0
        %v2023 = vadd.f32 %v1738, %v2022
        %v2024 = vpop.f32.mrb[0].mxu0
        %v2025 = vpop.f32.mrb[0].mxu0
        %v2026 = vpop.f32.mrb[0].mxu0
        %2027 = vdwg.mxu0
        %v2028 = vsel %vm1821, %v1979, -inf
        %2029 = vmax.xlane.f32.xlu0 %v2028
        %v2030 = vpop.xlane.xlu0 %2029
        %v2031 = vsel %vm1821, %v2023, -inf
        %2032 = vmax.xlane.f32.xlu0 %v2031
        %v2033 = vpop.xlane.xlu0 %2032
        %v2034 = vsub.f32 %v1979, %v2030
        %v2035 = vsub.f32 %v2023, %v2033
        %v2036 = vmul.f32 %v2034, 1.442695
        %v2037 = vpow.pop %v2036
        %v2038 = vmul.f32 %v2035, 1.442695
        %v2039 = vpow.pop %v2038
        %v2040 = vsel %vm1821, %v2037, 0.0
        %2041 = vadd.xlane.f32.xlu0 %v2040
        %v2042 = vpop.xlane.xlu0 %2041
        %v2043 = vsel %vm1821, %v2039, 0.0
        %2044 = vadd.xlane.f32.xlu0 %v2043
        %v2045 = vpop.xlane.xlu0 %2044
        %v2046 = vrcp.pop %v2042
        %v2047 = vrcp.pop %v2045
        %v2048 = vmul.f32 %v2037, %v2046
        %v2049 = vmul.f32 %v2039, %v2047
        %v2050 = vpack.c.bf16 %v2048, %v2048
        %v2051 = vpack.c.bf16 %v2049, %v2049
        %v2052 = vrot.slane %v1693, 4
        %v2054 = vsel %vm1821, %v2050, 0
        %v2057 = vsel %vm1849, %v2052, 0
        %2059 = vmatprep.subr.bf16.mxu0 0
        %2060 = vmatpush1.bf16.msra.mxu0 %v2057
        %2061 = vmatprep.subr.bf16.mxu0 0
        %2062 = vmatpush1.bf16.msra.mxu0 0
        %2063 = vmatprep.subr.bf16.mxu0 0
        %2064 = vmatpush1.bf16.msra.mxu0 0
        %2065 = vmatprep.subr.bf16.mxu0 0
        %2066 = vmatpush1.bf16.msra.mxu0 0
        %2067 = vmatprep.subr.bf16.mxu0 0
        %2068 = vmatpush1.bf16.msra.mxu0 0
        %2069 = vmatprep.subr.bf16.mxu0 0
        %2070 = vmatpush1.bf16.msra.mxu0 0
        %2071 = vmatprep.subr.bf16.mxu0 0
        %2072 = vmatpush1.bf16.msra.mxu0 0
        %2073 = vmatprep.subr.bf16.mxu0 0
        %2074 = vmatpush1.bf16.msra.mxu0 0
        %2075 = vmatprep.subr.bf16.mxu0 0
        %2076 = vmatpush1.bf16.msra.mxu0 0
        %2077 = vmatprep.subr.bf16.mxu0 0
        %2078 = vmatpush1.bf16.msra.mxu0 0
        %2079 = vmatprep.subr.bf16.mxu0 0
        %2080 = vmatpush1.bf16.msra.mxu0 0
        %2081 = vmatprep.subr.bf16.mxu0 0
        %2082 = vmatpush1.bf16.msra.mxu0 0
        %2083 = vmatprep.subr.bf16.mxu0 0
        %2084 = vmatpush1.bf16.msra.mxu0 0
        %2085 = vmatprep.subr.bf16.mxu0 0
        %2086 = vmatpush1.bf16.msra.mxu0 0
        %2087 = vmatprep.subr.bf16.mxu0 0
        %2088 = vmatpush1.bf16.msra.mxu0 0
        %2089 = vmatprep.subr.bf16.mxu0 0
        %2090 = vmatpush1.bf16.msra.mxu0 0
        %2091 = vmatprep.mubr.bf16.mxu0 0
        %2092 = vmatmul.mubr.bf16.gmra.mrb[0].mxu0 %v2054
        %v2093 = vpop.f32.mrb[0].mxu0
        %v2094 = vadd.f32 0.0, %v2093
        %v2095 = vpop.f32.mrb[0].mxu0
        %v2096 = vpop.f32.mrb[0].mxu0
        %v2097 = vpop.f32.mrb[0].mxu0
        %2098 = vdwg.mxu0
        %v2099 = vrot.slane %v1694, 4
        %v2101 = vsel %vm1821, %v2051, 0
        %v2104 = vsel %vm1849, %v2099, 0
        %2106 = vmatprep.subr.bf16.mxu0 0
        %2107 = vmatpush1.bf16.msra.mxu0 %v2104
        %2108 = vmatprep.subr.bf16.mxu0 0
        %2109 = vmatpush1.bf16.msra.mxu0 0
        %2110 = vmatprep.subr.bf16.mxu0 0
        %2111 = vmatpush1.bf16.msra.mxu0 0
        %2112 = vmatprep.subr.bf16.mxu0 0
        %2113 = vmatpush1.bf16.msra.mxu0 0
        %2114 = vmatprep.subr.bf16.mxu0 0
        %2115 = vmatpush1.bf16.msra.mxu0 0
        %2116 = vmatprep.subr.bf16.mxu0 0
        %2117 = vmatpush1.bf16.msra.mxu0 0
        %2118 = vmatprep.subr.bf16.mxu0 0
        %2119 = vmatpush1.bf16.msra.mxu0 0
        %2120 = vmatprep.subr.bf16.mxu0 0
        %2121 = vmatpush1.bf16.msra.mxu0 0
        %2122 = vmatprep.subr.bf16.mxu0 0
        %2123 = vmatpush1.bf16.msra.mxu0 0
        %2124 = vmatprep.subr.bf16.mxu0 0
        %2125 = vmatpush1.bf16.msra.mxu0 0
        %2126 = vmatprep.subr.bf16.mxu0 0
        %2127 = vmatpush1.bf16.msra.mxu0 0
        %2128 = vmatprep.subr.bf16.mxu0 0
        %2129 = vmatpush1.bf16.msra.mxu0 0
        %2130 = vmatprep.subr.bf16.mxu0 0
        %2131 = vmatpush1.bf16.msra.mxu0 0
        %2132 = vmatprep.subr.bf16.mxu0 0
        %2133 = vmatpush1.bf16.msra.mxu0 0
        %2134 = vmatprep.subr.bf16.mxu0 0
        %2135 = vmatpush1.bf16.msra.mxu0 0
        %2136 = vmatprep.subr.bf16.mxu0 0
        %2137 = vmatpush1.bf16.msra.mxu0 0
        %2138 = vmatprep.mubr.bf16.mxu0 0
        %2139 = vmatmul.mubr.bf16.gmra.mrb[0].mxu0 %v2101
        %v2140 = vpop.f32.mrb[0].mxu0
        %v2141 = vadd.f32 0.0, %v2140
        %v2142 = vpop.f32.mrb[0].mxu0
        %v2143 = vpop.f32.mrb[0].mxu0
        %v2144 = vpop.f32.mrb[0].mxu0
        %2145 = vdwg.mxu0
        %v2146 = vpack.c.bf16 %v2141, %v2094
        %v2163 = vunpack.c.l.b16 %v1713
        %v2164 = vunpack.c.h.b16 %v1713
        %v2165 = vunpack.c.l.b16 %v1714
        %v2166 = vunpack.c.h.b16 %v1714
        %v2167 = vunpack.c.l.b16 %v1715
        %v2168 = vunpack.c.h.b16 %v1715
        %v2169 = vunpack.c.l.b16 %v1716
        %v2170 = vunpack.c.h.b16 %v1716
        %v2171 = vunpack.c.l.b16 %v1717
        %v2172 = vunpack.c.h.b16 %v1717
        %v2173 = vunpack.c.l.b16 %v1718
        %v2174 = vunpack.c.h.b16 %v1718
        %v2175 = vunpack.c.l.b16 %v1719
        %v2176 = vunpack.c.h.b16 %v1719
        %v2177 = vunpack.c.l.b16 %v1720
        %v2178 = vunpack.c.h.b16 %v1720
        %v2179 = vunpack.c.l.b16 %v1721
        %v2180 = vunpack.c.h.b16 %v1721
        %v2181 = vunpack.c.l.b16 %v1722
        %v2182 = vunpack.c.h.b16 %v1722
        %v2183 = vunpack.c.l.b16 %v1723
        %v2184 = vunpack.c.h.b16 %v1723
        %v2185 = vunpack.c.l.b16 %v1724
        %v2186 = vunpack.c.h.b16 %v1724
        %v2187 = vunpack.c.l.b16 %v1725
        %v2188 = vunpack.c.h.b16 %v1725
        %v2189 = vunpack.c.l.b16 %v1726
        %v2190 = vunpack.c.h.b16 %v1726
        %v2191 = vunpack.c.l.b16 %v1727
        %v2192 = vunpack.c.h.b16 %v1727
        %v2193 = vunpack.c.l.b16 %v1728
        %v2194 = vunpack.c.h.b16 %v1728
        %v2195 = vpack.c.b16 %v2165, %v2163
        %v2196 = vpack.c.b16 %v2166, %v2164
        %v2197 = vpack.c.b16 %v2169, %v2167
        %v2198 = vpack.c.b16 %v2170, %v2168
        %v2199 = vpack.c.b16 %v2173, %v2171
        %v2200 = vpack.c.b16 %v2174, %v2172
        %v2201 = vpack.c.b16 %v2177, %v2175
        %v2202 = vpack.c.b16 %v2178, %v2176
        %v2203 = vpack.c.b16 %v2181, %v2179
        %v2204 = vpack.c.b16 %v2182, %v2180
        %v2205 = vpack.c.b16 %v2185, %v2183
        %v2206 = vpack.c.b16 %v2186, %v2184
        %v2207 = vpack.c.b16 %v2189, %v2187
        %v2208 = vpack.c.b16 %v2190, %v2188
        %v2209 = vpack.c.b16 %v2193, %v2191
        %v2210 = vpack.c.b16 %v2194, %v2192
        %2227 = vmatprep.subr.bf16.mxu0 %v2196
        %2228 = vmatpush1.bf16.msra.mxu0 %v2195
        %2229 = vmatprep.subr.bf16.mxu0 %v2198
        %2230 = vmatpush1.bf16.msra.mxu0 %v2197
        %2231 = vmatprep.subr.bf16.mxu0 %v2200
        %2232 = vmatpush1.bf16.msra.mxu0 %v2199
        %2233 = vmatprep.subr.bf16.mxu0 %v2202
        %2234 = vmatpush1.bf16.msra.mxu0 %v2201
        %2235 = vmatprep.subr.bf16.mxu0 %v2204
        %2236 = vmatpush1.bf16.msra.mxu0 %v2203
        %2237 = vmatprep.subr.bf16.mxu0 %v2206
        %2238 = vmatpush1.bf16.msra.mxu0 %v2205
        %2239 = vmatprep.subr.bf16.mxu0 %v2208
        %2240 = vmatpush1.bf16.msra.mxu0 %v2207
        %2241 = vmatprep.subr.bf16.mxu0 %v2210
        %2242 = vmatpush1.bf16.msra.mxu0 %v2209
        %2243 = vmatprep.subr.bf16.mxu0 0
        %2244 = vmatpush1.bf16.msra.mxu0 0
        %2245 = vmatprep.subr.bf16.mxu0 0
        %2246 = vmatpush1.bf16.msra.mxu0 0
        %2247 = vmatprep.subr.bf16.mxu0 0
        %2248 = vmatpush1.bf16.msra.mxu0 0
        %2249 = vmatprep.subr.bf16.mxu0 0
        %2250 = vmatpush1.bf16.msra.mxu0 0
        %2251 = vmatprep.subr.bf16.mxu0 0
        %2252 = vmatpush1.bf16.msra.mxu0 0
        %2253 = vmatprep.subr.bf16.mxu0 0
        %2254 = vmatpush1.bf16.msra.mxu0 0
        %2255 = vmatprep.subr.bf16.mxu0 0
        %2256 = vmatpush1.bf16.msra.mxu0 0
        %2257 = vmatprep.subr.bf16.mxu0 0
        %2258 = vmatpush1.bf16.msra.mxu0 0
        %2259 = vmatprep.mubr.bf16.mxu0 0
        %2260 = vmatmul.mubr.bf16.gmra.mrb[0].mxu0 %v2146
        %v2261 = vpop.f32.mrb[0].mxu0
        %v2262 = vadd.f32 0.0, %v2261
        %v2263 = vpop.f32.mrb[0].mxu0
        %v2264 = vadd.f32 0.0, %v2263
        %v2265 = vpop.f32.mrb[0].mxu0
        %v2266 = vadd.f32 0.0, %v2265
        %v2267 = vpop.f32.mrb[0].mxu0
        %v2268 = vadd.f32 0.0, %v2267
        %2269 = vdwg.mxu0
        %v2286 = vunpack.c.l.b16 %v1697
        %v2287 = vunpack.c.h.b16 %v1697
        %v2288 = vunpack.c.l.b16 %v1698
        %v2289 = vunpack.c.h.b16 %v1698
        %v2290 = vunpack.c.l.b16 %v1699
        %v2291 = vunpack.c.h.b16 %v1699
        %v2292 = vunpack.c.l.b16 %v1700
        %v2293 = vunpack.c.h.b16 %v1700
        %v2294 = vunpack.c.l.b16 %v1701
        %v2295 = vunpack.c.h.b16 %v1701
        %v2296 = vunpack.c.l.b16 %v1702
        %v2297 = vunpack.c.h.b16 %v1702
        %v2298 = vunpack.c.l.b16 %v1703
        %v2299 = vunpack.c.h.b16 %v1703
        %v2300 = vunpack.c.l.b16 %v1704
        %v2301 = vunpack.c.h.b16 %v1704
        %v2302 = vunpack.c.l.b16 %v1705
        %v2303 = vunpack.c.h.b16 %v1705
        %v2304 = vunpack.c.l.b16 %v1706
        %v2305 = vunpack.c.h.b16 %v1706
        %v2306 = vunpack.c.l.b16 %v1707
        %v2307 = vunpack.c.h.b16 %v1707
        %v2308 = vunpack.c.l.b16 %v1708
        %v2309 = vunpack.c.h.b16 %v1708
        %v2310 = vunpack.c.l.b16 %v1709
        %v2311 = vunpack.c.h.b16 %v1709
        %v2312 = vunpack.c.l.b16 %v1710
        %v2313 = vunpack.c.h.b16 %v1710
        %v2314 = vunpack.c.l.b16 %v1711
        %v2315 = vunpack.c.h.b16 %v1711
        %v2316 = vunpack.c.l.b16 %v1712
        %v2317 = vunpack.c.h.b16 %v1712
        %v2318 = vpack.c.b16 %v2288, %v2286
        %v2319 = vpack.c.b16 %v2289, %v2287
        %v2320 = vpack.c.b16 %v2292, %v2290
        %v2321 = vpack.c.b16 %v2293, %v2291
        %v2322 = vpack.c.b16 %v2296, %v2294
        %v2323 = vpack.c.b16 %v2297, %v2295
        %v2324 = vpack.c.b16 %v2300, %v2298
        %v2325 = vpack.c.b16 %v2301, %v2299
        %v2326 = vpack.c.b16 %v2304, %v2302
        %v2327 = vpack.c.b16 %v2305, %v2303
        %v2328 = vpack.c.b16 %v2308, %v2306
        %v2329 = vpack.c.b16 %v2309, %v2307
        %v2330 = vpack.c.b16 %v2312, %v2310
        %v2331 = vpack.c.b16 %v2313, %v2311
        %v2332 = vpack.c.b16 %v2316, %v2314
        %v2333 = vpack.c.b16 %v2317, %v2315
        %2350 = vmatprep.subr.bf16.mxu0 %v2319
        %2351 = vmatpush1.bf16.msra.mxu0 %v2318
        %2352 = vmatprep.subr.bf16.mxu0 %v2321
        %2353 = vmatpush1.bf16.msra.mxu0 %v2320
        %2354 = vmatprep.subr.bf16.mxu0 %v2323
        %2355 = vmatpush1.bf16.msra.mxu0 %v2322
        %2356 = vmatprep.subr.bf16.mxu0 %v2325
        %2357 = vmatpush1.bf16.msra.mxu0 %v2324
        %2358 = vmatprep.subr.bf16.mxu0 %v2327
        %2359 = vmatpush1.bf16.msra.mxu0 %v2326
        %2360 = vmatprep.subr.bf16.mxu0 %v2329
        %2361 = vmatpush1.bf16.msra.mxu0 %v2328
        %2362 = vmatprep.subr.bf16.mxu0 %v2331
        %2363 = vmatpush1.bf16.msra.mxu0 %v2330
        %2364 = vmatprep.subr.bf16.mxu0 %v2333
        %2365 = vmatpush1.bf16.msra.mxu0 %v2332
        %2366 = vmatprep.subr.bf16.mxu0 0
        %2367 = vmatpush1.bf16.msra.mxu0 0
        %2368 = vmatprep.subr.bf16.mxu0 0
        %2369 = vmatpush1.bf16.msra.mxu0 0
        %2370 = vmatprep.subr.bf16.mxu0 0
        %2371 = vmatpush1.bf16.msra.mxu0 0
        %2372 = vmatprep.subr.bf16.mxu0 0
        %2373 = vmatpush1.bf16.msra.mxu0 0
        %2374 = vmatprep.subr.bf16.mxu0 0
        %2375 = vmatpush1.bf16.msra.mxu0 0
        %2376 = vmatprep.subr.bf16.mxu0 0
        %2377 = vmatpush1.bf16.msra.mxu0 0
        %2378 = vmatprep.subr.bf16.mxu0 0
        %2379 = vmatpush1.bf16.msra.mxu0 0
        %2380 = vmatprep.subr.bf16.mxu0 0
        %2381 = vmatpush1.bf16.msra.mxu0 0
        %2382 = vmatprep.mubr.bf16.mxu0 0
        %2383 = vmatmul.mubr.bf16.gmra.mrb[0].mxu0 %v1939
        %v2384 = vpop.f32.mrb[0].mxu0
        %v2385 = vadd.f32 %v2262, %v2384
        %v2386 = vpop.f32.mrb[0].mxu0
        %v2387 = vadd.f32 %v2264, %v2386
        %v2388 = vpop.f32.mrb[0].mxu0
        %v2389 = vadd.f32 %v2266, %v2388
        %v2390 = vpop.f32.mrb[0].mxu0
        %v2391 = vadd.f32 %v2268, %v2390
        %2392 = vdwg.mxu0
        %v2393 = vld [vmem:[%s811] sm:$0x3]
        %v2395 = vlaneseq
        %v2396 = vshrl.u32 %v2395, 7
        %v2397 = vsub.s32 0, %v2396
        %v2398 = vrot.slane %v2393, %v2397
        %v2399 = vlaneseq
        %v2400 = vshrl.u32 %v2399, 7
        %v2401 = vsub.s32 1, %v2400
        %v2402 = vrot.slane %v2393, %v2401
        %v2405 = vadd.f32 %v2385, %v2398
        %v2406 = vadd.f32 %v2387, %v2402
        %v2407 = vadd.f32 %v2389, %v2398
        %v2408 = vadd.f32 %v2391, %v2402
        %v2409 = vadd.f32 %v914, %v2405
        %v2410 = vadd.f32 %v915, %v2406
        %v2411 = vadd.f32 %v916, %v2407
        %v2412 = vadd.f32 %v917, %v2408
        %v2413 = vld [vmem:[%s815] sm:$0x3]
        %v2414 = vld [vmem:[%s819] sm:$0x3]
        %v2415 = vadd.f32 %v2409, %v2410
        %2416 = vadd.xlane.f32.xlu0 %v2415
        %v2417 = vpop.xlane.xlu0 %2416
        %v2418 = vadd.f32 %v2411, %v2412
        %2419 = vadd.xlane.f32.xlu0 %v2418
        %v2420 = vpop.xlane.xlu0 %2419
        %v2421 = vrcp.pop 256.0
        %v2422 = vmul.f32 %v2417, %v2421
        %v2423 = vmul.f32 %v2420, %v2421
        %v2424 = vsub.f32 %v2409, %v2422
        %v2425 = vsub.f32 %v2410, %v2422
        %v2426 = vsub.f32 %v2411, %v2423
        %v2427 = vsub.f32 %v2412, %v2423
        %v2428 = vmul.f32 %v2424, %v2424
        %v2429 = vmul.f32 %v2425, %v2425
        %v2430 = vmul.f32 %v2426, %v2426
        %v2431 = vmul.f32 %v2427, %v2427
        %v2432 = vadd.f32 %v2428, %v2429
        %2433 = vadd.xlane.f32.xlu0 %v2432
        %v2434 = vpop.xlane.xlu0 %2433
        %v2435 = vadd.f32 %v2430, %v2431
        %2436 = vadd.xlane.f32.xlu0 %v2435
        %v2437 = vpop.xlane.xlu0 %2436
        %v2438 = vmul.f32 %v2434, %v2421
        %v2439 = vmul.f32 %v2437, %v2421
        %v2440 = vadd.f32 %v2438, 1e-12
        %v2441 = vadd.f32 %v2439, 1e-12
        %v2442 = vrsqrt.pop %v2440
        %v2443 = vrsqrt.pop %v2441
        %v2444 = vmul.f32 %v2424, %v2442
        %v2445 = vmul.f32 %v2425, %v2442
        %v2446 = vmul.f32 %v2426, %v2443
        %v2447 = vmul.f32 %v2427, %v2443
        %v2449 = vlaneseq
        %v2450 = vshrl.u32 %v2449, 7
        %v2451 = vsub.s32 0, %v2450
        %v2452 = vrot.slane %v2413, %v2451
        %v2453 = vlaneseq
        %v2454 = vshrl.u32 %v2453, 7
        %v2455 = vsub.s32 1, %v2454
        %v2456 = vrot.slane %v2413, %v2455
        %v2459 = vmul.f32 %v2444, %v2452
        %v2460 = vmul.f32 %v2445, %v2456
        %v2461 = vmul.f32 %v2446, %v2452
        %v2462 = vmul.f32 %v2447, %v2456
        %v2464 = vlaneseq
        %v2465 = vshrl.u32 %v2464, 7
        %v2466 = vsub.s32 0, %v2465
        %v2467 = vrot.slane %v2414, %v2466
        %v2468 = vlaneseq
        %v2469 = vshrl.u32 %v2468, 7
        %v2470 = vsub.s32 1, %v2469
        %v2471 = vrot.slane %v2414, %v2470
        %v2474 = vadd.f32 %v2459, %v2467
        %v2475 = vadd.f32 %v2460, %v2471
        %v2476 = vadd.f32 %v2461, %v2467
        %v2477 = vadd.f32 %v2462, %v2471
        %v2478 = vpack.c.bf16 %v2476, %v2474
        %v2479 = vpack.c.bf16 %v2477, %v2475
        %v2480 = vld [vmem:[%s700] sm:$0xff]
        %v2481 = vld [vmem:[%s700 + $0x8] sm:$0xff]
        %v2482 = vld [vmem:[%s700 + $0x10] sm:$0xff]
        %v2483 = vld [vmem:[%s700 + $0x18] sm:$0xff]
        %v2484 = vld [vmem:[%s700 + $0x20] sm:$0xff]
        %v2485 = vld [vmem:[%s700 + $0x28] sm:$0xff]
        %v2486 = vld [vmem:[%s700 + $0x30] sm:$0xff]
        %v2487 = vld [vmem:[%s700 + $0x38] sm:$0xff]
        %v2488 = vld [vmem:[%s700 + $0x40] sm:$0xff]
        %v2489 = vld [vmem:[%s700 + $0x48] sm:$0xff]
        %v2490 = vld [vmem:[%s700 + $0x50] sm:$0xff]
        %v2491 = vld [vmem:[%s700 + $0x58] sm:$0xff]
        %v2492 = vld [vmem:[%s700 + $0x60] sm:$0xff]
        %v2493 = vld [vmem:[%s700 + $0x68] sm:$0xff]
        %v2494 = vld [vmem:[%s700 + $0x70] sm:$0xff]
        %v2495 = vld [vmem:[%s700 + $0x78] sm:$0xff]
        %v2496 = vld [vmem:[%s700 + $0x80] sm:$0xff]
        %v2497 = vld [vmem:[%s700 + $0x88] sm:$0xff]
        %v2498 = vld [vmem:[%s700 + $0x90] sm:$0xff]
        %v2499 = vld [vmem:[%s700 + $0x98] sm:$0xff]
        %v2500 = vld [vmem:[%s700 + $0xa0] sm:$0xff]
        %v2501 = vld [vmem:[%s700 + $0xa8] sm:$0xff]
        %v2502 = vld [vmem:[%s700 + $0xb0] sm:$0xff]
        %v2503 = vld [vmem:[%s700 + $0xb8] sm:$0xff]
        %v2504 = vld [vmem:[%s700 + $0xc0] sm:$0xff]
        %v2505 = vld [vmem:[%s700 + $0xc8] sm:$0xff]
        %v2506 = vld [vmem:[%s700 + $0xd0] sm:$0xff]
        %v2507 = vld [vmem:[%s700 + $0xd8] sm:$0xff]
        %v2508 = vld [vmem:[%s700 + $0xe0] sm:$0xff]
        %v2509 = vld [vmem:[%s700 + $0xe8] sm:$0xff]
        %v2510 = vld [vmem:[%s700 + $0xf0] sm:$0xff]
        %v2511 = vld [vmem:[%s700 + $0xf8] sm:$0xff]
        %v2512 = vld [vmem:[%s700 + $0x100] sm:$0xff]
        %v2513 = vld [vmem:[%s700 + $0x108] sm:$0xff]
        %v2514 = vld [vmem:[%s700 + $0x110] sm:$0xff]
        %v2515 = vld [vmem:[%s700 + $0x118] sm:$0xff]
        %v2516 = vld [vmem:[%s700 + $0x120] sm:$0xff]
        %v2517 = vld [vmem:[%s700 + $0x128] sm:$0xff]
        %v2518 = vld [vmem:[%s700 + $0x130] sm:$0xff]
        %v2519 = vld [vmem:[%s700 + $0x138] sm:$0xff]
        %v2520 = vld [vmem:[%s700 + $0x140] sm:$0xff]
        %v2521 = vld [vmem:[%s700 + $0x148] sm:$0xff]
        %v2522 = vld [vmem:[%s700 + $0x150] sm:$0xff]
        %v2523 = vld [vmem:[%s700 + $0x158] sm:$0xff]
        %v2524 = vld [vmem:[%s700 + $0x160] sm:$0xff]
        %v2525 = vld [vmem:[%s700 + $0x168] sm:$0xff]
        %v2526 = vld [vmem:[%s700 + $0x170] sm:$0xff]
        %v2527 = vld [vmem:[%s700 + $0x178] sm:$0xff]
        %v2528 = vld [vmem:[%s700 + $0x180] sm:$0xff]
        %v2529 = vld [vmem:[%s700 + $0x188] sm:$0xff]
        %v2530 = vld [vmem:[%s700 + $0x190] sm:$0xff]
        %v2531 = vld [vmem:[%s700 + $0x198] sm:$0xff]
        %v2532 = vld [vmem:[%s700 + $0x1a0] sm:$0xff]
        %v2533 = vld [vmem:[%s700 + $0x1a8] sm:$0xff]
        %v2534 = vld [vmem:[%s700 + $0x1b0] sm:$0xff]
        %v2535 = vld [vmem:[%s700 + $0x1b8] sm:$0xff]
        %v2536 = vld [vmem:[%s700 + $0x1c0] sm:$0xff]
        %v2537 = vld [vmem:[%s700 + $0x1c8] sm:$0xff]
        %v2538 = vld [vmem:[%s700 + $0x1d0] sm:$0xff]
        %v2539 = vld [vmem:[%s700 + $0x1d8] sm:$0xff]
        %v2540 = vld [vmem:[%s700 + $0x1e0] sm:$0xff]
        %v2541 = vld [vmem:[%s700 + $0x1e8] sm:$0xff]
        %v2542 = vld [vmem:[%s700 + $0x1f0] sm:$0xff]
        %v2543 = vld [vmem:[%s700 + $0x1f8] sm:$0xff]
        %v2544 = vld [vmem:[%s823] sm:$0xf]
        %v2546 = vlaneseq
        %v2547 = vshrl.u32 %v2546, 7
        %v2548 = vsub.s32 0, %v2547
        %v2549 = vrot.slane %v2544, %v2548
        %v2550 = vlaneseq
        %v2551 = vshrl.u32 %v2550, 7
        %v2552 = vsub.s32 1, %v2551
        %v2553 = vrot.slane %v2544, %v2552
        %v2554 = vlaneseq
        %v2555 = vshrl.u32 %v2554, 7
        %v2556 = vsub.s32 2, %v2555
        %v2557 = vrot.slane %v2544, %v2556
        %v2558 = vlaneseq
        %v2559 = vshrl.u32 %v2558, 7
        %v2560 = vsub.s32 3, %v2559
        %v2561 = vrot.slane %v2544, %v2560
        %v2630 = vunpack.c.l.b16 %v2480
        %v2631 = vunpack.c.h.b16 %v2480
        %v2632 = vunpack.c.l.b16 %v2481
        %v2633 = vunpack.c.h.b16 %v2481
        %v2634 = vunpack.c.l.b16 %v2482
        %v2635 = vunpack.c.h.b16 %v2482
        %v2636 = vunpack.c.l.b16 %v2483
        %v2637 = vunpack.c.h.b16 %v2483
        %v2638 = vunpack.c.l.b16 %v2484
        %v2639 = vunpack.c.h.b16 %v2484
        %v2640 = vunpack.c.l.b16 %v2485
        %v2641 = vunpack.c.h.b16 %v2485
        %v2642 = vunpack.c.l.b16 %v2486
        %v2643 = vunpack.c.h.b16 %v2486
        %v2644 = vunpack.c.l.b16 %v2487
        %v2645 = vunpack.c.h.b16 %v2487
        %v2646 = vunpack.c.l.b16 %v2488
        %v2647 = vunpack.c.h.b16 %v2488
        %v2648 = vunpack.c.l.b16 %v2489
        %v2649 = vunpack.c.h.b16 %v2489
        %v2650 = vunpack.c.l.b16 %v2490
        %v2651 = vunpack.c.h.b16 %v2490
        %v2652 = vunpack.c.l.b16 %v2491
        %v2653 = vunpack.c.h.b16 %v2491
        %v2654 = vunpack.c.l.b16 %v2492
        %v2655 = vunpack.c.h.b16 %v2492
        %v2656 = vunpack.c.l.b16 %v2493
        %v2657 = vunpack.c.h.b16 %v2493
        %v2658 = vunpack.c.l.b16 %v2494
        %v2659 = vunpack.c.h.b16 %v2494
        %v2660 = vunpack.c.l.b16 %v2495
        %v2661 = vunpack.c.h.b16 %v2495
        %v2662 = vunpack.c.l.b16 %v2496
        %v2663 = vunpack.c.h.b16 %v2496
        %v2664 = vunpack.c.l.b16 %v2497
        %v2665 = vunpack.c.h.b16 %v2497
        %v2666 = vunpack.c.l.b16 %v2498
        %v2667 = vunpack.c.h.b16 %v2498
        %v2668 = vunpack.c.l.b16 %v2499
        %v2669 = vunpack.c.h.b16 %v2499
        %v2670 = vunpack.c.l.b16 %v2500
        %v2671 = vunpack.c.h.b16 %v2500
        %v2672 = vunpack.c.l.b16 %v2501
        %v2673 = vunpack.c.h.b16 %v2501
        %v2674 = vunpack.c.l.b16 %v2502
        %v2675 = vunpack.c.h.b16 %v2502
        %v2676 = vunpack.c.l.b16 %v2503
        %v2677 = vunpack.c.h.b16 %v2503
        %v2678 = vunpack.c.l.b16 %v2504
        %v2679 = vunpack.c.h.b16 %v2504
        %v2680 = vunpack.c.l.b16 %v2505
        %v2681 = vunpack.c.h.b16 %v2505
        %v2682 = vunpack.c.l.b16 %v2506
        %v2683 = vunpack.c.h.b16 %v2506
        %v2684 = vunpack.c.l.b16 %v2507
        %v2685 = vunpack.c.h.b16 %v2507
        %v2686 = vunpack.c.l.b16 %v2508
        %v2687 = vunpack.c.h.b16 %v2508
        %v2688 = vunpack.c.l.b16 %v2509
        %v2689 = vunpack.c.h.b16 %v2509
        %v2690 = vunpack.c.l.b16 %v2510
        %v2691 = vunpack.c.h.b16 %v2510
        %v2692 = vunpack.c.l.b16 %v2511
        %v2693 = vunpack.c.h.b16 %v2511
        %v2694 = vunpack.c.l.b16 %v2512
        %v2695 = vunpack.c.h.b16 %v2512
        %v2696 = vunpack.c.l.b16 %v2513
        %v2697 = vunpack.c.h.b16 %v2513
        %v2698 = vunpack.c.l.b16 %v2514
        %v2699 = vunpack.c.h.b16 %v2514
        %v2700 = vunpack.c.l.b16 %v2515
        %v2701 = vunpack.c.h.b16 %v2515
        %v2702 = vunpack.c.l.b16 %v2516
        %v2703 = vunpack.c.h.b16 %v2516
        %v2704 = vunpack.c.l.b16 %v2517
        %v2705 = vunpack.c.h.b16 %v2517
        %v2706 = vunpack.c.l.b16 %v2518
        %v2707 = vunpack.c.h.b16 %v2518
        %v2708 = vunpack.c.l.b16 %v2519
        %v2709 = vunpack.c.h.b16 %v2519
        %v2710 = vunpack.c.l.b16 %v2520
        %v2711 = vunpack.c.h.b16 %v2520
        %v2712 = vunpack.c.l.b16 %v2521
        %v2713 = vunpack.c.h.b16 %v2521
        %v2714 = vunpack.c.l.b16 %v2522
        %v2715 = vunpack.c.h.b16 %v2522
        %v2716 = vunpack.c.l.b16 %v2523
        %v2717 = vunpack.c.h.b16 %v2523
        %v2718 = vunpack.c.l.b16 %v2524
        %v2719 = vunpack.c.h.b16 %v2524
        %v2720 = vunpack.c.l.b16 %v2525
        %v2721 = vunpack.c.h.b16 %v2525
        %v2722 = vunpack.c.l.b16 %v2526
        %v2723 = vunpack.c.h.b16 %v2526
        %v2724 = vunpack.c.l.b16 %v2527
        %v2725 = vunpack.c.h.b16 %v2527
        %v2726 = vunpack.c.l.b16 %v2528
        %v2727 = vunpack.c.h.b16 %v2528
        %v2728 = vunpack.c.l.b16 %v2529
        %v2729 = vunpack.c.h.b16 %v2529
        %v2730 = vunpack.c.l.b16 %v2530
        %v2731 = vunpack.c.h.b16 %v2530
        %v2732 = vunpack.c.l.b16 %v2531
        %v2733 = vunpack.c.h.b16 %v2531
        %v2734 = vunpack.c.l.b16 %v2532
        %v2735 = vunpack.c.h.b16 %v2532
        %v2736 = vunpack.c.l.b16 %v2533
        %v2737 = vunpack.c.h.b16 %v2533
        %v2738 = vunpack.c.l.b16 %v2534
        %v2739 = vunpack.c.h.b16 %v2534
        %v2740 = vunpack.c.l.b16 %v2535
        %v2741 = vunpack.c.h.b16 %v2535
        %v2742 = vunpack.c.l.b16 %v2536
        %v2743 = vunpack.c.h.b16 %v2536
        %v2744 = vunpack.c.l.b16 %v2537
        %v2745 = vunpack.c.h.b16 %v2537
        %v2746 = vunpack.c.l.b16 %v2538
        %v2747 = vunpack.c.h.b16 %v2538
        %v2748 = vunpack.c.l.b16 %v2539
        %v2749 = vunpack.c.h.b16 %v2539
        %v2750 = vunpack.c.l.b16 %v2540
        %v2751 = vunpack.c.h.b16 %v2540
        %v2752 = vunpack.c.l.b16 %v2541
        %v2753 = vunpack.c.h.b16 %v2541
        %v2754 = vunpack.c.l.b16 %v2542
        %v2755 = vunpack.c.h.b16 %v2542
        %v2756 = vunpack.c.l.b16 %v2543
        %v2757 = vunpack.c.h.b16 %v2543
        %v2758 = vpack.c.b16 %v2634, %v2630
        %v2759 = vpack.c.b16 %v2635, %v2631
        %v2760 = vpack.c.b16 %v2636, %v2632
        %v2761 = vpack.c.b16 %v2637, %v2633
        %v2762 = vpack.c.b16 %v2642, %v2638
        %v2763 = vpack.c.b16 %v2643, %v2639
        %v2764 = vpack.c.b16 %v2644, %v2640
        %v2765 = vpack.c.b16 %v2645, %v2641
        %v2766 = vpack.c.b16 %v2650, %v2646
        %v2767 = vpack.c.b16 %v2651, %v2647
        %v2768 = vpack.c.b16 %v2652, %v2648
        %v2769 = vpack.c.b16 %v2653, %v2649
        %v2770 = vpack.c.b16 %v2658, %v2654
        %v2771 = vpack.c.b16 %v2659, %v2655
        %v2772 = vpack.c.b16 %v2660, %v2656
        %v2773 = vpack.c.b16 %v2661, %v2657
        %v2774 = vpack.c.b16 %v2666, %v2662
        %v2775 = vpack.c.b16 %v2667, %v2663
        %v2776 = vpack.c.b16 %v2668, %v2664
        %v2777 = vpack.c.b16 %v2669, %v2665
        %v2778 = vpack.c.b16 %v2674, %v2670
        %v2779 = vpack.c.b16 %v2675, %v2671
        %v2780 = vpack.c.b16 %v2676, %v2672
        %v2781 = vpack.c.b16 %v2677, %v2673
        %v2782 = vpack.c.b16 %v2682, %v2678
        %v2783 = vpack.c.b16 %v2683, %v2679
        %v2784 = vpack.c.b16 %v2684, %v2680
        %v2785 = vpack.c.b16 %v2685, %v2681
        %v2786 = vpack.c.b16 %v2690, %v2686
        %v2787 = vpack.c.b16 %v2691, %v2687
        %v2788 = vpack.c.b16 %v2692, %v2688
        %v2789 = vpack.c.b16 %v2693, %v2689
        %v2790 = vpack.c.b16 %v2698, %v2694
        %v2791 = vpack.c.b16 %v2699, %v2695
        %v2792 = vpack.c.b16 %v2700, %v2696
        %v2793 = vpack.c.b16 %v2701, %v2697
        %v2794 = vpack.c.b16 %v2706, %v2702
        %v2795 = vpack.c.b16 %v2707, %v2703
        %v2796 = vpack.c.b16 %v2708, %v2704
        %v2797 = vpack.c.b16 %v2709, %v2705
        %v2798 = vpack.c.b16 %v2714, %v2710
        %v2799 = vpack.c.b16 %v2715, %v2711
        %v2800 = vpack.c.b16 %v2716, %v2712
        %v2801 = vpack.c.b16 %v2717, %v2713
        %v2802 = vpack.c.b16 %v2722, %v2718
        %v2803 = vpack.c.b16 %v2723, %v2719
        %v2804 = vpack.c.b16 %v2724, %v2720
        %v2805 = vpack.c.b16 %v2725, %v2721
        %v2806 = vpack.c.b16 %v2730, %v2726
        %v2807 = vpack.c.b16 %v2731, %v2727
        %v2808 = vpack.c.b16 %v2732, %v2728
        %v2809 = vpack.c.b16 %v2733, %v2729
        %v2810 = vpack.c.b16 %v2738, %v2734
        %v2811 = vpack.c.b16 %v2739, %v2735
        %v2812 = vpack.c.b16 %v2740, %v2736
        %v2813 = vpack.c.b16 %v2741, %v2737
        %v2814 = vpack.c.b16 %v2746, %v2742
        %v2815 = vpack.c.b16 %v2747, %v2743
        %v2816 = vpack.c.b16 %v2748, %v2744
        %v2817 = vpack.c.b16 %v2749, %v2745
        %v2818 = vpack.c.b16 %v2754, %v2750
        %v2819 = vpack.c.b16 %v2755, %v2751
        %v2820 = vpack.c.b16 %v2756, %v2752
        %v2821 = vpack.c.b16 %v2757, %v2753
        %2886 = vmatprep.subr.bf16.mxu0 %v2759
        %2887 = vmatpush1.bf16.msra.mxu0 %v2758
        %2888 = vmatprep.subr.bf16.mxu0 %v2763
        %2889 = vmatpush1.bf16.msra.mxu0 %v2762
        %2890 = vmatprep.subr.bf16.mxu0 %v2767
        %2891 = vmatpush1.bf16.msra.mxu0 %v2766
        %2892 = vmatprep.subr.bf16.mxu0 %v2771
        %2893 = vmatpush1.bf16.msra.mxu0 %v2770
        %2894 = vmatprep.subr.bf16.mxu0 %v2775
        %2895 = vmatpush1.bf16.msra.mxu0 %v2774
        %2896 = vmatprep.subr.bf16.mxu0 %v2779
        %2897 = vmatpush1.bf16.msra.mxu0 %v2778
        %2898 = vmatprep.subr.bf16.mxu0 %v2783
        %2899 = vmatpush1.bf16.msra.mxu0 %v2782
        %2900 = vmatprep.subr.bf16.mxu0 %v2787
        %2901 = vmatpush1.bf16.msra.mxu0 %v2786
        %2902 = vmatprep.subr.bf16.mxu0 %v2791
        %2903 = vmatpush1.bf16.msra.mxu0 %v2790
        %2904 = vmatprep.subr.bf16.mxu0 %v2795
        %2905 = vmatpush1.bf16.msra.mxu0 %v2794
        %2906 = vmatprep.subr.bf16.mxu0 %v2799
        %2907 = vmatpush1.bf16.msra.mxu0 %v2798
        %2908 = vmatprep.subr.bf16.mxu0 %v2803
        %2909 = vmatpush1.bf16.msra.mxu0 %v2802
        %2910 = vmatprep.subr.bf16.mxu0 %v2807
        %2911 = vmatpush1.bf16.msra.mxu0 %v2806
        %2912 = vmatprep.subr.bf16.mxu0 %v2811
        %2913 = vmatpush1.bf16.msra.mxu0 %v2810
        %2914 = vmatprep.subr.bf16.mxu0 %v2815
        %2915 = vmatpush1.bf16.msra.mxu0 %v2814
        %2916 = vmatprep.subr.bf16.mxu0 %v2819
        %2917 = vmatpush1.bf16.msra.mxu0 %v2818
        %2918 = vmatprep.mubr.bf16.mxu0 %v2479
        %2919 = vmatmul.mubr.bf16.gmra.mrb[0].mxu0 %v2478
        %v2920 = vpop.f32.mrb[0].mxu0
        %v2921 = vadd.f32 %v2549, %v2920
        %v2922 = vpop.f32.mrb[0].mxu0
        %v2923 = vadd.f32 %v2553, %v2922
        %v2924 = vpop.f32.mrb[0].mxu0
        %v2925 = vadd.f32 %v2549, %v2924
        %v2926 = vpop.f32.mrb[0].mxu0
        %v2927 = vadd.f32 %v2553, %v2926
        %2928 = vdwg.mxu0
        %2929 = vmatprep.subr.bf16.mxu0 %v2761
        %2930 = vmatpush1.bf16.msra.mxu0 %v2760
        %2931 = vmatprep.subr.bf16.mxu0 %v2765
        %2932 = vmatpush1.bf16.msra.mxu0 %v2764
        %2933 = vmatprep.subr.bf16.mxu0 %v2769
        %2934 = vmatpush1.bf16.msra.mxu0 %v2768
        %2935 = vmatprep.subr.bf16.mxu0 %v2773
        %2936 = vmatpush1.bf16.msra.mxu0 %v2772
        %2937 = vmatprep.subr.bf16.mxu0 %v2777
        %2938 = vmatpush1.bf16.msra.mxu0 %v2776
        %2939 = vmatprep.subr.bf16.mxu0 %v2781
        %2940 = vmatpush1.bf16.msra.mxu0 %v2780
        %2941 = vmatprep.subr.bf16.mxu0 %v2785
        %2942 = vmatpush1.bf16.msra.mxu0 %v2784
        %2943 = vmatprep.subr.bf16.mxu0 %v2789
        %2944 = vmatpush1.bf16.msra.mxu0 %v2788
        %2945 = vmatprep.subr.bf16.mxu0 %v2793
        %2946 = vmatpush1.bf16.msra.mxu0 %v2792
        %2947 = vmatprep.subr.bf16.mxu0 %v2797
        %2948 = vmatpush1.bf16.msra.mxu0 %v2796
        %2949 = vmatprep.subr.bf16.mxu0 %v2801
        %2950 = vmatpush1.bf16.msra.mxu0 %v2800
        %2951 = vmatprep.subr.bf16.mxu0 %v2805
        %2952 = vmatpush1.bf16.msra.mxu0 %v2804
        %2953 = vmatprep.subr.bf16.mxu0 %v2809
        %2954 = vmatpush1.bf16.msra.mxu0 %v2808
        %2955 = vmatprep.subr.bf16.mxu0 %v2813
        %2956 = vmatpush1.bf16.msra.mxu0 %v2812
        %2957 = vmatprep.subr.bf16.mxu0 %v2817
        %2958 = vmatpush1.bf16.msra.mxu0 %v2816
        %2959 = vmatprep.subr.bf16.mxu0 %v2821
        %2960 = vmatpush1.bf16.msra.mxu0 %v2820
        %2961 = vmatprep.mubr.bf16.mxu0 %v2479
        %2962 = vmatmul.mubr.bf16.gmra.mrb[0].mxu0 %v2478
        %v2963 = vpop.f32.mrb[0].mxu0
        %v2964 = vadd.f32 %v2557, %v2963
        %v2965 = vpop.f32.mrb[0].mxu0
        %v2966 = vadd.f32 %v2561, %v2965
        %v2967 = vpop.f32.mrb[0].mxu0
        %v2968 = vadd.f32 %v2557, %v2967
        %v2969 = vpop.f32.mrb[0].mxu0
        %v2970 = vadd.f32 %v2561, %v2969
        %2971 = vdwg.mxu0
        %v2972 = vmul.f32 %v2921, %v2921
        %v2973 = vmul.f32 %v2923, %v2923
        %v2974 = vmul.f32 %v2964, %v2964
        %v2975 = vmul.f32 %v2966, %v2966
        %v2976 = vmul.f32 %v2925, %v2925
        %v2977 = vmul.f32 %v2927, %v2927
        %v2978 = vmul.f32 %v2968, %v2968
        %v2979 = vmul.f32 %v2970, %v2970
        %v2980 = vmul.f32 %v2921, %v2972
        %v2981 = vmul.f32 %v2923, %v2973
        %v2982 = vmul.f32 %v2964, %v2974
        %v2983 = vmul.f32 %v2966, %v2975
        %v2984 = vmul.f32 %v2925, %v2976
        %v2985 = vmul.f32 %v2927, %v2977
        %v2986 = vmul.f32 %v2968, %v2978
        %v2987 = vmul.f32 %v2970, %v2979
        %v2988 = vmul.f32 %v2980, 0.044715
        %v2989 = vmul.f32 %v2981, 0.044715
        %v2990 = vmul.f32 %v2982, 0.044715
        %v2991 = vmul.f32 %v2983, 0.044715
        %v2992 = vmul.f32 %v2984, 0.044715
        %v2993 = vmul.f32 %v2985, 0.044715
        %v2994 = vmul.f32 %v2986, 0.044715
        %v2995 = vmul.f32 %v2987, 0.044715
        %v2996 = vadd.f32 %v2921, %v2988
        %v2997 = vadd.f32 %v2923, %v2989
        %v2998 = vadd.f32 %v2964, %v2990
        %v2999 = vadd.f32 %v2966, %v2991
        %v3000 = vadd.f32 %v2925, %v2992
        %v3001 = vadd.f32 %v2927, %v2993
        %v3002 = vadd.f32 %v2968, %v2994
        %v3003 = vadd.f32 %v2970, %v2995
        %v3004 = vmul.f32 %v2996, 0.7978846
        %v3005 = vmul.f32 %v2997, 0.7978846
        %v3006 = vmul.f32 %v2998, 0.7978846
        %v3007 = vmul.f32 %v2999, 0.7978846
        %v3008 = vmul.f32 %v3000, 0.7978846
        %v3009 = vmul.f32 %v3001, 0.7978846
        %v3010 = vmul.f32 %v3002, 0.7978846
        %v3011 = vmul.f32 %v3003, 0.7978846
        %v3012 = vtanh.pop %v3004
        %v3013 = vtanh.pop %v3005
        %v3014 = vtanh.pop %v3006
        %v3015 = vtanh.pop %v3007
        %v3016 = vtanh.pop %v3008
        %v3017 = vtanh.pop %v3009
        %v3018 = vtanh.pop %v3010
        %v3019 = vtanh.pop %v3011
        %v3020 = vadd.f32 %v3012, 1.0
        %v3021 = vadd.f32 %v3013, 1.0
        %v3022 = vadd.f32 %v3014, 1.0
        %v3023 = vadd.f32 %v3015, 1.0
        %v3024 = vadd.f32 %v3016, 1.0
        %v3025 = vadd.f32 %v3017, 1.0
        %v3026 = vadd.f32 %v3018, 1.0
        %v3027 = vadd.f32 %v3019, 1.0
        %v3028 = vmul.f32 %v3020, 0.5
        %v3029 = vmul.f32 %v3021, 0.5
        %v3030 = vmul.f32 %v3022, 0.5
        %v3031 = vmul.f32 %v3023, 0.5
        %v3032 = vmul.f32 %v3024, 0.5
        %v3033 = vmul.f32 %v3025, 0.5
        %v3034 = vmul.f32 %v3026, 0.5
        %v3035 = vmul.f32 %v3027, 0.5
        %v3036 = vmul.f32 %v2921, %v3028
        %v3037 = vmul.f32 %v2923, %v3029
        %v3038 = vmul.f32 %v2964, %v3030
        %v3039 = vmul.f32 %v2966, %v3031
        %v3040 = vmul.f32 %v2925, %v3032
        %v3041 = vmul.f32 %v2927, %v3033
        %v3042 = vmul.f32 %v2968, %v3034
        %v3043 = vmul.f32 %v2970, %v3035
        %v3044 = vpack.c.bf16 %v3040, %v3036
        %v3045 = vpack.c.bf16 %v3041, %v3037
        %v3046 = vpack.c.bf16 %v3042, %v3038
        %v3047 = vpack.c.bf16 %v3043, %v3039
        %v3048 = vld [vmem:[%s709] sm:$0xff]
        %v3049 = vld [vmem:[%s709 + $0x8] sm:$0xff]
        %v3050 = vld [vmem:[%s709 + $0x10] sm:$0xff]
        %v3051 = vld [vmem:[%s709 + $0x18] sm:$0xff]
        %v3052 = vld [vmem:[%s709 + $0x20] sm:$0xff]
        %v3053 = vld [vmem:[%s709 + $0x28] sm:$0xff]
        %v3054 = vld [vmem:[%s709 + $0x30] sm:$0xff]
        %v3055 = vld [vmem:[%s709 + $0x38] sm:$0xff]
        %v3056 = vld [vmem:[%s709 + $0x40] sm:$0xff]
        %v3057 = vld [vmem:[%s709 + $0x48] sm:$0xff]
        %v3058 = vld [vmem:[%s709 + $0x50] sm:$0xff]
        %v3059 = vld [vmem:[%s709 + $0x58] sm:$0xff]
        %v3060 = vld [vmem:[%s709 + $0x60] sm:$0xff]
        %v3061 = vld [vmem:[%s709 + $0x68] sm:$0xff]
        %v3062 = vld [vmem:[%s709 + $0x70] sm:$0xff]
        %v3063 = vld [vmem:[%s709 + $0x78] sm:$0xff]
        %v3064 = vld [vmem:[%s709 + $0x80] sm:$0xff]
        %v3065 = vld [vmem:[%s709 + $0x88] sm:$0xff]
        %v3066 = vld [vmem:[%s709 + $0x90] sm:$0xff]
        %v3067 = vld [vmem:[%s709 + $0x98] sm:$0xff]
        %v3068 = vld [vmem:[%s709 + $0xa0] sm:$0xff]
        %v3069 = vld [vmem:[%s709 + $0xa8] sm:$0xff]
        %v3070 = vld [vmem:[%s709 + $0xb0] sm:$0xff]
        %v3071 = vld [vmem:[%s709 + $0xb8] sm:$0xff]
        %v3072 = vld [vmem:[%s709 + $0xc0] sm:$0xff]
        %v3073 = vld [vmem:[%s709 + $0xc8] sm:$0xff]
        %v3074 = vld [vmem:[%s709 + $0xd0] sm:$0xff]
        %v3075 = vld [vmem:[%s709 + $0xd8] sm:$0xff]
        %v3076 = vld [vmem:[%s709 + $0xe0] sm:$0xff]
        %v3077 = vld [vmem:[%s709 + $0xe8] sm:$0xff]
        %v3078 = vld [vmem:[%s709 + $0xf0] sm:$0xff]
        %v3079 = vld [vmem:[%s709 + $0xf8] sm:$0xff]
        %v3080 = vld [vmem:[%s709 + $0x100] sm:$0xff]
        %v3081 = vld [vmem:[%s709 + $0x108] sm:$0xff]
        %v3082 = vld [vmem:[%s709 + $0x110] sm:$0xff]
        %v3083 = vld [vmem:[%s709 + $0x118] sm:$0xff]
        %v3084 = vld [vmem:[%s709 + $0x120] sm:$0xff]
        %v3085 = vld [vmem:[%s709 + $0x128] sm:$0xff]
        %v3086 = vld [vmem:[%s709 + $0x130] sm:$0xff]
        %v3087 = vld [vmem:[%s709 + $0x138] sm:$0xff]
        %v3088 = vld [vmem:[%s709 + $0x140] sm:$0xff]
        %v3089 = vld [vmem:[%s709 + $0x148] sm:$0xff]
        %v3090 = vld [vmem:[%s709 + $0x150] sm:$0xff]
        %v3091 = vld [vmem:[%s709 + $0x158] sm:$0xff]
        %v3092 = vld [vmem:[%s709 + $0x160] sm:$0xff]
        %v3093 = vld [vmem:[%s709 + $0x168] sm:$0xff]
        %v3094 = vld [vmem:[%s709 + $0x170] sm:$0xff]
        %v3095 = vld [vmem:[%s709 + $0x178] sm:$0xff]
        %v3096 = vld [vmem:[%s709 + $0x180] sm:$0xff]
        %v3097 = vld [vmem:[%s709 + $0x188] sm:$0xff]
        %v3098 = vld [vmem:[%s709 + $0x190] sm:$0xff]
        %v3099 = vld [vmem:[%s709 + $0x198] sm:$0xff]
        %v3100 = vld [vmem:[%s709 + $0x1a0] sm:$0xff]
        %v3101 = vld [vmem:[%s709 + $0x1a8] sm:$0xff]
        %v3102 = vld [vmem:[%s709 + $0x1b0] sm:$0xff]
        %v3103 = vld [vmem:[%s709 + $0x1b8] sm:$0xff]
        %v3104 = vld [vmem:[%s709 + $0x1c0] sm:$0xff]
        %v3105 = vld [vmem:[%s709 + $0x1c8] sm:$0xff]
        %v3106 = vld [vmem:[%s709 + $0x1d0] sm:$0xff]
        %v3107 = vld [vmem:[%s709 + $0x1d8] sm:$0xff]
        %v3108 = vld [vmem:[%s709 + $0x1e0] sm:$0xff]
        %v3109 = vld [vmem:[%s709 + $0x1e8] sm:$0xff]
        %v3110 = vld [vmem:[%s709 + $0x1f0] sm:$0xff]
        %v3111 = vld [vmem:[%s709 + $0x1f8] sm:$0xff]
        %v3112 = vld [vmem:[%s827] sm:$0x3]
        %v3114 = vlaneseq
        %v3115 = vshrl.u32 %v3114, 7
        %v3116 = vsub.s32 0, %v3115
        %v3117 = vrot.slane %v3112, %v3116
        %v3118 = vlaneseq
        %v3119 = vshrl.u32 %v3118, 7
        %v3120 = vsub.s32 1, %v3119
        %v3121 = vrot.slane %v3112, %v3120
        %v3188 = vunpack.c.l.b16 %v3048
        %v3189 = vunpack.c.h.b16 %v3048
        %v3190 = vunpack.c.l.b16 %v3049
        %v3191 = vunpack.c.h.b16 %v3049
        %v3192 = vunpack.c.l.b16 %v3050
        %v3193 = vunpack.c.h.b16 %v3050
        %v3194 = vunpack.c.l.b16 %v3051
        %v3195 = vunpack.c.h.b16 %v3051
        %v3196 = vunpack.c.l.b16 %v3052
        %v3197 = vunpack.c.h.b16 %v3052
        %v3198 = vunpack.c.l.b16 %v3053
        %v3199 = vunpack.c.h.b16 %v3053
        %v3200 = vunpack.c.l.b16 %v3054
        %v3201 = vunpack.c.h.b16 %v3054
        %v3202 = vunpack.c.l.b16 %v3055
        %v3203 = vunpack.c.h.b16 %v3055
        %v3204 = vunpack.c.l.b16 %v3056
        %v3205 = vunpack.c.h.b16 %v3056
        %v3206 = vunpack.c.l.b16 %v3057
        %v3207 = vunpack.c.h.b16 %v3057
        %v3208 = vunpack.c.l.b16 %v3058
        %v3209 = vunpack.c.h.b16 %v3058
        %v3210 = vunpack.c.l.b16 %v3059
        %v3211 = vunpack.c.h.b16 %v3059
        %v3212 = vunpack.c.l.b16 %v3060
        %v3213 = vunpack.c.h.b16 %v3060
        %v3214 = vunpack.c.l.b16 %v3061
        %v3215 = vunpack.c.h.b16 %v3061
        %v3216 = vunpack.c.l.b16 %v3062
        %v3217 = vunpack.c.h.b16 %v3062
        %v3218 = vunpack.c.l.b16 %v3063
        %v3219 = vunpack.c.h.b16 %v3063
        %v3220 = vunpack.c.l.b16 %v3064
        %v3221 = vunpack.c.h.b16 %v3064
        %v3222 = vunpack.c.l.b16 %v3065
        %v3223 = vunpack.c.h.b16 %v3065
        %v3224 = vunpack.c.l.b16 %v3066
        %v3225 = vunpack.c.h.b16 %v3066
        %v3226 = vunpack.c.l.b16 %v3067
        %v3227 = vunpack.c.h.b16 %v3067
        %v3228 = vunpack.c.l.b16 %v3068
        %v3229 = vunpack.c.h.b16 %v3068
        %v3230 = vunpack.c.l.b16 %v3069
        %v3231 = vunpack.c.h.b16 %v3069
        %v3232 = vunpack.c.l.b16 %v3070
        %v3233 = vunpack.c.h.b16 %v3070
        %v3234 = vunpack.c.l.b16 %v3071
        %v3235 = vunpack.c.h.b16 %v3071
        %v3236 = vunpack.c.l.b16 %v3072
        %v3237 = vunpack.c.h.b16 %v3072
        %v3238 = vunpack.c.l.b16 %v3073
        %v3239 = vunpack.c.h.b16 %v3073
        %v3240 = vunpack.c.l.b16 %v3074
        %v3241 = vunpack.c.h.b16 %v3074
        %v3242 = vunpack.c.l.b16 %v3075
        %v3243 = vunpack.c.h.b16 %v3075
        %v3244 = vunpack.c.l.b16 %v3076
        %v3245 = vunpack.c.h.b16 %v3076
        %v3246 = vunpack.c.l.b16 %v3077
        %v3247 = vunpack.c.h.b16 %v3077
        %v3248 = vunpack.c.l.b16 %v3078
        %v3249 = vunpack.c.h.b16 %v3078
        %v3250 = vunpack.c.l.b16 %v3079
        %v3251 = vunpack.c.h.b16 %v3079
        %v3252 = vunpack.c.l.b16 %v3080
        %v3253 = vunpack.c.h.b16 %v3080
        %v3254 = vunpack.c.l.b16 %v3081
        %v3255 = vunpack.c.h.b16 %v3081
        %v3256 = vunpack.c.l.b16 %v3082
        %v3257 = vunpack.c.h.b16 %v3082
        %v3258 = vunpack.c.l.b16 %v3083
        %v3259 = vunpack.c.h.b16 %v3083
        %v3260 = vunpack.c.l.b16 %v3084
        %v3261 = vunpack.c.h.b16 %v3084
        %v3262 = vunpack.c.l.b16 %v3085
        %v3263 = vunpack.c.h.b16 %v3085
        %v3264 = vunpack.c.l.b16 %v3086
        %v3265 = vunpack.c.h.b16 %v3086
        %v3266 = vunpack.c.l.b16 %v3087
        %v3267 = vunpack.c.h.b16 %v3087
        %v3268 = vunpack.c.l.b16 %v3088
        %v3269 = vunpack.c.h.b16 %v3088
        %v3270 = vunpack.c.l.b16 %v3089
        %v3271 = vunpack.c.h.b16 %v3089
        %v3272 = vunpack.c.l.b16 %v3090
        %v3273 = vunpack.c.h.b16 %v3090
        %v3274 = vunpack.c.l.b16 %v3091
        %v3275 = vunpack.c.h.b16 %v3091
        %v3276 = vunpack.c.l.b16 %v3092
        %v3277 = vunpack.c.h.b16 %v3092
        %v3278 = vunpack.c.l.b16 %v3093
        %v3279 = vunpack.c.h.b16 %v3093
        %v3280 = vunpack.c.l.b16 %v3094
        %v3281 = vunpack.c.h.b16 %v3094
        %v3282 = vunpack.c.l.b16 %v3095
        %v3283 = vunpack.c.h.b16 %v3095
        %v3284 = vunpack.c.l.b16 %v3096
        %v3285 = vunpack.c.h.b16 %v3096
        %v3286 = vunpack.c.l.b16 %v3097
        %v3287 = vunpack.c.h.b16 %v3097
        %v3288 = vunpack.c.l.b16 %v3098
        %v3289 = vunpack.c.h.b16 %v3098
        %v3290 = vunpack.c.l.b16 %v3099
        %v3291 = vunpack.c.h.b16 %v3099
        %v3292 = vunpack.c.l.b16 %v3100
        %v3293 = vunpack.c.h.b16 %v3100
        %v3294 = vunpack.c.l.b16 %v3101
        %v3295 = vunpack.c.h.b16 %v3101
        %v3296 = vunpack.c.l.b16 %v3102
        %v3297 = vunpack.c.h.b16 %v3102
        %v3298 = vunpack.c.l.b16 %v3103
        %v3299 = vunpack.c.h.b16 %v3103
        %v3300 = vunpack.c.l.b16 %v3104
        %v3301 = vunpack.c.h.b16 %v3104
        %v3302 = vunpack.c.l.b16 %v3105
        %v3303 = vunpack.c.h.b16 %v3105
        %v3304 = vunpack.c.l.b16 %v3106
        %v3305 = vunpack.c.h.b16 %v3106
        %v3306 = vunpack.c.l.b16 %v3107
        %v3307 = vunpack.c.h.b16 %v3107
        %v3308 = vunpack.c.l.b16 %v3108
        %v3309 = vunpack.c.h.b16 %v3108
        %v3310 = vunpack.c.l.b16 %v3109
        %v3311 = vunpack.c.h.b16 %v3109
        %v3312 = vunpack.c.l.b16 %v3110
        %v3313 = vunpack.c.h.b16 %v3110
        %v3314 = vunpack.c.l.b16 %v3111
        %v3315 = vunpack.c.h.b16 %v3111
        %v3316 = vpack.c.b16 %v3190, %v3188
        %v3317 = vpack.c.b16 %v3191, %v3189
        %v3318 = vpack.c.b16 %v3194, %v3192
        %v3319 = vpack.c.b16 %v3195, %v3193
        %v3320 = vpack.c.b16 %v3198, %v3196
        %v3321 = vpack.c.b16 %v3199, %v3197
        %v3322 = vpack.c.b16 %v3202, %v3200
        %v3323 = vpack.c.b16 %v3203, %v3201
        %v3324 = vpack.c.b16 %v3206, %v3204
        %v3325 = vpack.c.b16 %v3207, %v3205
        %v3326 = vpack.c.b16 %v3210, %v3208
        %v3327 = vpack.c.b16 %v3211, %v3209
        %v3328 = vpack.c.b16 %v3214, %v3212
        %v3329 = vpack.c.b16 %v3215, %v3213
        %v3330 = vpack.c.b16 %v3218, %v3216
        %v3331 = vpack.c.b16 %v3219, %v3217
        %v3332 = vpack.c.b16 %v3222, %v3220
        %v3333 = vpack.c.b16 %v3223, %v3221
        %v3334 = vpack.c.b16 %v3226, %v3224
        %v3335 = vpack.c.b16 %v3227, %v3225
        %v3336 = vpack.c.b16 %v3230, %v3228
        %v3337 = vpack.c.b16 %v3231, %v3229
        %v3338 = vpack.c.b16 %v3234, %v3232
        %v3339 = vpack.c.b16 %v3235, %v3233
        %v3340 = vpack.c.b16 %v3238, %v3236
        %v3341 = vpack.c.b16 %v3239, %v3237
        %v3342 = vpack.c.b16 %v3242, %v3240
        %v3343 = vpack.c.b16 %v3243, %v3241
        %v3344 = vpack.c.b16 %v3246, %v3244
        %v3345 = vpack.c.b16 %v3247, %v3245
        %v3346 = vpack.c.b16 %v3250, %v3248
        %v3347 = vpack.c.b16 %v3251, %v3249
        %v3348 = vpack.c.b16 %v3254, %v3252
        %v3349 = vpack.c.b16 %v3255, %v3253
        %v3350 = vpack.c.b16 %v3258, %v3256
        %v3351 = vpack.c.b16 %v3259, %v3257
        %v3352 = vpack.c.b16 %v3262, %v3260
        %v3353 = vpack.c.b16 %v3263, %v3261
        %v3354 = vpack.c.b16 %v3266, %v3264
        %v3355 = vpack.c.b16 %v3267, %v3265
        %v3356 = vpack.c.b16 %v3270, %v3268
        %v3357 = vpack.c.b16 %v3271, %v3269
        %v3358 = vpack.c.b16 %v3274, %v3272
        %v3359 = vpack.c.b16 %v3275, %v3273
        %v3360 = vpack.c.b16 %v3278, %v3276
        %v3361 = vpack.c.b16 %v3279, %v3277
        %v3362 = vpack.c.b16 %v3282, %v3280
        %v3363 = vpack.c.b16 %v3283, %v3281
        %v3364 = vpack.c.b16 %v3286, %v3284
        %v3365 = vpack.c.b16 %v3287, %v3285
        %v3366 = vpack.c.b16 %v3290, %v3288
        %v3367 = vpack.c.b16 %v3291, %v3289
        %v3368 = vpack.c.b16 %v3294, %v3292
        %v3369 = vpack.c.b16 %v3295, %v3293
        %v3370 = vpack.c.b16 %v3298, %v3296
        %v3371 = vpack.c.b16 %v3299, %v3297
        %v3372 = vpack.c.b16 %v3302, %v3300
        %v3373 = vpack.c.b16 %v3303, %v3301
        %v3374 = vpack.c.b16 %v3306, %v3304
        %v3375 = vpack.c.b16 %v3307, %v3305
        %v3376 = vpack.c.b16 %v3310, %v3308
        %v3377 = vpack.c.b16 %v3311, %v3309
        %v3378 = vpack.c.b16 %v3314, %v3312
        %v3379 = vpack.c.b16 %v3315, %v3313
        %3444 = vmatprep.subr.bf16.mxu0 %v3317
        %3445 = vmatpush1.bf16.msra.mxu0 %v3316
        %3446 = vmatprep.subr.bf16.mxu0 %v3319
        %3447 = vmatpush1.bf16.msra.mxu0 %v3318
        %3448 = vmatprep.subr.bf16.mxu0 %v3321
        %3449 = vmatpush1.bf16.msra.mxu0 %v3320
        %3450 = vmatprep.subr.bf16.mxu0 %v3323
        %3451 = vmatpush1.bf16.msra.mxu0 %v3322
        %3452 = vmatprep.subr.bf16.mxu0 %v3325
        %3453 = vmatpush1.bf16.msra.mxu0 %v3324
        %3454 = vmatprep.subr.bf16.mxu0 %v3327
        %3455 = vmatpush1.bf16.msra.mxu0 %v3326
        %3456 = vmatprep.subr.bf16.mxu0 %v3329
        %3457 = vmatpush1.bf16.msra.mxu0 %v3328
        %3458 = vmatprep.subr.bf16.mxu0 %v3331
        %3459 = vmatpush1.bf16.msra.mxu0 %v3330
        %3460 = vmatprep.subr.bf16.mxu0 %v3333
        %3461 = vmatpush1.bf16.msra.mxu0 %v3332
        %3462 = vmatprep.subr.bf16.mxu0 %v3335
        %3463 = vmatpush1.bf16.msra.mxu0 %v3334
        %3464 = vmatprep.subr.bf16.mxu0 %v3337
        %3465 = vmatpush1.bf16.msra.mxu0 %v3336
        %3466 = vmatprep.subr.bf16.mxu0 %v3339
        %3467 = vmatpush1.bf16.msra.mxu0 %v3338
        %3468 = vmatprep.subr.bf16.mxu0 %v3341
        %3469 = vmatpush1.bf16.msra.mxu0 %v3340
        %3470 = vmatprep.subr.bf16.mxu0 %v3343
        %3471 = vmatpush1.bf16.msra.mxu0 %v3342
        %3472 = vmatprep.subr.bf16.mxu0 %v3345
        %3473 = vmatpush1.bf16.msra.mxu0 %v3344
        %3474 = vmatprep.subr.bf16.mxu0 %v3347
        %3475 = vmatpush1.bf16.msra.mxu0 %v3346
        %3476 = vmatprep.mubr.bf16.mxu0 %v3045
        %3477 = vmatmul.mubr.bf16.gmra.mrb[0].mxu0 %v3044
        %v3478 = vpop.f32.mrb[0].mxu0
        %v3479 = vadd.f32 %v3117, %v3478
        %v3480 = vpop.f32.mrb[0].mxu0
        %v3481 = vadd.f32 %v3121, %v3480
        %v3482 = vpop.f32.mrb[0].mxu0
        %v3483 = vadd.f32 %v3117, %v3482
        %v3484 = vpop.f32.mrb[0].mxu0
        %v3485 = vadd.f32 %v3121, %v3484
        %3486 = vdwg.mxu0
        %3487 = vmatprep.subr.bf16.mxu0 %v3349
        %3488 = vmatpush1.bf16.msra.mxu0 %v3348
        %3489 = vmatprep.subr.bf16.mxu0 %v3351
        %3490 = vmatpush1.bf16.msra.mxu0 %v3350
        %3491 = vmatprep.subr.bf16.mxu0 %v3353
        %3492 = vmatpush1.bf16.msra.mxu0 %v3352
        %3493 = vmatprep.subr.bf16.mxu0 %v3355
        %3494 = vmatpush1.bf16.msra.mxu0 %v3354
        %3495 = vmatprep.subr.bf16.mxu0 %v3357
        %3496 = vmatpush1.bf16.msra.mxu0 %v3356
        %3497 = vmatprep.subr.bf16.mxu0 %v3359
        %3498 = vmatpush1.bf16.msra.mxu0 %v3358
        %3499 = vmatprep.subr.bf16.mxu0 %v3361
        %3500 = vmatpush1.bf16.msra.mxu0 %v3360
        %3501 = vmatprep.subr.bf16.mxu0 %v3363
        %3502 = vmatpush1.bf16.msra.mxu0 %v3362
        %3503 = vmatprep.subr.bf16.mxu0 %v3365
        %3504 = vmatpush1.bf16.msra.mxu0 %v3364
        %3505 = vmatprep.subr.bf16.mxu0 %v3367
        %3506 = vmatpush1.bf16.msra.mxu0 %v3366
        %3507 = vmatprep.subr.bf16.mxu0 %v3369
        %3508 = vmatpush1.bf16.msra.mxu0 %v3368
        %3509 = vmatprep.subr.bf16.mxu0 %v3371
        %3510 = vmatpush1.bf16.msra.mxu0 %v3370
        %3511 = vmatprep.subr.bf16.mxu0 %v3373
        %3512 = vmatpush1.bf16.msra.mxu0 %v3372
        %3513 = vmatprep.subr.bf16.mxu0 %v3375
        %3514 = vmatpush1.bf16.msra.mxu0 %v3374
        %3515 = vmatprep.subr.bf16.mxu0 %v3377
        %3516 = vmatpush1.bf16.msra.mxu0 %v3376
        %3517 = vmatprep.subr.bf16.mxu0 %v3379
        %3518 = vmatpush1.bf16.msra.mxu0 %v3378
        %3519 = vmatprep.mubr.bf16.mxu0 %v3047
        %3520 = vmatmul.mubr.bf16.gmra.mrb[0].mxu0 %v3046
        %v3521 = vpop.f32.mrb[0].mxu0
        %v3522 = vadd.f32 %v3479, %v3521
        %v3523 = vpop.f32.mrb[0].mxu0
        %v3524 = vadd.f32 %v3481, %v3523
        %v3525 = vpop.f32.mrb[0].mxu0
        %v3526 = vadd.f32 %v3483, %v3525
        %v3527 = vpop.f32.mrb[0].mxu0
        %v3528 = vadd.f32 %v3485, %v3527
        %3529 = vdwg.mxu0
        %v3530 = vadd.f32 %v2474, %v3522
        %v3531 = vadd.f32 %v2475, %v3524
        %v3532 = vadd.f32 %v2476, %v3526
        %v3533 = vadd.f32 %v2477, %v3528
        %v3534 = vld [vmem:[%s831] sm:$0x3]
        %v3535 = vld [vmem:[%s835] sm:$0x3]
        %v3536 = vadd.f32 %v3530, %v3531
        %3537 = vadd.xlane.f32.xlu0 %v3536
        %v3538 = vpop.xlane.xlu0 %3537
        %v3539 = vadd.f32 %v3532, %v3533
        %3540 = vadd.xlane.f32.xlu0 %v3539
        %v3541 = vpop.xlane.xlu0 %3540
        %v3542 = vmul.f32 %v3538, %v2421
        %v3543 = vmul.f32 %v3541, %v2421
        %v3544 = vsub.f32 %v3530, %v3542
        %v3545 = vsub.f32 %v3531, %v3542
        %v3546 = vsub.f32 %v3532, %v3543
        %v3547 = vsub.f32 %v3533, %v3543
        %v3548 = vmul.f32 %v3544, %v3544
        %v3549 = vmul.f32 %v3545, %v3545
        %v3550 = vmul.f32 %v3546, %v3546
        %v3551 = vmul.f32 %v3547, %v3547
        %v3552 = vadd.f32 %v3548, %v3549
        %3553 = vadd.xlane.f32.xlu0 %v3552
        %v3554 = vpop.xlane.xlu0 %3553
        %v3555 = vadd.f32 %v3550, %v3551
        %3556 = vadd.xlane.f32.xlu0 %v3555
        %v3557 = vpop.xlane.xlu0 %3556
        %v3558 = vmul.f32 %v3554, %v2421
        %v3559 = vmul.f32 %v3557, %v2421
        %v3560 = vadd.f32 %v3558, 1e-12
        %v3561 = vadd.f32 %v3559, 1e-12
        %v3562 = vrsqrt.pop %v3560
        %v3563 = vrsqrt.pop %v3561
        %v3564 = vmul.f32 %v3544, %v3562
        %v3565 = vmul.f32 %v3545, %v3562
        %v3566 = vmul.f32 %v3546, %v3563
        %v3567 = vmul.f32 %v3547, %v3563
        %v3569 = vlaneseq
        %v3570 = vshrl.u32 %v3569, 7
        %v3571 = vsub.s32 0, %v3570
        %v3572 = vrot.slane %v3534, %v3571
        %v3573 = vlaneseq
        %v3574 = vshrl.u32 %v3573, 7
        %v3575 = vsub.s32 1, %v3574
        %v3576 = vrot.slane %v3534, %v3575
        %v3579 = vmul.f32 %v3564, %v3572
        %v3580 = vmul.f32 %v3565, %v3576
        %v3581 = vmul.f32 %v3566, %v3572
        %v3582 = vmul.f32 %v3567, %v3576
        %v3584 = vlaneseq
        %v3585 = vshrl.u32 %v3584, 7
        %v3586 = vsub.s32 0, %v3585
        %v3587 = vrot.slane %v3535, %v3586
        %v3588 = vlaneseq
        %v3589 = vshrl.u32 %v3588, 7
        %v3590 = vsub.s32 1, %v3589
        %v3591 = vrot.slane %v3535, %v3590
        %v3594 = vadd.f32 %v3579, %v3587
        %v3595 = vadd.f32 %v3580, %v3591
        %v3596 = vadd.f32 %v3581, %v3587
        %v3597 = vadd.f32 %v3582, %v3591
        %3598 = vst [vmem:[#allocation2] sm:$0xff] %v3594
        %3599 = vst [vmem:[#allocation2 + $0x8] sm:$0xff] %v3595
        %3600 = vst [vmem:[#allocation2 + $0x10] sm:$0xff] %v3596
        %3601 = vst [vmem:[#allocation2 + $0x18] sm:$0xff] %v3597
        %p3602 = scmp.eq.s32.totalorder %s40, 1
        // Predicated region
        $region113: #{_forward_impl.1} parent=91 // pred_check
          %p3603 = pneg %p3602
        $region114: #{_forward_impl.1} parent=91 // pred_check_branch
          %3605 = sbr.rel (%p3603) target = $region116
        $region115: #{_forward_impl.1} parent=91 // pred_region
          %v3606 = vld [vmem:[%s16] sm:$0x3]
          %v3608 = vlaneseq
          %v3609 = vshrl.u32 %v3608, 7
          %v3610 = vsub.s32 0, %v3609
          %v3611 = vrot.slane %v3606, %v3610
          %v3612 = vlaneseq
          %v3613 = vshrl.u32 %v3612, 7
          %v3614 = vsub.s32 1, %v3613
          %v3615 = vrot.slane %v3606, %v3614
          %v3618 = vmul.f32 %v3594, %v3611
          %v3619 = vmul.f32 %v3595, %v3615
          %v3620 = vmul.f32 %v3596, %v3611
          %v3621 = vmul.f32 %v3597, %v3615
          %v3626 = vrot.slane %v3620, 7
          %vm3627 = vcmask 1041409
          %v3628 = vsel %vm3627, %v3626, %v3618
          %v3629 = vrot.slane %v3621, 7
          %v3630 = vsel %vm3627, %v3629, %v3619
          %vm3633 = vcmask 1041408
          %v3634 = vsel %vm3633, %v3628, 0.0
          %v3635 = vsel %vm3633, %v3630, 0.0
          %v3636 = vadd.f32 %v3634, %v3635
          %3637 = vadd.xlane.f32.xlu0 %v3636
          %v3638 = vpop.xlane.xlu0 %3637
          %v3639 = vld [vmem:[#allocation3] sm:$0x1]
          %v3641 = vlaneseq
          %v3642 = vshrl.u32 %v3641, 7
          %v3643 = vsub.s32 0, %v3642
          %v3644 = vrot.slane %v3639, %v3643
          %v3646 = vadd.f32 %v3638, %v3644
          %vm3647 = vcmask 1024
          %3648 = vst.msk [vmem:[%s18] sm:$0x3] %vm3647, %v3646
        $region116: #{_forward_impl.1} parent=91 // pred_fallthru
          _
        // Predicated region
        $region117: #{_forward_impl.1} parent=91 // pred_check
          %p3649 = pneg %p491
        $region118: #{_forward_impl.1} parent=91 // pred_check_branch
          %3651 = sbr.rel (%p3649) target = $region120
        $region119: #{_forward_impl.1} parent=91 // pred_region
          _
        $region120: #{_forward_impl.1} parent=91 // pred_fallthru
          _
        // Predicated region
        $region121: #{_forward_impl.1} parent=91 // pred_check
          %p3652 = pneg %p491
        $region122: #{_forward_impl.1} parent=91 // pred_check_branch
          %3654 = sbr.rel (%p3652) target = $region124
        $region123: #{_forward_impl.1} parent=91 // pred_region
          _
        $region124: #{_forward_impl.1} parent=91 // pred_fallthru
          _
      $region92: #{_forward_impl.1} parent=5 // pred_fallthru
        _
      %p3655 = scmp.le.s32.totalorder 2, %s35
      // Predicated region
      $region125: #{_forward_impl.1} parent=5 // pred_check
        %p3656 = pneg %p3655
      $region126: #{_forward_impl.1} parent=5 // pred_check_branch
        %3658 = sbr.rel (%p3656) target = $region128
      $region127: #{_forward_impl.1} parent=5 // pred_region
        %s3659 = ssub.s32 %s35, 2
      $region128: #{_forward_impl.1} parent=5 // pred_fallthru
        _
    $region6: #{_forward_impl.1} parent=1 // loop_footer
      %s39 = sadd.s32 1, %s35
    $region7: #{_forward_impl.1} parent=1 // loop_footer_branch
      %34 = sbr.rel target = $region3
    $region8: #{_forward_impl.1} parent=1 // loop_exit
      _
    %3660 = vsyncpa [#allocation5], 1
    %s3661 = scalar_lea.sflag [#allocation5], 1
    %3662 = vsyncpa %s3661, 1
    %3663 = vsyncpa [#allocation7], 1
    %s3664 = scalar_lea.sflag [#allocation7], 1
    %3665 = vsyncpa %s3664, 1
    %3666 = vsyncpa [#allocation10], 1
    %s3667 = scalar_lea.sflag [#allocation10], 1
    %3668 = vsyncpa %s3667, 1

</llo_original>
